<compile_context>
chip_gen: v7x
topology: tpu7x:2x2x1
jax: 0.10.0
libtpu: 0.0.40
codegen_flags: <defaults>
</compile_context>

<pallas_src>
import math

import jax
import jax.numpy as jnp
from jax.experimental import pallas as pl
from jax.experimental.pallas import tpu as pltpu

# ----------------------------- constants (from module __init__) ------------------
MULTIRES = 6
EMBED_CH = 3 + 3 * 2 * MULTIRES          # 39  (get_embedder(6, 3))
NUM_LEVELS = 16
LEVEL_DIM = 2
HASH_FEAT = NUM_LEVELS * LEVEL_DIM        # 32
LOG2_T = 19
HASH_T = 2 ** LOG2_T
BASE_RES = 16
END_RES = 2048
SDF_FEAT = 15                             # feature_vector_size
D = 64
SDF_IN = EMBED_CH + HASH_FEAT             # 71 : dims[0] of ImplicitNetworkGrid
SDF_OUT = 1 + SDF_FEAT                    # 16
NUM_GEO_FEAT = 16
GEO_IN = 3 * (EMBED_CH + HASH_FEAT + 16) + 3   # 264 : GaussianGeoNetwork.input_ch
GEO_HEAD = 3 + 1 + 3 + 1 + NUM_GEO_FEAT   # 24  (bary|opacity|scaling|rot|geo_feat)
RGB_IN = EMBED_CH + HASH_FEAT + EMBED_CH + NUM_GEO_FEAT  # 126
DIVIDE_FACTOR = 1.0

LANE = 128
MAX_TILE = 2048
VMEM_LIMIT = 32 * 1024 * 1024   # explicit scoped-VMEM limit (safe on v5e/v6e/v7x)


def _round_up(n, m):
    return ((n + m - 1) // m) * m


def _pad_cols(a, cols):
    pad = cols - a.shape[-1]
    return a if pad <= 0 else jnp.pad(a, ((0, 0), (0, pad)))


def _pad_rows_to8(x):
    n = x.shape[0]
    n_up = _round_up(max(n, 1), 8)
    return (x if n_up == n else jnp.pad(x, ((0, n_up - n), (0, 0)))), n, n_up


def _choose_tile(n8, max_tile=MAX_TILE):
    # At least 2 grid steps whenever rows allow, so dimension_semantics=("parallel",)
    # can actually shard the grid across v7x's two TensorCores.
    half = _round_up((n8 + 1) // 2, 8)
    return max(8, min(max_tile, half))


# ----------------------------- activations ---------------------------------------
def _relu(x):
    return jnp.maximum(x, 0.0)


def _softplus100_and_dsig(z):
    # torch.nn.Softplus(beta=100) and its derivative sigmoid(100*z), both derived
    # from a SINGLE exp(-|100z|) per layer (one EUP exp saved per hidden layer).
    bz = 100.0 * z
    e = jnp.exp(-jnp.abs(bz))
    sp = (jnp.maximum(bz, 0.0) + jnp.log1p(e)) / 100.0
    sg = jnp.where(bz >= 0.0, jnp.ones_like(e), e) / (1.0 + e)
    return sp, sg


# ----------------------------- fused epilogues (in-kernel) ------------------------
def _geo_epilogue(y):
    # columns: 0-2 bary, 3 opacity, 4-6 scaling, 7 rotation theta, 8-23 geo_feat
    col = jax.lax.broadcasted_iota(jnp.int32, y.shape, 1)
    act = jnp.where(col < 8, jax.nn.sigmoid(y), jnp.maximum(y, 0.0))
    scale = jnp.where((col >= 4) & (col < 7), 2.0 / 100.0,
                      jnp.where(col == 7, 2.0 * jnp.pi, 1.0))
    return act * scale


def _rgb_epilogue(y):
    return jax.nn.sigmoid(y)


# ----------------------------- generic fused MLP kernel ---------------------------
def _mlp_kernel_factory(act, epilogue):
    def kernel(x_ref, w1_ref, b1_ref, w2_ref, b2_ref, w3_ref, b3_ref, o_ref):
        h = jnp.dot(x_ref[...], w1_ref[...],
                    preferred_element_type=jnp.float32) + b1_ref[...]
        h = act(h)
        h = jnp.dot(h.astype(jnp.bfloat16), w2_ref[...],
                    preferred_element_type=jnp.float32) + b2_ref[...]
        h = act(h)
        y = jnp.dot(h.astype(jnp.bfloat16), w3_ref[...],
                    preferred_element_type=jnp.float32) + b3_ref[...]
        o_ref[...] = epilogue(y)
    return kernel


def mlp_pallas(x, w1, b1, w2, b2, w3, b3, *, act, epilogue=None, max_tile=MAX_TILE):
    """Fused 2-hidden-layer MLP + narrow head + epilogue, tiled over rows.

    The head is padded only to a multiple of 8 columns (not 128): for these tiny
    heads (24 / 3 real cols) the HBM write bytes dominate the masked-store penalty.
    The input is zero-padded to a multiple of 8 columns (126 -> 128 for the rgb head)
    for lane-dense, aligned K.
    """
    if epilogue is None:
        epilogue = lambda y: y
    cin = x.shape[1]
    cin_pad = _round_up(cin, 8)
    d1 = w1.shape[1]
    d2 = w2.shape[1]
    cout = w3.shape[1]
    cout_pad = _round_up(cout, 8)

    xp, n, n8 = _pad_rows_to8(_pad_cols(x, cin_pad))
    tile = _choose_tile(n8, max_tile)
    grid = pl.cdiv(n8, tile)

    xb = xp if xp.dtype == jnp.bfloat16 else xp.astype(jnp.bfloat16)
    w1p = jnp.pad(w1, ((0, cin_pad - cin), (0, 0))).astype(jnp.bfloat16)
    w2b = w2.astype(jnp.bfloat16)
    w3p = _pad_cols(w3, cout_pad).astype(jnp.bfloat16)
    b3p = _pad_cols(b3, cout_pad)

    out = pl.pallas_call(
        _mlp_kernel_factory(act, epilogue),
        out_shape=jax.ShapeDtypeStruct((n8, cout_pad), jnp.float32),
        grid_spec=pltpu.PrefetchScalarGridSpec(
            num_scalar_prefetch=0,
            grid=(grid,),
            in_specs=[
                pl.BlockSpec((tile, cin_pad), lambda i: (i, 0)),
                pl.BlockSpec((cin_pad, d1), lambda i: (0, 0)),
                pl.BlockSpec((1, d1), lambda i: (0, 0)),
                pl.BlockSpec((d1, d2), lambda i: (0, 0)),
                pl.BlockSpec((1, d2), lambda i: (0, 0)),
                pl.BlockSpec((d2, cout_pad), lambda i: (0, 0)),
                pl.BlockSpec((1, cout_pad), lambda i: (0, 0)),
            ],
            out_specs=pl.BlockSpec((tile, cout_pad), lambda i: (i, 0)),
        ),
        compiler_params=pltpu.CompilerParams(
            dimension_semantics=("parallel",),
            vmem_limit_bytes=VMEM_LIMIT),
    )(xb, w1p, b1, w2b, b2, w3p, b3p)
    return out[:n, :cout]


# ----------------------------- fused SDF forward + d(sdf)/d(encoding) -------------
def _sdf_kernel(x_ref, w0_ref, b0_ref, w1_ref, b1_ref, w2c0_ref, w1t_ref,
                wt_ref, bt_ref, o_ref):
    x = x_ref[...]
    z0 = jnp.dot(x, w0_ref[...], preferred_element_type=jnp.float32) + b0_ref[...]
    h0, s0 = _softplus100_and_dsig(z0)
    z1 = jnp.dot(h0.astype(jnp.bfloat16), w1_ref[...],
                 preferred_element_type=jnp.float32) + b1_ref[...]
    h1, s1 = _softplus100_and_dsig(z1)
    # analytic d(sdf)/d(z0) chain, reusing the sigmoid factors from the forward pass
    g1 = s1 * w2c0_ref[...]                                              # (tile, D)
    g0 = s0 * jnp.dot(g1.astype(jnp.bfloat16), w1t_ref[...],
                      preferred_element_type=jnp.float32)                # (tile, D)
    # single fused K=128 tail matmul: [h1 | g0] @ block-diag([w2 | w0^T]) writes the
    # packed output directly -> cols 0:16 = MLP out, 16:16+cin = d(sdf)/d(encoding)
    cat = jnp.concatenate([h1.astype(jnp.bfloat16), g0.astype(jnp.bfloat16)],
                          axis=-1)                                       # (tile, 2D)
    o_ref[...] = jnp.dot(cat, wt_ref[...],
                         preferred_element_type=jnp.float32) + bt_ref[...]


def sdf_mlp_with_grad(params, enc, *, max_tile=MAX_TILE):
    """Returns (mlp_output[N, 16], d sdf / d encoding [N, 71]) in one pallas_call,
    packed into a single lane-dense (tile, 128) f32 output block."""
    cin = enc.shape[1]                       # 71
    cin_pad = _round_up(cin, 8)              # 72  (16 + 72 = 88 <= 128)

    xp, n, n8 = _pad_rows_to8(_pad_cols(enc, cin_pad))
    tile = _choose_tile(n8, max_tile)
    grid = pl.cdiv(n8, tile)

    w0, b0 = params["sdf_w0"], params["sdf_b0"]
    w1, b1 = params["sdf_w1"], params["sdf_b1"]
    w2, b2 = params["sdf_w2"], params["sdf_b2"]

    w0p = jnp.pad(w0, ((0, cin_pad - cin), (0, 0)))          # (72, 64), zero pad rows
    # Block-diagonal tail weight: rows 0:64 -> w2 into cols 0:16,
    #                              rows 64:128 -> w0^T into cols 16:16+72.
    w_tail = jnp.zeros((2 * D, LANE), jnp.float32)
    w_tail = w_tail.at[:D, :SDF_OUT].set(w2)
    w_tail = w_tail.at[D:, SDF_OUT:SDF_OUT + cin_pad].set(w0p.T)
    b_tail = jnp.zeros((1, LANE), jnp.float32).at[:, :SDF_OUT].set(b2)

    out = pl.pallas_call(
        _sdf_kernel,
        out_shape=jax.ShapeDtypeStruct((n8, LANE), jnp.float32),
        grid_spec=pltpu.PrefetchScalarGridSpec(
            num_scalar_prefetch=0,
            grid=(grid,),
            in_specs=[
                pl.BlockSpec((tile, cin_pad), lambda i: (i, 0)),
                pl.BlockSpec((cin_pad, D), lambda i: (0, 0)),
                pl.BlockSpec((1, D), lambda i: (0, 0)),
                pl.BlockSpec((D, D), lambda i: (0, 0)),
                pl.BlockSpec((1, D), lambda i: (0, 0)),
                pl.BlockSpec((1, D), lambda i: (0, 0)),       # w2[:, 0]^T
                pl.BlockSpec((D, D), lambda i: (0, 0)),       # w1^T
                pl.BlockSpec((2 * D, LANE), lambda i: (0, 0)),  # block-diag tail
                pl.BlockSpec((1, LANE), lambda i: (0, 0)),
            ],
            out_specs=pl.BlockSpec((tile, LANE), lambda i: (i, 0)),
        ),
        compiler_params=pltpu.CompilerParams(
            dimension_semantics=("parallel",),
            vmem_limit_bytes=VMEM_LIMIT),
    )(xp.astype(jnp.bfloat16),
      w0p.astype(jnp.bfloat16), b0,
      w1.astype(jnp.bfloat16), b1,
      w2[:, 0:1].T, w1.T.astype(jnp.bfloat16),
      w_tail.astype(jnp.bfloat16), b_tail)

    return out[:n, :SDF_OUT], out[:n, SDF_OUT:SDF_OUT + cin]


# ----------------------------- plain-JAX glue ops ---------------------------------
def positional_encode(x, multires=MULTIRES):
    # NeRF embedder: [x, sin(2^i x), cos(2^i x)] for i in 0..multires-1
    outs = [x]
    for i in range(multires):
        freq = 2.0 ** i
        outs.append(jnp.sin(x * freq))
        outs.append(jnp.cos(x * freq))
    return jnp.concatenate(outs, axis=-1)


def _hash_resolutions():
    scale = math.exp((math.log(END_RES) - math.log(BASE_RES)) / (NUM_LEVELS - 1))
    return [int(math.floor(BASE_RES * (scale ** l))) for l in range(NUM_LEVELS)]


_HASH_RES = _hash_resolutions()
_PRIMES = (1, 2654435761, 805459861)


def hash_encode(x, table):
    # Multi-resolution hash grid (HashEncoder) with trilinear interpolation,
    # vectorized into a single batched gather over all levels x corners.
    # x: [N, 3] roughly in [-1, 1]; table: [NUM_LEVELS, HASH_T, LEVEL_DIM] (bfloat16)
    n = x.shape[0]
    xn = (x + 1.0) * 0.5
    res = jnp.asarray(_HASH_RES, dtype=jnp.float32)                     # [L]
    pos = xn[:, None, :] * res[None, :, None]                           # [N, L, 3]
    pos0 = jnp.floor(pos)
    frac = pos - pos0                                                   # [N, L, 3]
    p0 = pos0.astype(jnp.int32)                                         # [N, L, 3]

    corners = jnp.asarray([[c & 1, (c >> 1) & 1, (c >> 2) & 1] for c in range(8)],
                          dtype=jnp.int32)                              # [8, 3]
    cpos = (p0[:, :, None, :] + corners[None, None, :, :]).astype(jnp.uint32)  # [N,L,8,3]
    h = (cpos[..., 0] * jnp.uint32(_PRIMES[0])
         ^ cpos[..., 1] * jnp.uint32(_PRIMES[1])
         ^ cpos[..., 2] * jnp.uint32(_PRIMES[2]))                       # [N, L, 8]
    # HASH_T is a power of two -> single-VPU-op masking instead of integer modulo
    lvl_off = (jnp.arange(NUM_LEVELS, dtype=jnp.int32) * HASH_T)[None, :, None]
    idx = (h & jnp.uint32(HASH_T - 1)).astype(jnp.int32) + lvl_off      # [N, L, 8]

    table_flat = table.reshape(NUM_LEVELS * HASH_T, LEVEL_DIM)
    feats = jnp.take(table_flat, idx.reshape(-1), axis=0)
    feats = feats.reshape(n, NUM_LEVELS, 8, LEVEL_DIM).astype(jnp.float32)  # [N,L,8,2]

    w3 = jnp.where(corners[None, None, :, :] == 1,
                   frac[:, :, None, :], 1.0 - frac[:, :, None, :])      # [N, L, 8, 3]
    w = jnp.prod(w3, axis=-1)                                           # [N, L, 8]
    feat = jnp.sum(w[..., None] * feats, axis=2)                        # [N, L, 2]
    return feat.reshape(n, NUM_LEVELS * LEVEL_DIM)                      # [N, 32]


def encode_input(x, params):
    # ImplicitNetworkGrid.get_encoding / forward input build: cat(embed, hash_feature)
    embed = positional_encode(x)                                        # [N, 39]
    feat = hash_encode(x / DIVIDE_FACTOR, params["hash_table"])         # [N, 32]
    return jnp.concatenate([embed, feat], axis=-1)                      # [N, 71]


def l2_normalize(x, axis):
    # matches F.normalize(p=2, eps=1e-12)
    nrm = jnp.sqrt(jnp.sum(x * x, axis=axis, keepdims=True))
    return x / jnp.maximum(nrm, 1e-12)


def exp_so3(axis, theta):
    # Rodrigues' formula: R = I + sin(t) K + (1 - cos(t)) K^2
    wx, wy, wz = axis[:, 0], axis[:, 1], axis[:, 2]
    z = jnp.zeros_like(wx)
    K = jnp.stack([
        jnp.stack([z, -wz, wy], axis=-1),
        jnp.stack([wz, z, -wx], axis=-1),
        jnp.stack([-wy, wx, z], axis=-1)], axis=-2)            # [Nf, 3, 3]
    th = theta.reshape(-1, 1, 1)
    eye = jnp.eye(3, dtype=axis.dtype)[None]
    return eye + jnp.sin(th) * K + (1.0 - jnp.cos(th)) * (K @ K)


# ----------------------------- parameters -----------------------------------------
def init_params(key):
    keys = jax.random.split(key, 10)

    def lin(k, cin, cout, scale=0.1):
        kw, kb = jax.random.split(k)
        w = jax.random.normal(kw, (cin, cout), jnp.float32) * scale
        b = jax.random.normal(kb, (1, cout), jnp.float32) * 0.01
        return w, b

    p = {}
    # ImplicitNetworkGrid: dims = [71, 64, 64, 16]
    p["sdf_w0"], p["sdf_b0"] = lin(keys[0], SDF_IN, D)
    p["sdf_w1"], p["sdf_b1"] = lin(keys[1], D, D)
    p["sdf_w2"], p["sdf_b2"] = lin(keys[2], D, SDF_OUT)
    # GaussianGeoNetwork: 264 -> 64 -> 64 -> heads(24)
    p["geo_w0"], p["geo_b0"] = lin(keys[3], GEO_IN, D)
    p["geo_w1"], p["geo_b1"] = lin(keys[4], D, D)
    p["geo_wh"], p["geo_bh"] = lin(keys[5], D, GEO_HEAD)
    # GaussianRGBNetwork: 126 -> 64 -> 64 -> 3
    p["rgb_w0"], p["rgb_b0"] = lin(keys[6], RGB_IN, D)
    p["rgb_w1"], p["rgb_b1"] = lin(keys[7], D, D)
    p["rgb_w2"], p["rgb_b2"] = lin(keys[8], D, 3)
    # Hash encoder embedding tables (stored in bf16: halves table size + gather bytes)
    p["hash_table"] = jax.random.uniform(keys[9], (NUM_LEVELS, HASH_T, LEVEL_DIM),
                                         jnp.float32, -1e-4, 1e-4).astype(jnp.bfloat16)
    return p


# ----------------------------- GaussianNetwork.forward ----------------------------
def gaussian_network_forward(params, grid_input, cam_pose, v_raw, faces, normals):
    n_grid = grid_input.shape[0]

    # Grid2Mesh stand-in.
    # TODO(synk): Grid2Mesh / marching cubes has no clean Pallas equivalent; a
    # deterministic synthetic mesh (v_raw in [0,1]^3, integer faces, normals) is
    # used in its place, then transformed exactly as the torch code does.
    v = 2.0 * (v_raw - 0.5)
    f = faces

    # 1+3) single fused pass: encode grid points AND mesh vertices once, one Pallas
    #      SDF call producing both the MLP outputs and d(sdf)/d(encoding) packed in
    #      one 128-lane buffer; d(encoding)/d(x) is chained through jax.vjp of the
    #      encoder only (no duplicated hash gather / MLP forward).
    x_all = jnp.concatenate([grid_input, v], axis=0)                    # [N+V, 3]
    enc_all, enc_vjp = jax.vjp(lambda xx: encode_input(xx, params), x_all)
    out_all, genc_all = sdf_mlp_with_grad(params, enc_all)              # Pallas
    grad_all = enc_vjp(genc_all)[0]                                     # [N+V, 3]

    grad_grid = grad_all[:n_grid]
    out_v = out_all[n_grid:]
    v_sdf, v_feat = out_v[:, :1], out_v[:, 1:]
    v_grad = grad_all[n_grid:]
    enc_v = enc_all[n_grid:]
    v_encoded = jnp.concatenate([enc_v, v_sdf, v_feat], axis=-1)        # [V, 87]
    # Build the per-face geo input in bf16: the kernel consumed bf16 anyway, so this
    # is numerically identical but halves the gather/concat buffer + its DMA read.
    v_enc_bf = v_encoded.astype(jnp.bfloat16)

    # 4) GaussianGeoNetwork
    f0, f1, f2 = f[:, 0], f[:, 1], f[:, 2]
    v0 = v[f0]
    vec1 = v0 - v[f1]
    vec2 = v0 - v[f2]
    cross_pro = jnp.cross(vec1, vec2, axis=-1)[None]                    # [1, Nf, 3]
    # NOTE: mirrors torch F.normalize(default dim=1) applied to the [1, Nf, 3] tensor.
    faces_normal = l2_normalize(cross_pro, axis=1)
    # TODO(synk): the three per-face row gathers could be fed to the geo kernel via
    # scalar-prefetched face indices instead of materializing the [Nf, 264] buffer.
    x_geo = jnp.concatenate([v_enc_bf[f0], v_enc_bf[f1], v_enc_bf[f2],
                             faces_normal[0].astype(jnp.bfloat16)], axis=-1)  # [Nf,264]
    geo_out = mlp_pallas(x_geo,
                         params["geo_w0"], params["geo_b0"],
                         params["geo_w1"], params["geo_b1"],
                         params["geo_wh"], params["geo_bh"],
                         act=_relu, epilogue=_geo_epilogue)             # [Nf, 24]

    bary = geo_out[:, 0:3]
    bary = bary / jnp.sum(bary, axis=-1, keepdims=True)
    v_f0 = v0[None]                                                     # [1, Nf, 3]
    # NOTE: mirrors the torch source exactly (all three bary weights multiply the
    # same vertex faces[:, :, 0]).
    xyz = (v_f0 * bary[:, 0].reshape(-1, 1)[None]
           + v_f0 * bary[:, 1].reshape(-1, 1)[None]
           + v_f0 * bary[:, 2].reshape(-1, 1)[None])                    # [1, Nf, 3]
    opacity = geo_out[:, 3:4][None]
    scaling = geo_out[:, 4:7][None]
    rotation_theta = geo_out[:, 7:8]                                    # sigmoid*2*pi fused
    rotation_matrix = exp_so3(faces_normal[0], rotation_theta)[None]    # [1, Nf, 3, 3]
    geo_feat = geo_out[:, 8:8 + NUM_GEO_FEAT][None]                     # [1, Nf, 16]

    # 5) GaussianRGBNetwork (input built in bf16; 126 cols -> padded to 128 inside
    #    mlp_pallas for lane-dense K=128 loads)
    center_enc = encode_input(xyz[0], params)                           # [Nf, 71]
    # NOTE: mirrors torch F.normalize(default dim=1) on the [1, Nf, 3] tensor.
    view_dirs = l2_normalize(cam_pose[None] - xyz, axis=1)
    view_encoded = positional_encode(view_dirs)                         # [1, Nf, 39]
    rgb_in = jnp.concatenate([center_enc.astype(jnp.bfloat16)[None],
                              view_encoded.astype(jnp.bfloat16),
                              geo_feat.astype(jnp.bfloat16)],
                             axis=-1)                                   # [1, Nf, 126]
    rgb = mlp_pallas(rgb_in[0],
                     params["rgb_w0"], params["rgb_b0"],
                     params["rgb_w1"], params["rgb_b1"],
                     params["rgb_w2"], params["rgb_b2"],
                     act=_relu, epilogue=_rgb_epilogue)[None]           # [1, Nf, 3]

    grad = jnp.concatenate([grad_grid, v_grad], axis=-2)                # [N + V, 3]

    gaussians = {"xyz": xyz, "opacity": opacity, "scaling": scaling,
                 "rotation_matrix": rotation_matrix, "rgb": rgb}
    ret = {"v": v, "f": f, "grad": grad, "n": normals}
    return gaussians, ret


# ----------------------------- main ------------------------------------------------
if __name__ == "__main__":
    key = jax.random.PRNGKey(0)
    kp, k1, k2, k3, k4, k5 = jax.random.split(key, 6)
    params = init_params(kp)

    res = 8
    N = res ** 3          # 512 grid query points (small resolution)
    V = 64                # synthetic mesh vertices
    NF = 128              # synthetic mesh faces

    grid_input = jax.random.uniform(k1, (N, 3), jnp.float32, -1.0, 1.0)
    cam_pose = jax.random.normal(k2, (3,), jnp.float32)
    v_raw = jax.random.uniform(k3, (V, 3), jnp.float32, 0.0, 1.0)
    faces = jax.random.randint(k4, (NF, 3), 0, V, dtype=jnp.int32)
    normals = l2_normalize(jax.random.normal(k5, (V, 3), jnp.float32), axis=-1)

    fwd = jax.jit(gaussian_network_forward)
    gaussians, ret = fwd(params, grid_input, cam_pose, v_raw, faces, normals)
    jax.block_until_ready(gaussians["rgb"])

    assert gaussians["xyz"].shape == (1, NF, 3)
    assert gaussians["opacity"].shape == (1, NF, 1)
    assert gaussians["scaling"].shape == (1, NF, 3)
    assert gaussians["rotation_matrix"].shape == (1, NF, 3, 3)
    assert gaussians["rgb"].shape == (1, NF, 3)
    assert ret["grad"].shape == (N + V, 3)
    assert bool(jnp.all(jnp.isfinite(gaussians["rgb"])))
    assert bool(jnp.all(jnp.isfinite(ret["grad"])))

    print("KERNEL_OK")
</pallas_src>

<mosaic_0001>
module attributes {stable_mosaic.version = 11 : i64} {
  func.func private @main(%arg0: i32) attributes {dimension_semantics = [#tpu.dimension_semantics<core_parallel>], iteration_bounds = array<i64: 2>, tpu.core_type = #tpu.core_type<sc_scalar_subcore>, window_params = []} {
    return
  }
}

module attributes {stable_mosaic.version = 11 : i64} {
  func.func private @main(%arg0: i32) attributes {dimension_semantics = [#tpu.dimension_semantics<core_parallel>], iteration_bounds = array<i64: 2>, tpu.core_type = #tpu.core_type<sc_scalar_subcore>, window_params = []} {
    return
  }
}

module attributes {stable_mosaic.version = 11 : i64} {
  func.func @_sdf_kernel(%arg0: i32, %arg1: memref<288x72xbf16, #tpu.memory_space<vmem>>, %arg2: memref<72x64xbf16, #tpu.memory_space<vmem>>, %arg3: memref<1x64xf32, #tpu.memory_space<vmem>>, %arg4: memref<64x64xbf16, #tpu.memory_space<vmem>>, %arg5: memref<1x64xf32, #tpu.memory_space<vmem>>, %arg6: memref<1x64xf32, #tpu.memory_space<vmem>>, %arg7: memref<64x64xbf16, #tpu.memory_space<vmem>>, %arg8: memref<128x128xbf16, #tpu.memory_space<vmem>>, %arg9: memref<1x128xf32, #tpu.memory_space<vmem>>, %arg10: memref<288x128xf32, #tpu.memory_space<vmem>>) attributes {dimension_semantics = [#tpu.dimension_semantics<parallel>], iteration_bounds = array<i64: 2>, scalar_prefetch = 0 : i64, scratch_operands = 0 : i64, tpu.core_type = #tpu.core_type<tc>, window_params = [{transform_indices = @transform_0, window_bounds = array<i64: 288, 72>}, {pipeline_mode = #tpu.pipeline_mode<synchronous>, transform_indices = @transform_1, window_bounds = array<i64: 72, 64>}, {pipeline_mode = #tpu.pipeline_mode<synchronous>, transform_indices = @transform_2, window_bounds = array<i64: 1, 64>}, {pipeline_mode = #tpu.pipeline_mode<synchronous>, transform_indices = @transform_3, window_bounds = array<i64: 64, 64>}, {pipeline_mode = #tpu.pipeline_mode<synchronous>, transform_indices = @transform_4, window_bounds = array<i64: 1, 64>}, {pipeline_mode = #tpu.pipeline_mode<synchronous>, transform_indices = @transform_5, window_bounds = array<i64: 1, 64>}, {pipeline_mode = #tpu.pipeline_mode<synchronous>, transform_indices = @transform_6, window_bounds = array<i64: 64, 64>}, {pipeline_mode = #tpu.pipeline_mode<synchronous>, transform_indices = @transform_7, window_bounds = array<i64: 128, 128>}, {pipeline_mode = #tpu.pipeline_mode<synchronous>, transform_indices = @transform_8, window_bounds = array<i64: 1, 128>}, {transform_indices = @transform_9, window_bounds = array<i64: 288, 128>}]} {
    %c0 = arith.constant 0 : index
    %c0_0 = arith.constant 0 : index
    %0 = vector.load %arg1[%c0, %c0_0] : memref<288x72xbf16, #tpu.memory_space<vmem>>, vector<288x72xbf16>
    %c0_1 = arith.constant 0 : index
    %c0_2 = arith.constant 0 : index
    %1 = vector.load %arg2[%c0_1, %c0_2] : memref<72x64xbf16, #tpu.memory_space<vmem>>, vector<72x64xbf16>
    %cst = arith.constant dense<0.000000e+00> : vector<288x64xf32>
    %2 = tpu.matmul %0, %1, %cst {dimension_numbers = #tpu.dot_dimension_numbers<[1], [0], [0], [1], [0, 0, 1, 1], [], []>} : vector<288x72xbf16>, vector<72x64xbf16>, vector<288x64xf32> -> vector<288x64xf32>
    %c0_3 = arith.constant 0 : index
    %c0_4 = arith.constant 0 : index
    %3 = vector.load %arg3[%c0_3, %c0_4] : memref<1x64xf32, #tpu.memory_space<vmem>>, vector<1x64xf32>
    %4 = vector.broadcast %3 : vector<1x64xf32> to vector<288x64xf32>
    %5 = arith.addf %2, %4 : vector<288x64xf32>
    %cst_5 = arith.constant 1.000000e+02 : f32
    %6 = vector.broadcast %cst_5 : f32 to vector<288x64xf32>
    %7 = arith.mulf %6, %5 : vector<288x64xf32>
    %8 = math.absf %7 : vector<288x64xf32>
    %cst_6 = arith.constant 0.000000e+00 : f32
    %9 = vector.broadcast %cst_6 : f32 to vector<288x64xf32>
    %10 = arith.subf %9, %8 : vector<288x64xf32>
    %11 = math.exp %10 : vector<288x64xf32>
    %cst_7 = arith.constant 0.000000e+00 : f32
    %12 = vector.broadcast %cst_7 : f32 to vector<288x64xf32>
    %13 = arith.maximumf %7, %12 : vector<288x64xf32>
    %14 = math.log1p %11 : vector<288x64xf32>
    %15 = arith.addf %13, %14 : vector<288x64xf32>
    %cst_8 = arith.constant 1.000000e+02 : f32
    %16 = vector.broadcast %cst_8 : f32 to vector<288x64xf32>
    %17 = arith.divf %15, %16 : vector<288x64xf32>
    %cst_9 = arith.constant 0.000000e+00 : f32
    %18 = vector.broadcast %cst_9 : f32 to vector<288x64xf32>
    %19 = arith.cmpf oge, %7, %18 : vector<288x64xf32>
    %cst_10 = arith.constant 1.000000e+00 : f32
    %20 = vector.broadcast %cst_10 : f32 to vector<288x64xf32>
    %21 = arith.select %19, %20, %11 : vector<288x64xi1>, vector<288x64xf32>
    %cst_11 = arith.constant 1.000000e+00 : f32
    %22 = vector.broadcast %cst_11 : f32 to vector<288x64xf32>
    %23 = arith.addf %22, %11 : vector<288x64xf32>
    %24 = arith.divf %21, %23 : vector<288x64xf32>
    %25 = arith.truncf %17 : vector<288x64xf32> to vector<288x64xbf16>
    %c0_12 = arith.constant 0 : index
    %c0_13 = arith.constant 0 : index
    %26 = vector.load %arg4[%c0_12, %c0_13] : memref<64x64xbf16, #tpu.memory_space<vmem>>, vector<64x64xbf16>
    %cst_14 = arith.constant dense<0.000000e+00> : vector<288x64xf32>
    %27 = tpu.matmul %25, %26, %cst_14 {dimension_numbers = #tpu.dot_dimension_numbers<[1], [0], [0], [1], [0, 0, 1, 1], [], []>} : vector<288x64xbf16>, vector<64x64xbf16>, vector<288x64xf32> -> vector<288x64xf32>
    %c0_15 = arith.constant 0 : index
    %c0_16 = arith.constant 0 : index
    %28 = vector.load %arg5[%c0_15, %c0_16] : memref<1x64xf32, #tpu.memory_space<vmem>>, vector<1x64xf32>
    %29 = vector.broadcast %28 : vector<1x64xf32> to vector<288x64xf32>
    %30 = arith.addf %27, %29 : vector<288x64xf32>
    %cst_17 = arith.constant 1.000000e+02 : f32
    %31 = vector.broadcast %cst_17 : f32 to vector<288x64xf32>
    %32 = arith.mulf %31, %30 : vector<288x64xf32>
    %33 = math.absf %32 : vector<288x64xf32>
    %cst_18 = arith.constant 0.000000e+00 : f32
    %34 = vector.broadcast %cst_18 : f32 to vector<288x64xf32>
    %35 = arith.subf %34, %33 : vector<288x64xf32>
    %36 = math.exp %35 : vector<288x64xf32>
    %cst_19 = arith.constant 0.000000e+00 : f32
    %37 = vector.broadcast %cst_19 : f32 to vector<288x64xf32>
    %38 = arith.maximumf %32, %37 : vector<288x64xf32>
    %39 = math.log1p %36 : vector<288x64xf32>
    %40 = arith.addf %38, %39 : vector<288x64xf32>
    %cst_20 = arith.constant 1.000000e+02 : f32
    %41 = vector.broadcast %cst_20 : f32 to vector<288x64xf32>
    %42 = arith.divf %40, %41 : vector<288x64xf32>
    %cst_21 = arith.constant 0.000000e+00 : f32
    %43 = vector.broadcast %cst_21 : f32 to vector<288x64xf32>
    %44 = arith.cmpf oge, %32, %43 : vector<288x64xf32>
    %cst_22 = arith.constant 1.000000e+00 : f32
    %45 = vector.broadcast %cst_22 : f32 to vector<288x64xf32>
    %46 = arith.select %44, %45, %36 : vector<288x64xi1>, vector<288x64xf32>
    %cst_23 = arith.constant 1.000000e+00 : f32
    %47 = vector.broadcast %cst_23 : f32 to vector<288x64xf32>
    %48 = arith.addf %47, %36 : vector<288x64xf32>
    %49 = arith.divf %46, %48 : vector<288x64xf32>
    %c0_24 = arith.constant 0 : index
    %c0_25 = arith.constant 0 : index
    %50 = vector.load %arg6[%c0_24, %c0_25] : memref<1x64xf32, #tpu.memory_space<vmem>>, vector<1x64xf32>
    %51 = vector.broadcast %50 : vector<1x64xf32> to vector<288x64xf32>
    %52 = arith.mulf %49, %51 : vector<288x64xf32>
    %53 = arith.truncf %52 : vector<288x64xf32> to vector<288x64xbf16>
    %c0_26 = arith.constant 0 : index
    %c0_27 = arith.constant 0 : index
    %54 = vector.load %arg7[%c0_26, %c0_27] : memref<64x64xbf16, #tpu.memory_space<vmem>>, vector<64x64xbf16>
    %cst_28 = arith.constant dense<0.000000e+00> : vector<288x64xf32>
    %55 = tpu.matmul %53, %54, %cst_28 {dimension_numbers = #tpu.dot_dimension_numbers<[1], [0], [0], [1], [0, 0, 1, 1], [], []>} : vector<288x64xbf16>, vector<64x64xbf16>, vector<288x64xf32> -> vector<288x64xf32>
    %56 = arith.mulf %24, %55 : vector<288x64xf32>
    %57 = arith.truncf %42 : vector<288x64xf32> to vector<288x64xbf16>
    %58 = arith.truncf %56 : vector<288x64xf32> to vector<288x64xbf16>
    %59 = tpu.concatenate %57, %58 in 1 : vector<288x64xbf16>, vector<288x64xbf16> -> vector<288x128xbf16>
    %c0_29 = arith.constant 0 : index
    %c0_30 = arith.constant 0 : index
    %60 = vector.load %arg8[%c0_29, %c0_30] : memref<128x128xbf16, #tpu.memory_space<vmem>>, vector<128x128xbf16>
    %cst_31 = arith.constant dense<0.000000e+00> : vector<288x128xf32>
    %61 = tpu.matmul %59, %60, %cst_31 {dimension_numbers = #tpu.dot_dimension_numbers<[1], [0], [0], [1], [0, 0, 1, 1], [], []>} : vector<288x128xbf16>, vector<128x128xbf16>, vector<288x128xf32> -> vector<288x128xf32>
    %c0_32 = arith.constant 0 : index
    %c0_33 = arith.constant 0 : index
    %62 = vector.load %arg9[%c0_32, %c0_33] : memref<1x128xf32, #tpu.memory_space<vmem>>, vector<1x128xf32>
    %63 = vector.broadcast %62 : vector<1x128xf32> to vector<288x128xf32>
    %64 = arith.addf %61, %63 : vector<288x128xf32>
    %c0_34 = arith.constant 0 : index
    %c0_35 = arith.constant 0 : index
    %65 = vector.load %arg10[%c0_34, %c0_35] : memref<288x128xf32, #tpu.memory_space<vmem>>, vector<288x128xf32>
    tpu.vector_store %arg10[%c0_34, %c0_35], %64 {strides = array<i32>} : memref<288x128xf32, #tpu.memory_space<vmem>>, vector<288x128xf32>,
    return
  }
  func.func @transform_0(%arg0: i32) -> (i32, i32) {
    %c0_i32 = arith.constant 0 : i32
    %c0_i32_0 = arith.constant 0 : i32
    return %arg0, %c0_i32 : i32, i32
  }
  func.func @transform_1(%arg0: i32) -> (i32, i32) {
    %c0_i32 = arith.constant 0 : i32
    %c0_i32_0 = arith.constant 0 : i32
    %c0_i32_1 = arith.constant 0 : i32
    return %c0_i32, %c0_i32_0 : i32, i32
  }
  func.func @transform_2(%arg0: i32) -> (i32, i32) {
    %c0_i32 = arith.constant 0 : i32
    %c0_i32_0 = arith.constant 0 : i32
    %c0_i32_1 = arith.constant 0 : i32
    return %c0_i32, %c0_i32_0 : i32, i32
  }
  func.func @transform_3(%arg0: i32) -> (i32, i32) {
    %c0_i32 = arith.constant 0 : i32
    %c0_i32_0 = arith.constant 0 : i32
    %c0_i32_1 = arith.constant 0 : i32
    return %c0_i32, %c0_i32_0 : i32, i32
  }
  func.func @transform_4(%arg0: i32) -> (i32, i32) {
    %c0_i32 = arith.constant 0 : i32
    %c0_i32_0 = arith.constant 0 : i32
    %c0_i32_1 = arith.constant 0 : i32
    return %c0_i32, %c0_i32_0 : i32, i32
  }
  func.func @transform_5(%arg0: i32) -> (i32, i32) {
    %c0_i32 = arith.constant 0 : i32
    %c0_i32_0 = arith.constant 0 : i32
    %c0_i32_1 = arith.constant 0 : i32
    return %c0_i32, %c0_i32_0 : i32, i32
  }
  func.func @transform_6(%arg0: i32) -> (i32, i32) {
    %c0_i32 = arith.constant 0 : i32
    %c0_i32_0 = arith.constant 0 : i32
    %c0_i32_1 = arith.constant 0 : i32
    return %c0_i32, %c0_i32_0 : i32, i32
  }
  func.func @transform_7(%arg0: i32) -> (i32, i32) {
    %c0_i32 = arith.constant 0 : i32
    %c0_i32_0 = arith.constant 0 : i32
    %c0_i32_1 = arith.constant 0 : i32
    return %c0_i32, %c0_i32_0 : i32, i32
  }
  func.func @transform_8(%arg0: i32) -> (i32, i32) {
    %c0_i32 = arith.constant 0 : i32
    %c0_i32_0 = arith.constant 0 : i32
    %c0_i32_1 = arith.constant 0 : i32
    return %c0_i32, %c0_i32_0 : i32, i32
  }
  func.func @transform_9(%arg0: i32) -> (i32, i32) {
    %c0_i32 = arith.constant 0 : i32
    %c0_i32_0 = arith.constant 0 : i32
    return %arg0, %c0_i32 : i32, i32
  }
}

module attributes {stable_mosaic.version = 11 : i64} {
  func.func @kernel(%arg0: i32, %arg1: memref<64x264xbf16, #tpu.memory_space<vmem>>, %arg2: memref<264x64xbf16, #tpu.memory_space<vmem>>, %arg3: memref<1x64xf32, #tpu.memory_space<vmem>>, %arg4: memref<64x64xbf16, #tpu.memory_space<vmem>>, %arg5: memref<1x64xf32, #tpu.memory_space<vmem>>, %arg6: memref<64x24xbf16, #tpu.memory_space<vmem>>, %arg7: memref<1x24xf32, #tpu.memory_space<vmem>>, %arg8: memref<64x24xf32, #tpu.memory_space<vmem>>) attributes {dimension_semantics = [#tpu.dimension_semantics<parallel>], iteration_bounds = array<i64: 2>, scalar_prefetch = 0 : i64, scratch_operands = 0 : i64, tpu.core_type = #tpu.core_type<tc>, window_params = [{transform_indices = @transform_0, window_bounds = array<i64: 64, 264>}, {pipeline_mode = #tpu.pipeline_mode<synchronous>, transform_indices = @transform_1, window_bounds = array<i64: 264, 64>}, {pipeline_mode = #tpu.pipeline_mode<synchronous>, transform_indices = @transform_2, window_bounds = array<i64: 1, 64>}, {pipeline_mode = #tpu.pipeline_mode<synchronous>, transform_indices = @transform_3, window_bounds = array<i64: 64, 64>}, {pipeline_mode = #tpu.pipeline_mode<synchronous>, transform_indices = @transform_4, window_bounds = array<i64: 1, 64>}, {pipeline_mode = #tpu.pipeline_mode<synchronous>, transform_indices = @transform_5, window_bounds = array<i64: 64, 24>}, {pipeline_mode = #tpu.pipeline_mode<synchronous>, transform_indices = @transform_6, window_bounds = array<i64: 1, 24>}, {transform_indices = @transform_7, window_bounds = array<i64: 64, 24>}]} {
    %c0 = arith.constant 0 : index
    %c0_0 = arith.constant 0 : index
    %0 = vector.load %arg1[%c0, %c0_0] : memref<64x264xbf16, #tpu.memory_space<vmem>>, vector<64x264xbf16>
    %c0_1 = arith.constant 0 : index
    %c0_2 = arith.constant 0 : index
    %1 = vector.load %arg2[%c0_1, %c0_2] : memref<264x64xbf16, #tpu.memory_space<vmem>>, vector<264x64xbf16>
    %cst = arith.constant dense<0.000000e+00> : vector<64x64xf32>
    %2 = tpu.matmul %0, %1, %cst {dimension_numbers = #tpu.dot_dimension_numbers<[1], [0], [0], [1], [0, 0, 1, 1], [], []>} : vector<64x264xbf16>, vector<264x64xbf16>, vector<64x64xf32> -> vector<64x64xf32>
    %c0_3 = arith.constant 0 : index
    %c0_4 = arith.constant 0 : index
    %3 = vector.load %arg3[%c0_3, %c0_4] : memref<1x64xf32, #tpu.memory_space<vmem>>, vector<1x64xf32>
    %4 = vector.broadcast %3 : vector<1x64xf32> to vector<64x64xf32>
    %5 = arith.addf %2, %4 : vector<64x64xf32>
    %cst_5 = arith.constant 0.000000e+00 : f32
    %6 = vector.broadcast %cst_5 : f32 to vector<64x64xf32>
    %7 = arith.maximumf %5, %6 : vector<64x64xf32>
    %8 = arith.truncf %7 : vector<64x64xf32> to vector<64x64xbf16>
    %c0_6 = arith.constant 0 : index
    %c0_7 = arith.constant 0 : index
    %9 = vector.load %arg4[%c0_6, %c0_7] : memref<64x64xbf16, #tpu.memory_space<vmem>>, vector<64x64xbf16>
    %cst_8 = arith.constant dense<0.000000e+00> : vector<64x64xf32>
    %10 = tpu.matmul %8, %9, %cst_8 {dimension_numbers = #tpu.dot_dimension_numbers<[1], [0], [0], [1], [0, 0, 1, 1], [], []>} : vector<64x64xbf16>, vector<64x64xbf16>, vector<64x64xf32> -> vector<64x64xf32>
    %c0_9 = arith.constant 0 : index
    %c0_10 = arith.constant 0 : index
    %11 = vector.load %arg5[%c0_9, %c0_10] : memref<1x64xf32, #tpu.memory_space<vmem>>, vector<1x64xf32>
    %12 = vector.broadcast %11 : vector<1x64xf32> to vector<64x64xf32>
    %13 = arith.addf %10, %12 : vector<64x64xf32>
    %cst_11 = arith.constant 0.000000e+00 : f32
    %14 = vector.broadcast %cst_11 : f32 to vector<64x64xf32>
    %15 = arith.maximumf %13, %14 : vector<64x64xf32>
    %16 = arith.truncf %15 : vector<64x64xf32> to vector<64x64xbf16>
    %c0_12 = arith.constant 0 : index
    %c0_13 = arith.constant 0 : index
    %17 = vector.load %arg6[%c0_12, %c0_13] : memref<64x24xbf16, #tpu.memory_space<vmem>>, vector<64x24xbf16>
    %cst_14 = arith.constant dense<0.000000e+00> : vector<64x24xf32>
    %18 = tpu.matmul %16, %17, %cst_14 {dimension_numbers = #tpu.dot_dimension_numbers<[1], [0], [0], [1], [0, 0, 1, 1], [], []>} : vector<64x64xbf16>, vector<64x24xbf16>, vector<64x24xf32> -> vector<64x24xf32>
    %c0_15 = arith.constant 0 : index
    %c0_16 = arith.constant 0 : index
    %19 = vector.load %arg7[%c0_15, %c0_16] : memref<1x24xf32, #tpu.memory_space<vmem>>, vector<1x24xf32>
    %20 = vector.broadcast %19 : vector<1x24xf32> to vector<64x24xf32>
    %21 = arith.addf %18, %20 : vector<64x24xf32>
    %22 = tpu.iota {dimensions = array<i32: 1>} : vector<64x24xi32>
    %c8_i32 = arith.constant 8 : i32
    %23 = vector.broadcast %c8_i32 : i32 to vector<64x24xi32>
    %24 = arith.cmpi slt, %22, %23 : vector<64x24xi32>
    %25 = arith.negf %21 : vector<64x24xf32>
    %26 = math.exp %25 : vector<64x24xf32>
    %cst_17 = arith.constant 1.000000e+00 : f32
    %27 = vector.broadcast %cst_17 : f32 to vector<64x24xf32>
    %28 = arith.addf %27, %26 : vector<64x24xf32>
    %29 = arith.divf %27, %28 : vector<64x24xf32>
    %cst_18 = arith.constant 0.000000e+00 : f32
    %30 = vector.broadcast %cst_18 : f32 to vector<64x24xf32>
    %31 = arith.maximumf %21, %30 : vector<64x24xf32>
    %32 = arith.select %24, %29, %31 : vector<64x24xi1>, vector<64x24xf32>
    %c4_i32 = arith.constant 4 : i32
    %33 = vector.broadcast %c4_i32 : i32 to vector<64x24xi32>
    %34 = arith.cmpi sge, %22, %33 : vector<64x24xi32>
    %c7_i32 = arith.constant 7 : i32
    %35 = vector.broadcast %c7_i32 : i32 to vector<64x24xi32>
    %36 = arith.cmpi slt, %22, %35 : vector<64x24xi32>
    %37 = arith.andi %34, %36 : vector<64x24xi1>
    %c7_i32_19 = arith.constant 7 : i32
    %38 = vector.broadcast %c7_i32_19 : i32 to vector<64x24xi32>
    %39 = arith.cmpi eq, %22, %38 : vector<64x24xi32>
    %cst_20 = arith.constant 6.28318548 : f32
    %cst_21 = arith.constant 1.000000e+00 : f32
    %40 = vector.broadcast %cst_20 : f32 to vector<64x24xf32>
    %41 = vector.broadcast %cst_21 : f32 to vector<64x24xf32>
    %42 = arith.select %39, %40, %41 : vector<64x24xi1>, vector<64x24xf32>
    %cst_22 = arith.constant 2.000000e-02 : f32
    %43 = vector.broadcast %cst_22 : f32 to vector<64x24xf32>
    %44 = arith.select %37, %43, %42 : vector<64x24xi1>, vector<64x24xf32>
    %45 = arith.mulf %32, %44 : vector<64x24xf32>
    %c0_23 = arith.constant 0 : index
    %c0_24 = arith.constant 0 : index
    %46 = vector.load %arg8[%c0_23, %c0_24] : memref<64x24xf32, #tpu.memory_space<vmem>>, vector<64x24xf32>
    tpu.vector_store %arg8[%c0_23, %c0_24], %45 {strides = array<i32>} : memref<64x24xf32, #tpu.memory_space<vmem>>, vector<64x24xf32>,
    return
  }
  func.func @transform_0(%arg0: i32) -> (i32, i32) {
    %c0_i32 = arith.constant 0 : i32
    %c0_i32_0 = arith.constant 0 : i32
    return %arg0, %c0_i32 : i32, i32
  }
  func.func @transform_1(%arg0: i32) -> (i32, i32) {
    %c0_i32 = arith.constant 0 : i32
    %c0_i32_0 = arith.constant 0 : i32
    %c0_i32_1 = arith.constant 0 : i32
    return %c0_i32, %c0_i32_0 : i32, i32
  }
  func.func @transform_2(%arg0: i32) -> (i32, i32) {
    %c0_i32 = arith.constant 0 : i32
    %c0_i32_0 = arith.constant 0 : i32
    %c0_i32_1 = arith.constant 0 : i32
    return %c0_i32, %c0_i32_0 : i32, i32
  }
  func.func @transform_3(%arg0: i32) -> (i32, i32) {
    %c0_i32 = arith.constant 0 : i32
    %c0_i32_0 = arith.constant 0 : i32
    %c0_i32_1 = arith.constant 0 : i32
    return %c0_i32, %c0_i32_0 : i32, i32
  }
  func.func @transform_4(%arg0: i32) -> (i32, i32) {
    %c0_i32 = arith.constant 0 : i32
    %c0_i32_0 = arith.constant 0 : i32
    %c0_i32_1 = arith.constant 0 : i32
    return %c0_i32, %c0_i32_0 : i32, i32
  }
  func.func @transform_5(%arg0: i32) -> (i32, i32) {
    %c0_i32 = arith.constant 0 : i32
    %c0_i32_0 = arith.constant 0 : i32
    %c0_i32_1 = arith.constant 0 : i32
    return %c0_i32, %c0_i32_0 : i32, i32
  }
  func.func @transform_6(%arg0: i32) -> (i32, i32) {
    %c0_i32 = arith.constant 0 : i32
    %c0_i32_0 = arith.constant 0 : i32
    %c0_i32_1 = arith.constant 0 : i32
    return %c0_i32, %c0_i32_0 : i32, i32
  }
  func.func @transform_7(%arg0: i32) -> (i32, i32) {
    %c0_i32 = arith.constant 0 : i32
    %c0_i32_0 = arith.constant 0 : i32
    return %arg0, %c0_i32 : i32, i32
  }
}

module attributes {stable_mosaic.version = 11 : i64} {
  func.func @kernel(%arg0: i32, %arg1: memref<64x128xbf16, #tpu.memory_space<vmem>>, %arg2: memref<128x64xbf16, #tpu.memory_space<vmem>>, %arg3: memref<1x64xf32, #tpu.memory_space<vmem>>, %arg4: memref<64x64xbf16, #tpu.memory_space<vmem>>, %arg5: memref<1x64xf32, #tpu.memory_space<vmem>>, %arg6: memref<64x8xbf16, #tpu.memory_space<vmem>>, %arg7: memref<1x8xf32, #tpu.memory_space<vmem>>, %arg8: memref<64x8xf32, #tpu.memory_space<vmem>>) attributes {dimension_semantics = [#tpu.dimension_semantics<parallel>], iteration_bounds = array<i64: 2>, scalar_prefetch = 0 : i64, scratch_operands = 0 : i64, tpu.core_type = #tpu.core_type<tc>, window_params = [{transform_indices = @transform_0, window_bounds = array<i64: 64, 128>}, {pipeline_mode = #tpu.pipeline_mode<synchronous>, transform_indices = @transform_1, window_bounds = array<i64: 128, 64>}, {pipeline_mode = #tpu.pipeline_mode<synchronous>, transform_indices = @transform_2, window_bounds = array<i64: 1, 64>}, {pipeline_mode = #tpu.pipeline_mode<synchronous>, transform_indices = @transform_3, window_bounds = array<i64: 64, 64>}, {pipeline_mode = #tpu.pipeline_mode<synchronous>, transform_indices = @transform_4, window_bounds = array<i64: 1, 64>}, {pipeline_mode = #tpu.pipeline_mode<synchronous>, transform_indices = @transform_5, window_bounds = array<i64: 64, 8>}, {pipeline_mode = #tpu.pipeline_mode<synchronous>, transform_indices = @transform_6, window_bounds = array<i64: 1, 8>}, {transform_indices = @transform_7, window_bounds = array<i64: 64, 8>}]} {
    %c0 = arith.constant 0 : index
    %c0_0 = arith.constant 0 : index
    %0 = vector.load %arg1[%c0, %c0_0] : memref<64x128xbf16, #tpu.memory_space<vmem>>, vector<64x128xbf16>
    %c0_1 = arith.constant 0 : index
    %c0_2 = arith.constant 0 : index
    %1 = vector.load %arg2[%c0_1, %c0_2] : memref<128x64xbf16, #tpu.memory_space<vmem>>, vector<128x64xbf16>
    %cst = arith.constant dense<0.000000e+00> : vector<64x64xf32>
    %2 = tpu.matmul %0, %1, %cst {dimension_numbers = #tpu.dot_dimension_numbers<[1], [0], [0], [1], [0, 0, 1, 1], [], []>} : vector<64x128xbf16>, vector<128x64xbf16>, vector<64x64xf32> -> vector<64x64xf32>
    %c0_3 = arith.constant 0 : index
    %c0_4 = arith.constant 0 : index
    %3 = vector.load %arg3[%c0_3, %c0_4] : memref<1x64xf32, #tpu.memory_space<vmem>>, vector<1x64xf32>
    %4 = vector.broadcast %3 : vector<1x64xf32> to vector<64x64xf32>
    %5 = arith.addf %2, %4 : vector<64x64xf32>
    %cst_5 = arith.constant 0.000000e+00 : f32
    %6 = vector.broadcast %cst_5 : f32 to vector<64x64xf32>
    %7 = arith.maximumf %5, %6 : vector<64x64xf32>
    %8 = arith.truncf %7 : vector<64x64xf32> to vector<64x64xbf16>
    %c0_6 = arith.constant 0 : index
    %c0_7 = arith.constant 0 : index
    %9 = vector.load %arg4[%c0_6, %c0_7] : memref<64x64xbf16, #tpu.memory_space<vmem>>, vector<64x64xbf16>
    %cst_8 = arith.constant dense<0.000000e+00> : vector<64x64xf32>
    %10 = tpu.matmul %8, %9, %cst_8 {dimension_numbers = #tpu.dot_dimension_numbers<[1], [0], [0], [1], [0, 0, 1, 1], [], []>} : vector<64x64xbf16>, vector<64x64xbf16>, vector<64x64xf32> -> vector<64x64xf32>
    %c0_9 = arith.constant 0 : index
    %c0_10 = arith.constant 0 : index
    %11 = vector.load %arg5[%c0_9, %c0_10] : memref<1x64xf32, #tpu.memory_space<vmem>>, vector<1x64xf32>
    %12 = vector.broadcast %11 : vector<1x64xf32> to vector<64x64xf32>
    %13 = arith.addf %10, %12 : vector<64x64xf32>
    %cst_11 = arith.constant 0.000000e+00 : f32
    %14 = vector.broadcast %cst_11 : f32 to vector<64x64xf32>
    %15 = arith.maximumf %13, %14 : vector<64x64xf32>
    %16 = arith.truncf %15 : vector<64x64xf32> to vector<64x64xbf16>
    %c0_12 = arith.constant 0 : index
    %c0_13 = arith.constant 0 : index
    %17 = vector.load %arg6[%c0_12, %c0_13] : memref<64x8xbf16, #tpu.memory_space<vmem>>, vector<64x8xbf16>
    %cst_14 = arith.constant dense<0.000000e+00> : vector<64x8xf32>
    %18 = tpu.matmul %16, %17, %cst_14 {dimension_numbers = #tpu.dot_dimension_numbers<[1], [0], [0], [1], [0, 0, 1, 1], [], []>} : vector<64x64xbf16>, vector<64x8xbf16>, vector<64x8xf32> -> vector<64x8xf32>
    %c0_15 = arith.constant 0 : index
    %c0_16 = arith.constant 0 : index
    %19 = vector.load %arg7[%c0_15, %c0_16] : memref<1x8xf32, #tpu.memory_space<vmem>>, vector<1x8xf32>
    %20 = vector.broadcast %19 : vector<1x8xf32> to vector<64x8xf32>
    %21 = arith.addf %18, %20 : vector<64x8xf32>
    %22 = arith.negf %21 : vector<64x8xf32>
    %23 = math.exp %22 : vector<64x8xf32>
    %cst_17 = arith.constant 1.000000e+00 : f32
    %24 = vector.broadcast %cst_17 : f32 to vector<64x8xf32>
    %25 = arith.addf %24, %23 : vector<64x8xf32>
    %26 = arith.divf %24, %25 : vector<64x8xf32>
    %c0_18 = arith.constant 0 : index
    %c0_19 = arith.constant 0 : index
    %27 = vector.load %arg8[%c0_18, %c0_19] : memref<64x8xf32, #tpu.memory_space<vmem>>, vector<64x8xf32>
    tpu.vector_store %arg8[%c0_18, %c0_19], %26 {strides = array<i32>} : memref<64x8xf32, #tpu.memory_space<vmem>>, vector<64x8xf32>,
    return
  }
  func.func @transform_0(%arg0: i32) -> (i32, i32) {
    %c0_i32 = arith.constant 0 : i32
    %c0_i32_0 = arith.constant 0 : i32
    return %arg0, %c0_i32 : i32, i32
  }
  func.func @transform_1(%arg0: i32) -> (i32, i32) {
    %c0_i32 = arith.constant 0 : i32
    %c0_i32_0 = arith.constant 0 : i32
    %c0_i32_1 = arith.constant 0 : i32
    return %c0_i32, %c0_i32_0 : i32, i32
  }
  func.func @transform_2(%arg0: i32) -> (i32, i32) {
    %c0_i32 = arith.constant 0 : i32
    %c0_i32_0 = arith.constant 0 : i32
    %c0_i32_1 = arith.constant 0 : i32
    return %c0_i32, %c0_i32_0 : i32, i32
  }
  func.func @transform_3(%arg0: i32) -> (i32, i32) {
    %c0_i32 = arith.constant 0 : i32
    %c0_i32_0 = arith.constant 0 : i32
    %c0_i32_1 = arith.constant 0 : i32
    return %c0_i32, %c0_i32_0 : i32, i32
  }
  func.func @transform_4(%arg0: i32) -> (i32, i32) {
    %c0_i32 = arith.constant 0 : i32
    %c0_i32_0 = arith.constant 0 : i32
    %c0_i32_1 = arith.constant 0 : i32
    return %c0_i32, %c0_i32_0 : i32, i32
  }
  func.func @transform_5(%arg0: i32) -> (i32, i32) {
    %c0_i32 = arith.constant 0 : i32
    %c0_i32_0 = arith.constant 0 : i32
    %c0_i32_1 = arith.constant 0 : i32
    return %c0_i32, %c0_i32_0 : i32, i32
  }
  func.func @transform_6(%arg0: i32) -> (i32, i32) {
    %c0_i32 = arith.constant 0 : i32
    %c0_i32_0 = arith.constant 0 : i32
    %c0_i32_1 = arith.constant 0 : i32
    return %c0_i32, %c0_i32_0 : i32, i32
  }
  func.func @transform_7(%arg0: i32) -> (i32, i32) {
    %c0_i32 = arith.constant 0 : i32
    %c0_i32_0 = arith.constant 0 : i32
    return %arg0, %c0_i32 : i32, i32
  }
}

</mosaic_0001>

<llo_original>
// kernel: gaussian_network_forward.3
$region0: #{gaussian_network_forward.3}
  #allocation0 [shape = 'u32[]', space=smem, size = 0x4, offset = 0x4, fixed_abs, tag = 'smem constant byte address 0x4 - core index']
  #allocation1 [shape = 'u32[144,128]{1,0:T(1,128)}', space=vmem, size = 0x12000, scoped, tag = 'internal scratch']
  %s0 = inlined_call_operand.vmem [shape: bf16[576,72], index: 0, kind: input, shape index: {}]
  %s1 = inlined_call_operand.vmem [shape: bf16[72,64], index: 1, kind: input, shape index: {}]
  %s2 = inlined_call_operand.vmem [shape: f32[1,64], index: 2, kind: input, shape index: {}]
  %s3 = inlined_call_operand.vmem [shape: bf16[64,64], index: 3, kind: input, shape index: {}]
  %s4 = inlined_call_operand.vmem [shape: f32[1,64], index: 4, kind: input, shape index: {}]
  %s5 = inlined_call_operand.vmem [shape: f32[1,64], index: 5, kind: input, shape index: {}]
  %s6 = inlined_call_operand.vmem [shape: bf16[64,64], index: 6, kind: input, shape index: {}]
  %s7 = inlined_call_operand.vmem [shape: bf16[128,128], index: 7, kind: input, shape index: {}]
  %s8 = inlined_call_operand.vmem [shape: f32[1,128], index: 8, kind: input, shape index: {}]
  %s9 = inlined_call_operand.vmem [shape: f32[576,128], index: 9, kind: output, shape index: {}]
  %s10 = sld [smem:[#allocation0]]
  $region69: #{gaussian_network_forward.3} parent=0
    _
  %s12 = ssub.s32 1, %s10
  %s13 = scalar_select 0, %s12, %s10
  loop: start=0, step=1, limit=4
  $region2: #{gaussian_network_forward.3} parent=0 // loop_pre_header
    _
  $region3: #{gaussian_network_forward.3} parent=0 // loop_header
    %s15 = sphi 0, %s19
    %p16 = scmp.ge.s32.totalorder %s15, 4
    %s25 = sphi 0, %s27
    %s28 = sphi 0, %s25
    %s29 = sphi 0, %s28
    %s45 = sphi 0, %s29
    %s49 = sphi 0, %s49
    %s51 = sphi 0, %s49
    %s52 = sphi 0, %s51
    %s66 = sphi 0, %s52
    %s70 = sphi 0, %s70
    %s72 = sphi 0, %s70
    %s73 = sphi 0, %s72
    %s87 = sphi 0, %s73
    %s91 = sphi 0, %s91
    %s93 = sphi 0, %s91
    %s94 = sphi 0, %s93
    %s108 = sphi 0, %s94
    %s112 = sphi 0, %s112
    %s114 = sphi 0, %s112
    %s115 = sphi 0, %s114
    %s129 = sphi 0, %s115
    %s133 = sphi 0, %s133
    %s135 = sphi 0, %s133
    %s136 = sphi 0, %s135
    %s150 = sphi 0, %s136
    %s154 = sphi 0, %s154
    %s156 = sphi 0, %s154
    %s157 = sphi 0, %s156
    %s171 = sphi 0, %s157
    %s175 = sphi 0, %s175
    %s177 = sphi 0, %s175
    %s178 = sphi 0, %s177
    %s192 = sphi 0, %s178
    %s196 = sphi 0, %s196
    %s198 = sphi 0, %s196
    %s199 = sphi 0, %s198
    %s213 = sphi 0, %s199
    %s219 = sphi 0, %s221
    %s222 = sphi 0, %s219
    %s223 = sphi 0, %s222
    %s239 = sphi 0, %s223
  $region4: #{gaussian_network_forward.3} parent=0 // loop_header_branch
    %18 = sbr.rel (%p16) target = $region8
  $region5: #{gaussian_network_forward.3} parent=0 // loop_body
    %s20 = ssub.s32 %s15, 1
    %s21 = ssub.s32 %s15, 2
    %s22 = sadd.s32 %s15, 1
    %s23 = ssub.s32 %s15, %s22
    %p24 = scmp.eq.s32.totalorder %s23, 0
    %s26 = sadd.s32 %s25, 1
    %s27 = scalar_select %p24, %s25, %s26
    %p30 = pneg %p24
    %p31 = scmp.eq.s32.totalorder %s15, 1
    %p32 = por %p30, %p31
    %p33 = scmp.ne.s32.totalorder %s25, %s28
    %p34 = scmp.eq.s32.totalorder %s15, 0
    %p35 = por %p33, %p34
    %p36 = scmp.ne.s32.totalorder %s25, %s28
    %p37 = scmp.eq.s32.totalorder %s20, 1
    %p38 = por %p36, %p37
    %p39 = scmp.ne.s32.totalorder %s28, %s29
    %p40 = scmp.eq.s32.totalorder %s20, 0
    %p41 = por %p39, %p40
    %p42 = scmp.ne.s32.totalorder %s28, %s29
    %p43 = scmp.eq.s32.totalorder %s21, 1
    %p44 = por %p42, %p43
    %p46 = scmp.ne.s32.totalorder %s29, %s45
    %p47 = scmp.eq.s32.totalorder %s21, 0
    %p48 = por %p46, %p47
    %s50 = sadd.s32 %s49, 1
    %p53 = scmp.eq.s32.totalorder %s15, 1
    %p54 = scmp.ne.s32.totalorder %s49, %s51
    %p55 = scmp.eq.s32.totalorder %s15, 0
    %p56 = por %p54, %p55
    %p57 = scmp.ne.s32.totalorder %s49, %s51
    %p58 = scmp.eq.s32.totalorder %s20, 1
    %p59 = por %p57, %p58
    %p60 = scmp.ne.s32.totalorder %s51, %s52
    %p61 = scmp.eq.s32.totalorder %s20, 0
    %p62 = por %p60, %p61
    %p63 = scmp.ne.s32.totalorder %s51, %s52
    %p64 = scmp.eq.s32.totalorder %s21, 1
    %p65 = por %p63, %p64
    %p67 = scmp.ne.s32.totalorder %s52, %s66
    %p68 = scmp.eq.s32.totalorder %s21, 0
    %p69 = por %p67, %p68
    %s71 = sadd.s32 %s70, 1
    %p74 = scmp.eq.s32.totalorder %s15, 1
    %p75 = scmp.ne.s32.totalorder %s70, %s72
    %p76 = scmp.eq.s32.totalorder %s15, 0
    %p77 = por %p75, %p76
    %p78 = scmp.ne.s32.totalorder %s70, %s72
    %p79 = scmp.eq.s32.totalorder %s20, 1
    %p80 = por %p78, %p79
    %p81 = scmp.ne.s32.totalorder %s72, %s73
    %p82 = scmp.eq.s32.totalorder %s20, 0
    %p83 = por %p81, %p82
    %p84 = scmp.ne.s32.totalorder %s72, %s73
    %p85 = scmp.eq.s32.totalorder %s21, 1
    %p86 = por %p84, %p85
    %p88 = scmp.ne.s32.totalorder %s73, %s87
    %p89 = scmp.eq.s32.totalorder %s21, 0
    %p90 = por %p88, %p89
    %s92 = sadd.s32 %s91, 1
    %p95 = scmp.eq.s32.totalorder %s15, 1
    %p96 = scmp.ne.s32.totalorder %s91, %s93
    %p97 = scmp.eq.s32.totalorder %s15, 0
    %p98 = por %p96, %p97
    %p99 = scmp.ne.s32.totalorder %s91, %s93
    %p100 = scmp.eq.s32.totalorder %s20, 1
    %p101 = por %p99, %p100
    %p102 = scmp.ne.s32.totalorder %s93, %s94
    %p103 = scmp.eq.s32.totalorder %s20, 0
    %p104 = por %p102, %p103
    %p105 = scmp.ne.s32.totalorder %s93, %s94
    %p106 = scmp.eq.s32.totalorder %s21, 1
    %p107 = por %p105, %p106
    %p109 = scmp.ne.s32.totalorder %s94, %s108
    %p110 = scmp.eq.s32.totalorder %s21, 0
    %p111 = por %p109, %p110
    %s113 = sadd.s32 %s112, 1
    %p116 = scmp.eq.s32.totalorder %s15, 1
    %p117 = scmp.ne.s32.totalorder %s112, %s114
    %p118 = scmp.eq.s32.totalorder %s15, 0
    %p119 = por %p117, %p118
    %p120 = scmp.ne.s32.totalorder %s112, %s114
    %p121 = scmp.eq.s32.totalorder %s20, 1
    %p122 = por %p120, %p121
    %p123 = scmp.ne.s32.totalorder %s114, %s115
    %p124 = scmp.eq.s32.totalorder %s20, 0
    %p125 = por %p123, %p124
    %p126 = scmp.ne.s32.totalorder %s114, %s115
    %p127 = scmp.eq.s32.totalorder %s21, 1
    %p128 = por %p126, %p127
    %p130 = scmp.ne.s32.totalorder %s115, %s129
    %p131 = scmp.eq.s32.totalorder %s21, 0
    %p132 = por %p130, %p131
    %s134 = sadd.s32 %s133, 1
    %p137 = scmp.eq.s32.totalorder %s15, 1
    %p138 = scmp.ne.s32.totalorder %s133, %s135
    %p139 = scmp.eq.s32.totalorder %s15, 0
    %p140 = por %p138, %p139
    %p141 = scmp.ne.s32.totalorder %s133, %s135
    %p142 = scmp.eq.s32.totalorder %s20, 1
    %p143 = por %p141, %p142
    %p144 = scmp.ne.s32.totalorder %s135, %s136
    %p145 = scmp.eq.s32.totalorder %s20, 0
    %p146 = por %p144, %p145
    %p147 = scmp.ne.s32.totalorder %s135, %s136
    %p148 = scmp.eq.s32.totalorder %s21, 1
    %p149 = por %p147, %p148
    %p151 = scmp.ne.s32.totalorder %s136, %s150
    %p152 = scmp.eq.s32.totalorder %s21, 0
    %p153 = por %p151, %p152
    %s155 = sadd.s32 %s154, 1
    %p158 = scmp.eq.s32.totalorder %s15, 1
    %p159 = scmp.ne.s32.totalorder %s154, %s156
    %p160 = scmp.eq.s32.totalorder %s15, 0
    %p161 = por %p159, %p160
    %p162 = scmp.ne.s32.totalorder %s154, %s156
    %p163 = scmp.eq.s32.totalorder %s20, 1
    %p164 = por %p162, %p163
    %p165 = scmp.ne.s32.totalorder %s156, %s157
    %p166 = scmp.eq.s32.totalorder %s20, 0
    %p167 = por %p165, %p166
    %p168 = scmp.ne.s32.totalorder %s156, %s157
    %p169 = scmp.eq.s32.totalorder %s21, 1
    %p170 = por %p168, %p169
    %p172 = scmp.ne.s32.totalorder %s157, %s171
    %p173 = scmp.eq.s32.totalorder %s21, 0
    %p174 = por %p172, %p173
    %s176 = sadd.s32 %s175, 1
    %p179 = scmp.eq.s32.totalorder %s15, 1
    %p180 = scmp.ne.s32.totalorder %s175, %s177
    %p181 = scmp.eq.s32.totalorder %s15, 0
    %p182 = por %p180, %p181
    %p183 = scmp.ne.s32.totalorder %s175, %s177
    %p184 = scmp.eq.s32.totalorder %s20, 1
    %p185 = por %p183, %p184
    %p186 = scmp.ne.s32.totalorder %s177, %s178
    %p187 = scmp.eq.s32.totalorder %s20, 0
    %p188 = por %p186, %p187
    %p189 = scmp.ne.s32.totalorder %s177, %s178
    %p190 = scmp.eq.s32.totalorder %s21, 1
    %p191 = por %p189, %p190
    %p193 = scmp.ne.s32.totalorder %s178, %s192
    %p194 = scmp.eq.s32.totalorder %s21, 0
    %p195 = por %p193, %p194
    %s197 = sadd.s32 %s196, 1
    %p200 = scmp.eq.s32.totalorder %s15, 1
    %p201 = scmp.ne.s32.totalorder %s196, %s198
    %p202 = scmp.eq.s32.totalorder %s15, 0
    %p203 = por %p201, %p202
    %p204 = scmp.ne.s32.totalorder %s196, %s198
    %p205 = scmp.eq.s32.totalorder %s20, 1
    %p206 = por %p204, %p205
    %p207 = scmp.ne.s32.totalorder %s198, %s199
    %p208 = scmp.eq.s32.totalorder %s20, 0
    %p209 = por %p207, %p208
    %p210 = scmp.ne.s32.totalorder %s198, %s199
    %p211 = scmp.eq.s32.totalorder %s21, 1
    %p212 = por %p210, %p211
    %p214 = scmp.ne.s32.totalorder %s199, %s213
    %p215 = scmp.eq.s32.totalorder %s21, 0
    %p216 = por %p214, %p215
    %s217 = ssub.s32 %s15, %s22
    %p218 = scmp.eq.s32.totalorder %s217, 0
    %s220 = sadd.s32 %s219, 1
    %s221 = scalar_select %p218, %s219, %s220
    %p224 = pneg %p218
    %p225 = scmp.eq.s32.totalorder %s15, 1
    %p226 = por %p224, %p225
    %p227 = scmp.ne.s32.totalorder %s219, %s222
    %p228 = scmp.eq.s32.totalorder %s15, 0
    %p229 = por %p227, %p228
    %p230 = scmp.ne.s32.totalorder %s219, %s222
    %p231 = scmp.eq.s32.totalorder %s20, 1
    %p232 = por %p230, %p231
    %p233 = scmp.ne.s32.totalorder %s222, %s223
    %p234 = scmp.eq.s32.totalorder %s20, 0
    %p235 = por %p233, %p234
    %p236 = scmp.ne.s32.totalorder %s222, %s223
    %p237 = scmp.eq.s32.totalorder %s21, 1
    %p238 = por %p236, %p237
    %p240 = scmp.ne.s32.totalorder %s223, %s239
    %p241 = scmp.eq.s32.totalorder %s21, 0
    %p242 = por %p240, %p241
    %p243 = scmp.le.s32.totalorder 1, %s15
    %p244 = scmp.lt.s32.totalorder %s15, 3
    %p245 = pnand %p243, %p244
    %p246 = pneg %p245
    // Predicated region
    $region9: #{gaussian_network_forward.3} parent=5 // pred_check
      _
    $region10: #{gaussian_network_forward.3} parent=5 // pred_check_branch
      %248 = sbr.rel (%p245) target = $region12
    $region11: #{gaussian_network_forward.3} parent=5 // pred_region
      %s249 = ssub.s32 %s15, 1
      // Predicated region
      $region13: #{gaussian_network_forward.3} parent=11 // pred_check
        %p250 = pneg %p62
      $region14: #{gaussian_network_forward.3} parent=11 // pred_check_branch
        %252 = sbr.rel (%p250) target = $region16
      $region15: #{gaussian_network_forward.3} parent=11 // pred_region
        _
      $region16: #{gaussian_network_forward.3} parent=11 // pred_fallthru
        _
      // Predicated region
      $region17: #{gaussian_network_forward.3} parent=11 // pred_check
        %p253 = pneg %p83
      $region18: #{gaussian_network_forward.3} parent=11 // pred_check_branch
        %255 = sbr.rel (%p253) target = $region20
      $region19: #{gaussian_network_forward.3} parent=11 // pred_region
        _
      $region20: #{gaussian_network_forward.3} parent=11 // pred_fallthru
        _
      // Predicated region
      $region21: #{gaussian_network_forward.3} parent=11 // pred_check
        %p256 = pneg %p104
      $region22: #{gaussian_network_forward.3} parent=11 // pred_check_branch
        %258 = sbr.rel (%p256) target = $region24
      $region23: #{gaussian_network_forward.3} parent=11 // pred_region
        _
      $region24: #{gaussian_network_forward.3} parent=11 // pred_fallthru
        _
      // Predicated region
      $region25: #{gaussian_network_forward.3} parent=11 // pred_check
        %p259 = pneg %p125
      $region26: #{gaussian_network_forward.3} parent=11 // pred_check_branch
        %261 = sbr.rel (%p259) target = $region28
      $region27: #{gaussian_network_forward.3} parent=11 // pred_region
        _
      $region28: #{gaussian_network_forward.3} parent=11 // pred_fallthru
        _
      // Predicated region
      $region29: #{gaussian_network_forward.3} parent=11 // pred_check
        %p262 = pneg %p146
      $region30: #{gaussian_network_forward.3} parent=11 // pred_check_branch
        %264 = sbr.rel (%p262) target = $region32
      $region31: #{gaussian_network_forward.3} parent=11 // pred_region
        _
      $region32: #{gaussian_network_forward.3} parent=11 // pred_fallthru
        _
      // Predicated region
      $region33: #{gaussian_network_forward.3} parent=11 // pred_check
        %p265 = pneg %p167
      $region34: #{gaussian_network_forward.3} parent=11 // pred_check_branch
        %267 = sbr.rel (%p265) target = $region36
      $region35: #{gaussian_network_forward.3} parent=11 // pred_region
        _
      $region36: #{gaussian_network_forward.3} parent=11 // pred_fallthru
        _
      // Predicated region
      $region37: #{gaussian_network_forward.3} parent=11 // pred_check
        %p268 = pneg %p188
      $region38: #{gaussian_network_forward.3} parent=11 // pred_check_branch
        %270 = sbr.rel (%p268) target = $region40
      $region39: #{gaussian_network_forward.3} parent=11 // pred_region
        _
      $region40: #{gaussian_network_forward.3} parent=11 // pred_fallthru
        _
      // Predicated region
      $region41: #{gaussian_network_forward.3} parent=11 // pred_check
        %p271 = pneg %p209
      $region42: #{gaussian_network_forward.3} parent=11 // pred_check_branch
        %273 = sbr.rel (%p271) target = $region44
      $region43: #{gaussian_network_forward.3} parent=11 // pred_region
        _
      $region44: #{gaussian_network_forward.3} parent=11 // pred_fallthru
        _
    $region12: #{gaussian_network_forward.3} parent=5 // pred_fallthru
      _
    %p274 = scmp.lt.s32.totalorder %s15, 2
    // Predicated region
    $region45: #{gaussian_network_forward.3} parent=5 // pred_check
      %p275 = pneg %p274
    $region46: #{gaussian_network_forward.3} parent=5 // pred_check_branch
      %277 = sbr.rel (%p275) target = $region48
    $region47: #{gaussian_network_forward.3} parent=5 // pred_region
      // Predicated region
      $region49: #{gaussian_network_forward.3} parent=47 // pred_check
        %p278 = pneg %p35
      $region50: #{gaussian_network_forward.3} parent=47 // pred_check_branch
        %280 = sbr.rel (%p278) target = $region52
      $region51: #{gaussian_network_forward.3} parent=47 // pred_region
        %s281 = smul.u32 36, %s15
        %p282 = scmp.lt.s32.totalorder %s281, 71
        %s283 = scalar_select %p282, %s281, 71
        %s284 = smul.addr %s283, 4
        %s285 = scalar_lea.vmem %s0, %s284
        %s286 = smul.u32 36, %s15
      $region52: #{gaussian_network_forward.3} parent=47 // pred_fallthru
        _
    $region48: #{gaussian_network_forward.3} parent=5 // pred_fallthru
      _
    %p287 = scmp.le.s32.totalorder 1, %s15
    %p288 = scmp.lt.s32.totalorder %s15, 3
    %p289 = pnand %p287, %p288
    %p290 = pneg %p289
    // Predicated region
    $region53: #{gaussian_network_forward.3} parent=5 // pred_check
      _
    $region54: #{gaussian_network_forward.3} parent=5 // pred_check_branch
      %292 = sbr.rel (%p289) target = $region56
    $region55: #{gaussian_network_forward.3} parent=5 // pred_region
      %s293 = ssub.s32 %s15, 1
      %s294 = smul.u32 36, %s20
      %p295 = scmp.lt.s32.totalorder %s294, 71
      %s296 = scalar_select %p295, %s294, 71
      %s297 = smul.addr %s296, 4
      %s298 = scalar_lea.vmem %s0, %s297
      %p299 = pneg %p41
      %p300 = pneg %p38
      %p301 = pneg %p62
      %p302 = pneg %p59
      %p303 = pneg %p83
      %p304 = pneg %p80
      %p305 = pneg %p104
      %p306 = pneg %p101
      %p307 = pneg %p125
      %p308 = pneg %p122
      %p309 = pneg %p146
      %p310 = pneg %p143
      %p311 = pneg %p167
      %p312 = pneg %p164
      %p313 = pneg %p188
      %p314 = pneg %p185
      %p315 = pneg %p209
      %p316 = pneg %p206
      %p317 = pneg %p235
      %p318 = pneg %p232
      %s319 = smul.u32 36, %s20
      %p320 = scmp.lt.s32.totalorder %s319, 71
      %s321 = scalar_select %p320, %s319, 71
      %s322 = smul.addr %s321, 8
      %s323 = scalar_lea.vmem %s9, %s322
      %s324 = smul.u32 36, %s20
      %p325 = scmp.lt.s32.totalorder %s324, 71
      %s326 = scalar_select %p325, %s324, 71
      %s327 = smul.addr %s326, 4
      %s328 = scalar_lea.vmem %s0, %s327
      %s329 = smul.u32 36, %s20
      %s330 = smul.u32 36, %s20
      %p331 = scmp.lt.s32.totalorder %s330, 71
      %s332 = scalar_select %p331, %s330, 71
      %s333 = smul.addr %s332, 8
      %s334 = scalar_lea.vmem %s9, %s333
      %s335 = smul.u32 36, %s20
      %v337 = vld [vmem:[%s328] sm:$0xf]
      %v338 = vld [vmem:[%s328 + $0x4] sm:$0xf]
      %v339 = vld [vmem:[%s328 + $0x8] sm:$0xf]
      %v340 = vld [vmem:[%s328 + $0xc] sm:$0xf]
      %v341 = vld [vmem:[%s328 + $0x10] sm:$0xf]
      %v342 = vld [vmem:[%s328 + $0x14] sm:$0xf]
      %v343 = vld [vmem:[%s328 + $0x18] sm:$0xf]
      %v344 = vld [vmem:[%s328 + $0x1c] sm:$0xf]
      %v345 = vld [vmem:[%s328 + $0x20] sm:$0xf]
      %v346 = vld [vmem:[%s328 + $0x24] sm:$0xf]
      %v347 = vld [vmem:[%s328 + $0x28] sm:$0xf]
      %v348 = vld [vmem:[%s328 + $0x2c] sm:$0xf]
      %v349 = vld [vmem:[%s328 + $0x30] sm:$0xf]
      %v350 = vld [vmem:[%s328 + $0x34] sm:$0xf]
      %v351 = vld [vmem:[%s328 + $0x38] sm:$0xf]
      %v352 = vld [vmem:[%s328 + $0x3c] sm:$0xf]
      %v353 = vld [vmem:[%s328 + $0x40] sm:$0xf]
      %v354 = vld [vmem:[%s328 + $0x44] sm:$0xf]
      %v355 = vld [vmem:[%s328 + $0x48] sm:$0xf]
      %v356 = vld [vmem:[%s328 + $0x4c] sm:$0xf]
      %v357 = vld [vmem:[%s328 + $0x50] sm:$0xf]
      %v358 = vld [vmem:[%s328 + $0x54] sm:$0xf]
      %v359 = vld [vmem:[%s328 + $0x58] sm:$0xf]
      %v360 = vld [vmem:[%s328 + $0x5c] sm:$0xf]
      %v361 = vld [vmem:[%s328 + $0x60] sm:$0xf]
      %v362 = vld [vmem:[%s328 + $0x64] sm:$0xf]
      %v363 = vld [vmem:[%s328 + $0x68] sm:$0xf]
      %v364 = vld [vmem:[%s328 + $0x6c] sm:$0xf]
      %v365 = vld [vmem:[%s328 + $0x70] sm:$0xf]
      %v366 = vld [vmem:[%s328 + $0x74] sm:$0xf]
      %v367 = vld [vmem:[%s328 + $0x78] sm:$0xf]
      %v368 = vld [vmem:[%s328 + $0x7c] sm:$0xf]
      %v369 = vld [vmem:[%s328 + $0x80] sm:$0xf]
      %v370 = vld [vmem:[%s328 + $0x84] sm:$0xf]
      %v371 = vld [vmem:[%s328 + $0x88] sm:$0xf]
      %v372 = vld [vmem:[%s328 + $0x8c] sm:$0xf]
      %v373 = vld [vmem:[%s1] sm:$0xf]
      %v374 = vld [vmem:[%s1 + $0x4] sm:$0xf]
      %v375 = vld [vmem:[%s1 + $0x8] sm:$0xf]
      %v376 = vld [vmem:[%s1 + $0xc] sm:$0xf]
      %v377 = vld [vmem:[%s1 + $0x10] sm:$0xf]
      %v378 = vld [vmem:[%s1 + $0x14] sm:$0xf]
      %v379 = vld [vmem:[%s1 + $0x18] sm:$0xf]
      %v380 = vld [vmem:[%s1 + $0x1c] sm:$0xf]
      %v381 = vld [vmem:[%s1 + $0x20] sm:$0xf]
      %v382 = vld [vmem:[%s2] sm:$0x1]
      %v384 = vlaneseq
      %v385 = vshrl.u32 %v384, 7
      %v386 = vsub.s32 0, %v385
      %v387 = vrot.slane %v382, %v386
      %v425 = vunpack.c.l.b16 %v337
      %v426 = vunpack.c.l.b16 %v338
      %v427 = vunpack.c.l.b16 %v339
      %v428 = vunpack.c.l.b16 %v340
      %v429 = vunpack.c.l.b16 %v341
      %v430 = vunpack.c.l.b16 %v342
      %v431 = vunpack.c.l.b16 %v343
      %v432 = vunpack.c.l.b16 %v344
      %v433 = vunpack.c.l.b16 %v345
      %v434 = vunpack.c.l.b16 %v346
      %v435 = vunpack.c.l.b16 %v347
      %v436 = vunpack.c.l.b16 %v348
      %v437 = vunpack.c.l.b16 %v349
      %v438 = vunpack.c.l.b16 %v350
      %v439 = vunpack.c.l.b16 %v351
      %v440 = vunpack.c.l.b16 %v352
      %v441 = vunpack.c.l.b16 %v353
      %v442 = vunpack.c.l.b16 %v354
      %v443 = vunpack.c.l.b16 %v355
      %v444 = vunpack.c.l.b16 %v356
      %v445 = vunpack.c.l.b16 %v357
      %v446 = vunpack.c.l.b16 %v358
      %v447 = vunpack.c.l.b16 %v359
      %v448 = vunpack.c.l.b16 %v360
      %v449 = vunpack.c.l.b16 %v361
      %v450 = vunpack.c.l.b16 %v362
      %v451 = vunpack.c.l.b16 %v363
      %v452 = vunpack.c.l.b16 %v364
      %v453 = vunpack.c.l.b16 %v365
      %v454 = vunpack.c.l.b16 %v366
      %v455 = vunpack.c.l.b16 %v367
      %v456 = vunpack.c.l.b16 %v368
      %v457 = vunpack.c.l.b16 %v369
      %v458 = vunpack.c.l.b16 %v370
      %v459 = vunpack.c.l.b16 %v371
      %v460 = vunpack.c.l.b16 %v372
      %v461 = vpack.c.b16 %v426, %v425
      %v462 = vpack.c.b16 %v428, %v427
      %v463 = vpack.c.b16 %v430, %v429
      %v464 = vpack.c.b16 %v432, %v431
      %v465 = vpack.c.b16 %v434, %v433
      %v466 = vpack.c.b16 %v436, %v435
      %v467 = vpack.c.b16 %v438, %v437
      %v468 = vpack.c.b16 %v440, %v439
      %v469 = vpack.c.b16 %v442, %v441
      %v470 = vpack.c.b16 %v444, %v443
      %v471 = vpack.c.b16 %v446, %v445
      %v472 = vpack.c.b16 %v448, %v447
      %v473 = vpack.c.b16 %v450, %v449
      %v474 = vpack.c.b16 %v452, %v451
      %v475 = vpack.c.b16 %v454, %v453
      %v476 = vpack.c.b16 %v456, %v455
      %v477 = vpack.c.b16 %v458, %v457
      %v478 = vpack.c.b16 %v460, %v459
      %v488 = vunpack.c.l.b16 %v373
      %v489 = vunpack.c.l.b16 %v374
      %v490 = vunpack.c.l.b16 %v375
      %v491 = vunpack.c.l.b16 %v376
      %v492 = vunpack.c.l.b16 %v377
      %v493 = vunpack.c.l.b16 %v378
      %v494 = vunpack.c.l.b16 %v379
      %v495 = vunpack.c.l.b16 %v380
      %v496 = vunpack.c.l.b16 %v381
      %v497 = vpack.c.b16 %v489, %v488
      %v498 = vpack.c.b16 %v491, %v490
      %v499 = vpack.c.b16 %v493, %v492
      %v500 = vpack.c.b16 %v495, %v494
      %v501 = vpack.c.b16 %v496, %v496
      %vm506 = vcmask 588800
      %v508 = vsel %vm506, %v461, 0
      %v511 = vsel %vm506, %v462, 0
      %v514 = vsel %vm506, %v463, 0
      %v517 = vsel %vm506, %v464, 0
      %v520 = vsel %vm506, %v465, 0
      %v523 = vsel %vm506, %v466, 0
      %v526 = vsel %vm506, %v467, 0
      %v529 = vsel %vm506, %v468, 0
      %v532 = vsel %vm506, %v469, 0
      %v535 = vsel %vm506, %v470, 0
      %v538 = vsel %vm506, %v471, 0
      %v541 = vsel %vm506, %v472, 0
      %v544 = vsel %vm506, %v473, 0
      %v547 = vsel %vm506, %v474, 0
      %v550 = vsel %vm506, %v475, 0
      %v553 = vsel %vm506, %v476, 0
      %v556 = vsel %vm506, %v477, 0
      %v559 = vsel %vm506, %v478, 0
      %vm561 = vcmask 1043456
      %v563 = vsel %vm561, %v501, 0
      %565 = vmatprep.subr.bf16.mxu0 0
      %566 = vmatpush1.bf16.msra.mxu0 %v497
      %567 = vmatprep.subr.bf16.mxu0 0
      %568 = vmatpush1.bf16.msra.mxu0 %v498
      %569 = vmatprep.subr.bf16.mxu0 0
      %570 = vmatpush1.bf16.msra.mxu0 %v499
      %571 = vmatprep.subr.bf16.mxu0 0
      %572 = vmatpush1.bf16.msra.mxu0 %v500
      %573 = vmatprep.subr.bf16.mxu0 0
      %574 = vmatpush1.bf16.msra.mxu0 %v563
      %575 = vmatprep.subr.bf16.mxu0 0
      %576 = vmatpush1.bf16.msra.mxu0 0
      %577 = vmatprep.subr.bf16.mxu0 0
      %578 = vmatpush1.bf16.msra.mxu0 0
      %579 = vmatprep.subr.bf16.mxu0 0
      %580 = vmatpush1.bf16.msra.mxu0 0
      %581 = vmatprep.subr.bf16.mxu0 0
      %582 = vmatpush1.bf16.msra.mxu0 0
      %583 = vmatprep.subr.bf16.mxu0 0
      %584 = vmatpush1.bf16.msra.mxu0 0
      %585 = vmatprep.subr.bf16.mxu0 0
      %586 = vmatpush1.bf16.msra.mxu0 0
      %587 = vmatprep.subr.bf16.mxu0 0
      %588 = vmatpush1.bf16.msra.mxu0 0
      %589 = vmatprep.subr.bf16.mxu0 0
      %590 = vmatpush1.bf16.msra.mxu0 0
      %591 = vmatprep.subr.bf16.mxu0 0
      %592 = vmatpush1.bf16.msra.mxu0 0
      %593 = vmatprep.subr.bf16.mxu0 0
      %594 = vmatpush1.bf16.msra.mxu0 0
      %595 = vmatprep.subr.bf16.mxu0 0
      %596 = vmatpush1.bf16.msra.mxu0 0
      %597 = vmatprep.mubr.bf16.mxu0 0
      %598 = vmatmul.mubr.bf16.gmra.mrb[0].mxu0 %v508
      %v599 = vpop.f32.mrb[0].mxu0
      %v600 = vadd.f32 %v387, %v599
      %v601 = vpop.f32.mrb[0].mxu0
      %v602 = vpop.f32.mrb[0].mxu0
      %v603 = vadd.f32 %v387, %v602
      %v604 = vpop.f32.mrb[0].mxu0
      %605 = vmatprep.mubr.bf16.mxu0 0
      %606 = vmatmul.mubr.bf16.gmra.mrb[0].mxu0 %v511
      %v607 = vpop.f32.mrb[0].mxu0
      %v608 = vadd.f32 %v387, %v607
      %v609 = vpop.f32.mrb[0].mxu0
      %v610 = vpop.f32.mrb[0].mxu0
      %v611 = vadd.f32 %v387, %v610
      %v612 = vpop.f32.mrb[0].mxu0
      %613 = vmatprep.mubr.bf16.mxu0 0
      %614 = vmatmul.mubr.bf16.gmra.mrb[0].mxu0 %v514
      %v615 = vpop.f32.mrb[0].mxu0
      %v616 = vadd.f32 %v387, %v615
      %v617 = vpop.f32.mrb[0].mxu0
      %v618 = vpop.f32.mrb[0].mxu0
      %v619 = vadd.f32 %v387, %v618
      %v620 = vpop.f32.mrb[0].mxu0
      %621 = vmatprep.mubr.bf16.mxu0 0
      %622 = vmatmul.mubr.bf16.gmra.mrb[0].mxu0 %v517
      %v623 = vpop.f32.mrb[0].mxu0
      %v624 = vadd.f32 %v387, %v623
      %v625 = vpop.f32.mrb[0].mxu0
      %v626 = vpop.f32.mrb[0].mxu0
      %v627 = vadd.f32 %v387, %v626
      %v628 = vpop.f32.mrb[0].mxu0
      %629 = vmatprep.mubr.bf16.mxu0 0
      %630 = vmatmul.mubr.bf16.gmra.mrb[0].mxu0 %v520
      %v631 = vpop.f32.mrb[0].mxu0
      %v632 = vadd.f32 %v387, %v631
      %v633 = vpop.f32.mrb[0].mxu0
      %v634 = vpop.f32.mrb[0].mxu0
      %v635 = vadd.f32 %v387, %v634
      %v636 = vpop.f32.mrb[0].mxu0
      %637 = vmatprep.mubr.bf16.mxu0 0
      %638 = vmatmul.mubr.bf16.gmra.mrb[0].mxu0 %v523
      %v639 = vpop.f32.mrb[0].mxu0
      %v640 = vadd.f32 %v387, %v639
      %v641 = vpop.f32.mrb[0].mxu0
      %v642 = vpop.f32.mrb[0].mxu0
      %v643 = vadd.f32 %v387, %v642
      %v644 = vpop.f32.mrb[0].mxu0
      %645 = vmatprep.mubr.bf16.mxu0 0
      %646 = vmatmul.mubr.bf16.gmra.mrb[0].mxu0 %v526
      %v647 = vpop.f32.mrb[0].mxu0
      %v648 = vadd.f32 %v387, %v647
      %v649 = vpop.f32.mrb[0].mxu0
      %v650 = vpop.f32.mrb[0].mxu0
      %v651 = vadd.f32 %v387, %v650
      %v652 = vpop.f32.mrb[0].mxu0
      %653 = vmatprep.mubr.bf16.mxu0 0
      %654 = vmatmul.mubr.bf16.gmra.mrb[0].mxu0 %v529
      %v655 = vpop.f32.mrb[0].mxu0
      %v656 = vadd.f32 %v387, %v655
      %v657 = vpop.f32.mrb[0].mxu0
      %v658 = vpop.f32.mrb[0].mxu0
      %v659 = vadd.f32 %v387, %v658
      %v660 = vpop.f32.mrb[0].mxu0
      %661 = vmatprep.mubr.bf16.mxu0 0
      %662 = vmatmul.mubr.bf16.gmra.mrb[0].mxu0 %v532
      %v663 = vpop.f32.mrb[0].mxu0
      %v664 = vadd.f32 %v387, %v663
      %v665 = vpop.f32.mrb[0].mxu0
      %v666 = vpop.f32.mrb[0].mxu0
      %v667 = vadd.f32 %v387, %v666
      %v668 = vpop.f32.mrb[0].mxu0
      %669 = vmatprep.mubr.bf16.mxu0 0
      %670 = vmatmul.mubr.bf16.gmra.mrb[0].mxu0 %v535
      %v671 = vpop.f32.mrb[0].mxu0
      %v672 = vadd.f32 %v387, %v671
      %v673 = vpop.f32.mrb[0].mxu0
      %v674 = vpop.f32.mrb[0].mxu0
      %v675 = vadd.f32 %v387, %v674
      %v676 = vpop.f32.mrb[0].mxu0
      %677 = vmatprep.mubr.bf16.mxu0 0
      %678 = vmatmul.mubr.bf16.gmra.mrb[0].mxu0 %v538
      %v679 = vpop.f32.mrb[0].mxu0
      %v680 = vadd.f32 %v387, %v679
      %v681 = vpop.f32.mrb[0].mxu0
      %v682 = vpop.f32.mrb[0].mxu0
      %v683 = vadd.f32 %v387, %v682
      %v684 = vpop.f32.mrb[0].mxu0
      %685 = vmatprep.mubr.bf16.mxu0 0
      %686 = vmatmul.mubr.bf16.gmra.mrb[0].mxu0 %v541
      %v687 = vpop.f32.mrb[0].mxu0
      %v688 = vadd.f32 %v387, %v687
      %v689 = vpop.f32.mrb[0].mxu0
      %v690 = vpop.f32.mrb[0].mxu0
      %v691 = vadd.f32 %v387, %v690
      %v692 = vpop.f32.mrb[0].mxu0
      %693 = vmatprep.mubr.bf16.mxu0 0
      %694 = vmatmul.mubr.bf16.gmra.mrb[0].mxu0 %v544
      %v695 = vpop.f32.mrb[0].mxu0
      %v696 = vadd.f32 %v387, %v695
      %v697 = vpop.f32.mrb[0].mxu0
      %v698 = vpop.f32.mrb[0].mxu0
      %v699 = vadd.f32 %v387, %v698
      %v700 = vpop.f32.mrb[0].mxu0
      %701 = vmatprep.mubr.bf16.mxu0 0
      %702 = vmatmul.mubr.bf16.gmra.mrb[0].mxu0 %v547
      %v703 = vpop.f32.mrb[0].mxu0
      %v704 = vadd.f32 %v387, %v703
      %v705 = vpop.f32.mrb[0].mxu0
      %v706 = vpop.f32.mrb[0].mxu0
      %v707 = vadd.f32 %v387, %v706
      %v708 = vpop.f32.mrb[0].mxu0
      %709 = vmatprep.mubr.bf16.mxu0 0
      %710 = vmatmul.mubr.bf16.gmra.mrb[0].mxu0 %v550
      %v711 = vpop.f32.mrb[0].mxu0
      %v712 = vadd.f32 %v387, %v711
      %v713 = vpop.f32.mrb[0].mxu0
      %v714 = vpop.f32.mrb[0].mxu0
      %v715 = vadd.f32 %v387, %v714
      %v716 = vpop.f32.mrb[0].mxu0
      %717 = vmatprep.mubr.bf16.mxu0 0
      %718 = vmatmul.mubr.bf16.gmra.mrb[0].mxu0 %v553
      %v719 = vpop.f32.mrb[0].mxu0
      %v720 = vadd.f32 %v387, %v719
      %v721 = vpop.f32.mrb[0].mxu0
      %v722 = vpop.f32.mrb[0].mxu0
      %v723 = vadd.f32 %v387, %v722
      %v724 = vpop.f32.mrb[0].mxu0
      %725 = vmatprep.mubr.bf16.mxu0 0
      %726 = vmatmul.mubr.bf16.gmra.mrb[0].mxu0 %v556
      %v727 = vpop.f32.mrb[0].mxu0
      %v728 = vadd.f32 %v387, %v727
      %v729 = vpop.f32.mrb[0].mxu0
      %v730 = vpop.f32.mrb[0].mxu0
      %v731 = vadd.f32 %v387, %v730
      %v732 = vpop.f32.mrb[0].mxu0
      %733 = vmatprep.mubr.bf16.mxu0 0
      %734 = vmatmul.mubr.bf16.gmra.mrb[0].mxu0 %v559
      %v735 = vpop.f32.mrb[0].mxu0
      %v736 = vadd.f32 %v387, %v735
      %v737 = vpop.f32.mrb[0].mxu0
      %v738 = vpop.f32.mrb[0].mxu0
      %v739 = vadd.f32 %v387, %v738
      %v740 = vpop.f32.mrb[0].mxu0
      %741 = vdwg.mxu0
      %v742 = vmul.f32 %v600, 100.0
      %v743 = vmul.f32 %v603, 100.0
      %v744 = vmul.f32 %v608, 100.0
      %v745 = vmul.f32 %v611, 100.0
      %v746 = vmul.f32 %v616, 100.0
      %v747 = vmul.f32 %v619, 100.0
      %v748 = vmul.f32 %v624, 100.0
      %v749 = vmul.f32 %v627, 100.0
      %v750 = vmul.f32 %v632, 100.0
      %v751 = vmul.f32 %v635, 100.0
      %v752 = vmul.f32 %v640, 100.0
      %v753 = vmul.f32 %v643, 100.0
      %v754 = vmul.f32 %v648, 100.0
      %v755 = vmul.f32 %v651, 100.0
      %v756 = vmul.f32 %v656, 100.0
      %v757 = vmul.f32 %v659, 100.0
      %v758 = vmul.f32 %v664, 100.0
      %v759 = vmul.f32 %v667, 100.0
      %v760 = vmul.f32 %v672, 100.0
      %v761 = vmul.f32 %v675, 100.0
      %v762 = vmul.f32 %v680, 100.0
      %v763 = vmul.f32 %v683, 100.0
      %v764 = vmul.f32 %v688, 100.0
      %v765 = vmul.f32 %v691, 100.0
      %v766 = vmul.f32 %v696, 100.0
      %v767 = vmul.f32 %v699, 100.0
      %v768 = vmul.f32 %v704, 100.0
      %v769 = vmul.f32 %v707, 100.0
      %v770 = vmul.f32 %v712, 100.0
      %v771 = vmul.f32 %v715, 100.0
      %v772 = vmul.f32 %v720, 100.0
      %v773 = vmul.f32 %v723, 100.0
      %v774 = vmul.f32 %v728, 100.0
      %v775 = vmul.f32 %v731, 100.0
      %v776 = vmul.f32 %v736, 100.0
      %v777 = vmul.f32 %v739, 100.0
      %v778 = vand.u32 2147483647, %v742
      %v779 = vand.u32 2147483647, %v743
      %v780 = vand.u32 2147483647, %v744
      %v781 = vand.u32 2147483647, %v745
      %v782 = vand.u32 2147483647, %v746
      %v783 = vand.u32 2147483647, %v747
      %v784 = vand.u32 2147483647, %v748
      %v785 = vand.u32 2147483647, %v749
      %v786 = vand.u32 2147483647, %v750
      %v787 = vand.u32 2147483647, %v751
      %v788 = vand.u32 2147483647, %v752
      %v789 = vand.u32 2147483647, %v753
      %v790 = vand.u32 2147483647, %v754
      %v791 = vand.u32 2147483647, %v755
      %v792 = vand.u32 2147483647, %v756
      %v793 = vand.u32 2147483647, %v757
      %v794 = vand.u32 2147483647, %v758
      %v795 = vand.u32 2147483647, %v759
      %v796 = vand.u32 2147483647, %v760
      %v797 = vand.u32 2147483647, %v761
      %v798 = vand.u32 2147483647, %v762
      %v799 = vand.u32 2147483647, %v763
      %v800 = vand.u32 2147483647, %v764
      %v801 = vand.u32 2147483647, %v765
      %v802 = vand.u32 2147483647, %v766
      %v803 = vand.u32 2147483647, %v767
      %v804 = vand.u32 2147483647, %v768
      %v805 = vand.u32 2147483647, %v769
      %v806 = vand.u32 2147483647, %v770
      %v807 = vand.u32 2147483647, %v771
      %v808 = vand.u32 2147483647, %v772
      %v809 = vand.u32 2147483647, %v773
      %v810 = vand.u32 2147483647, %v774
      %v811 = vand.u32 2147483647, %v775
      %v812 = vand.u32 2147483647, %v776
      %v813 = vand.u32 2147483647, %v777
      %v814 = vsub.f32 0.0, %v778
      %v815 = vsub.f32 0.0, %v779
      %v816 = vsub.f32 0.0, %v780
      %v817 = vsub.f32 0.0, %v781
      %v818 = vsub.f32 0.0, %v782
      %v819 = vsub.f32 0.0, %v783
      %v820 = vsub.f32 0.0, %v784
      %v821 = vsub.f32 0.0, %v785
      %v822 = vsub.f32 0.0, %v786
      %v823 = vsub.f32 0.0, %v787
      %v824 = vsub.f32 0.0, %v788
      %v825 = vsub.f32 0.0, %v789
      %v826 = vsub.f32 0.0, %v790
      %v827 = vsub.f32 0.0, %v791
      %v828 = vsub.f32 0.0, %v792
      %v829 = vsub.f32 0.0, %v793
      %v830 = vsub.f32 0.0, %v794
      %v831 = vsub.f32 0.0, %v795
      %v832 = vsub.f32 0.0, %v796
      %v833 = vsub.f32 0.0, %v797
      %v834 = vsub.f32 0.0, %v798
      %v835 = vsub.f32 0.0, %v799
      %v836 = vsub.f32 0.0, %v800
      %v837 = vsub.f32 0.0, %v801
      %v838 = vsub.f32 0.0, %v802
      %v839 = vsub.f32 0.0, %v803
      %v840 = vsub.f32 0.0, %v804
      %v841 = vsub.f32 0.0, %v805
      %v842 = vsub.f32 0.0, %v806
      %v843 = vsub.f32 0.0, %v807
      %v844 = vsub.f32 0.0, %v808
      %v845 = vsub.f32 0.0, %v809
      %v846 = vsub.f32 0.0, %v810
      %v847 = vsub.f32 0.0, %v811
      %v848 = vsub.f32 0.0, %v812
      %v849 = vsub.f32 0.0, %v813
      %v850 = vmul.f32 %v814, 1.442695
      %v851 = vpow.pop %v850
      %v852 = vmul.f32 %v815, 1.442695
      %v853 = vpow.pop %v852
      %v854 = vmul.f32 %v816, 1.442695
      %v855 = vpow.pop %v854
      %v856 = vmul.f32 %v817, 1.442695
      %v857 = vpow.pop %v856
      %v858 = vmul.f32 %v818, 1.442695
      %v859 = vpow.pop %v858
      %v860 = vmul.f32 %v819, 1.442695
      %v861 = vpow.pop %v860
      %v862 = vmul.f32 %v820, 1.442695
      %v863 = vpow.pop %v862
      %v864 = vmul.f32 %v821, 1.442695
      %v865 = vpow.pop %v864
      %v866 = vmul.f32 %v822, 1.442695
      %v867 = vpow.pop %v866
      %v868 = vmul.f32 %v823, 1.442695
      %v869 = vpow.pop %v868
      %v870 = vmul.f32 %v824, 1.442695
      %v871 = vpow.pop %v870
      %v872 = vmul.f32 %v825, 1.442695
      %v873 = vpow.pop %v872
      %v874 = vmul.f32 %v826, 1.442695
      %v875 = vpow.pop %v874
      %v876 = vmul.f32 %v827, 1.442695
      %v877 = vpow.pop %v876
      %v878 = vmul.f32 %v828, 1.442695
      %v879 = vpow.pop %v878
      %v880 = vmul.f32 %v829, 1.442695
      %v881 = vpow.pop %v880
      %v882 = vmul.f32 %v830, 1.442695
      %v883 = vpow.pop %v882
      %v884 = vmul.f32 %v831, 1.442695
      %v885 = vpow.pop %v884
      %v886 = vmul.f32 %v832, 1.442695
      %v887 = vpow.pop %v886
      %v888 = vmul.f32 %v833, 1.442695
      %v889 = vpow.pop %v888
      %v890 = vmul.f32 %v834, 1.442695
      %v891 = vpow.pop %v890
      %v892 = vmul.f32 %v835, 1.442695
      %v893 = vpow.pop %v892
      %v894 = vmul.f32 %v836, 1.442695
      %v895 = vpow.pop %v894
      %v896 = vmul.f32 %v837, 1.442695
      %v897 = vpow.pop %v896
      %v898 = vmul.f32 %v838, 1.442695
      %v899 = vpow.pop %v898
      %v900 = vmul.f32 %v839, 1.442695
      %v901 = vpow.pop %v900
      %v902 = vmul.f32 %v840, 1.442695
      %v903 = vpow.pop %v902
      %v904 = vmul.f32 %v841, 1.442695
      %v905 = vpow.pop %v904
      %v906 = vmul.f32 %v842, 1.442695
      %v907 = vpow.pop %v906
      %v908 = vmul.f32 %v843, 1.442695
      %v909 = vpow.pop %v908
      %v910 = vmul.f32 %v844, 1.442695
      %v911 = vpow.pop %v910
      %v912 = vmul.f32 %v845, 1.442695
      %v913 = vpow.pop %v912
      %v914 = vmul.f32 %v846, 1.442695
      %v915 = vpow.pop %v914
      %v916 = vmul.f32 %v847, 1.442695
      %v917 = vpow.pop %v916
      %v918 = vmul.f32 %v848, 1.442695
      %v919 = vpow.pop %v918
      %v920 = vmul.f32 %v849, 1.442695
      %v921 = vpow.pop %v920
      %v922 = vmax.f32 %v742, 0.0
      %v923 = vmax.f32 %v743, 0.0
      %v924 = vmax.f32 %v744, 0.0
      %v925 = vmax.f32 %v745, 0.0
      %v926 = vmax.f32 %v746, 0.0
      %v927 = vmax.f32 %v747, 0.0
      %v928 = vmax.f32 %v748, 0.0
      %v929 = vmax.f32 %v749, 0.0
      %v930 = vmax.f32 %v750, 0.0
      %v931 = vmax.f32 %v751, 0.0
      %v932 = vmax.f32 %v752, 0.0
      %v933 = vmax.f32 %v753, 0.0
      %v934 = vmax.f32 %v754, 0.0
      %v935 = vmax.f32 %v755, 0.0
      %v936 = vmax.f32 %v756, 0.0
      %v937 = vmax.f32 %v757, 0.0
      %v938 = vmax.f32 %v758, 0.0
      %v939 = vmax.f32 %v759, 0.0
      %v940 = vmax.f32 %v760, 0.0
      %v941 = vmax.f32 %v761, 0.0
      %v942 = vmax.f32 %v762, 0.0
      %v943 = vmax.f32 %v763, 0.0
      %v944 = vmax.f32 %v764, 0.0
      %v945 = vmax.f32 %v765, 0.0
      %v946 = vmax.f32 %v766, 0.0
      %v947 = vmax.f32 %v767, 0.0
      %v948 = vmax.f32 %v768, 0.0
      %v949 = vmax.f32 %v769, 0.0
      %v950 = vmax.f32 %v770, 0.0
      %v951 = vmax.f32 %v771, 0.0
      %v952 = vmax.f32 %v772, 0.0
      %v953 = vmax.f32 %v773, 0.0
      %v954 = vmax.f32 %v774, 0.0
      %v955 = vmax.f32 %v775, 0.0
      %v956 = vmax.f32 %v776, 0.0
      %v957 = vmax.f32 %v777, 0.0
      %v958 = vadd.f32 %v851, 1.0
      %v959 = vlog2.pop %v958
      %v960 = vmul.f32 %v959, 0.6931472
      %v961 = vmul.f32 -0.5, %v851
      %v962 = vadd.f32 %v961, 1.0
      %v963 = vmul.f32 %v962, %v851
      %v964 = vand.u32 2147483647, %v851
      %vm965 = vcmp.lt.f32.partialorder %v964, 0.0004427343
      %v966 = vsel %vm965, %v963, %v960
      %v967 = vadd.f32 %v853, 1.0
      %v968 = vlog2.pop %v967
      %v969 = vmul.f32 %v968, 0.6931472
      %v970 = vmul.f32 -0.5, %v853
      %v971 = vadd.f32 %v970, 1.0
      %v972 = vmul.f32 %v971, %v853
      %v973 = vand.u32 2147483647, %v853
      %vm974 = vcmp.lt.f32.partialorder %v973, 0.0004427343
      %v975 = vsel %vm974, %v972, %v969
      %v976 = vadd.f32 %v855, 1.0
      %v977 = vlog2.pop %v976
      %v978 = vmul.f32 %v977, 0.6931472
      %v979 = vmul.f32 -0.5, %v855
      %v980 = vadd.f32 %v979, 1.0
      %v981 = vmul.f32 %v980, %v855
      %v982 = vand.u32 2147483647, %v855
      %vm983 = vcmp.lt.f32.partialorder %v982, 0.0004427343
      %v984 = vsel %vm983, %v981, %v978
      %v985 = vadd.f32 %v857, 1.0
      %v986 = vlog2.pop %v985
      %v987 = vmul.f32 %v986, 0.6931472
      %v988 = vmul.f32 -0.5, %v857
      %v989 = vadd.f32 %v988, 1.0
      %v990 = vmul.f32 %v989, %v857
      %v991 = vand.u32 2147483647, %v857
      %vm992 = vcmp.lt.f32.partialorder %v991, 0.0004427343
      %v993 = vsel %vm992, %v990, %v987
      %v994 = vadd.f32 %v859, 1.0
      %v995 = vlog2.pop %v994
      %v996 = vmul.f32 %v995, 0.6931472
      %v997 = vmul.f32 -0.5, %v859
      %v998 = vadd.f32 %v997, 1.0
      %v999 = vmul.f32 %v998, %v859
      %v1000 = vand.u32 2147483647, %v859
      %vm1001 = vcmp.lt.f32.partialorder %v1000, 0.0004427343
      %v1002 = vsel %vm1001, %v999, %v996
      %v1003 = vadd.f32 %v861, 1.0
      %v1004 = vlog2.pop %v1003
      %v1005 = vmul.f32 %v1004, 0.6931472
      %v1006 = vmul.f32 -0.5, %v861
      %v1007 = vadd.f32 %v1006, 1.0
      %v1008 = vmul.f32 %v1007, %v861
      %v1009 = vand.u32 2147483647, %v861
      %vm1010 = vcmp.lt.f32.partialorder %v1009, 0.0004427343
      %v1011 = vsel %vm1010, %v1008, %v1005
      %v1012 = vadd.f32 %v863, 1.0
      %v1013 = vlog2.pop %v1012
      %v1014 = vmul.f32 %v1013, 0.6931472
      %v1015 = vmul.f32 -0.5, %v863
      %v1016 = vadd.f32 %v1015, 1.0
      %v1017 = vmul.f32 %v1016, %v863
      %v1018 = vand.u32 2147483647, %v863
      %vm1019 = vcmp.lt.f32.partialorder %v1018, 0.0004427343
      %v1020 = vsel %vm1019, %v1017, %v1014
      %v1021 = vadd.f32 %v865, 1.0
      %v1022 = vlog2.pop %v1021
      %v1023 = vmul.f32 %v1022, 0.6931472
      %v1024 = vmul.f32 -0.5, %v865
      %v1025 = vadd.f32 %v1024, 1.0
      %v1026 = vmul.f32 %v1025, %v865
      %v1027 = vand.u32 2147483647, %v865
      %vm1028 = vcmp.lt.f32.partialorder %v1027, 0.0004427343
      %v1029 = vsel %vm1028, %v1026, %v1023
      %v1030 = vadd.f32 %v867, 1.0
      %v1031 = vlog2.pop %v1030
      %v1032 = vmul.f32 %v1031, 0.6931472
      %v1033 = vmul.f32 -0.5, %v867
      %v1034 = vadd.f32 %v1033, 1.0
      %v1035 = vmul.f32 %v1034, %v867
      %v1036 = vand.u32 2147483647, %v867
      %vm1037 = vcmp.lt.f32.partialorder %v1036, 0.0004427343
      %v1038 = vsel %vm1037, %v1035, %v1032
      %v1039 = vadd.f32 %v869, 1.0
      %v1040 = vlog2.pop %v1039
      %v1041 = vmul.f32 %v1040, 0.6931472
      %v1042 = vmul.f32 -0.5, %v869
      %v1043 = vadd.f32 %v1042, 1.0
      %v1044 = vmul.f32 %v1043, %v869
      %v1045 = vand.u32 2147483647, %v869
      %vm1046 = vcmp.lt.f32.partialorder %v1045, 0.0004427343
      %v1047 = vsel %vm1046, %v1044, %v1041
      %v1048 = vadd.f32 %v871, 1.0
      %v1049 = vlog2.pop %v1048
      %v1050 = vmul.f32 %v1049, 0.6931472
      %v1051 = vmul.f32 -0.5, %v871
      %v1052 = vadd.f32 %v1051, 1.0
      %v1053 = vmul.f32 %v1052, %v871
      %v1054 = vand.u32 2147483647, %v871
      %vm1055 = vcmp.lt.f32.partialorder %v1054, 0.0004427343
      %v1056 = vsel %vm1055, %v1053, %v1050
      %v1057 = vadd.f32 %v873, 1.0
      %v1058 = vlog2.pop %v1057
      %v1059 = vmul.f32 %v1058, 0.6931472
      %v1060 = vmul.f32 -0.5, %v873
      %v1061 = vadd.f32 %v1060, 1.0
      %v1062 = vmul.f32 %v1061, %v873
      %v1063 = vand.u32 2147483647, %v873
      %vm1064 = vcmp.lt.f32.partialorder %v1063, 0.0004427343
      %v1065 = vsel %vm1064, %v1062, %v1059
      %v1066 = vadd.f32 %v875, 1.0
      %v1067 = vlog2.pop %v1066
      %v1068 = vmul.f32 %v1067, 0.6931472
      %v1069 = vmul.f32 -0.5, %v875
      %v1070 = vadd.f32 %v1069, 1.0
      %v1071 = vmul.f32 %v1070, %v875
      %v1072 = vand.u32 2147483647, %v875
      %vm1073 = vcmp.lt.f32.partialorder %v1072, 0.0004427343
      %v1074 = vsel %vm1073, %v1071, %v1068
      %v1075 = vadd.f32 %v877, 1.0
      %v1076 = vlog2.pop %v1075
      %v1077 = vmul.f32 %v1076, 0.6931472
      %v1078 = vmul.f32 -0.5, %v877
      %v1079 = vadd.f32 %v1078, 1.0
      %v1080 = vmul.f32 %v1079, %v877
      %v1081 = vand.u32 2147483647, %v877
      %vm1082 = vcmp.lt.f32.partialorder %v1081, 0.0004427343
      %v1083 = vsel %vm1082, %v1080, %v1077
      %v1084 = vadd.f32 %v879, 1.0
      %v1085 = vlog2.pop %v1084
      %v1086 = vmul.f32 %v1085, 0.6931472
      %v1087 = vmul.f32 -0.5, %v879
      %v1088 = vadd.f32 %v1087, 1.0
      %v1089 = vmul.f32 %v1088, %v879
      %v1090 = vand.u32 2147483647, %v879
      %vm1091 = vcmp.lt.f32.partialorder %v1090, 0.0004427343
      %v1092 = vsel %vm1091, %v1089, %v1086
      %v1093 = vadd.f32 %v881, 1.0
      %v1094 = vlog2.pop %v1093
      %v1095 = vmul.f32 %v1094, 0.6931472
      %v1096 = vmul.f32 -0.5, %v881
      %v1097 = vadd.f32 %v1096, 1.0
      %v1098 = vmul.f32 %v1097, %v881
      %v1099 = vand.u32 2147483647, %v881
      %vm1100 = vcmp.lt.f32.partialorder %v1099, 0.0004427343
      %v1101 = vsel %vm1100, %v1098, %v1095
      %v1102 = vadd.f32 %v883, 1.0
      %v1103 = vlog2.pop %v1102
      %v1104 = vmul.f32 %v1103, 0.6931472
      %v1105 = vmul.f32 -0.5, %v883
      %v1106 = vadd.f32 %v1105, 1.0
      %v1107 = vmul.f32 %v1106, %v883
      %v1108 = vand.u32 2147483647, %v883
      %vm1109 = vcmp.lt.f32.partialorder %v1108, 0.0004427343
      %v1110 = vsel %vm1109, %v1107, %v1104
      %v1111 = vadd.f32 %v885, 1.0
      %v1112 = vlog2.pop %v1111
      %v1113 = vmul.f32 %v1112, 0.6931472
      %v1114 = vmul.f32 -0.5, %v885
      %v1115 = vadd.f32 %v1114, 1.0
      %v1116 = vmul.f32 %v1115, %v885
      %v1117 = vand.u32 2147483647, %v885
      %vm1118 = vcmp.lt.f32.partialorder %v1117, 0.0004427343
      %v1119 = vsel %vm1118, %v1116, %v1113
      %v1120 = vadd.f32 %v887, 1.0
      %v1121 = vlog2.pop %v1120
      %v1122 = vmul.f32 %v1121, 0.6931472
      %v1123 = vmul.f32 -0.5, %v887
      %v1124 = vadd.f32 %v1123, 1.0
      %v1125 = vmul.f32 %v1124, %v887
      %v1126 = vand.u32 2147483647, %v887
      %vm1127 = vcmp.lt.f32.partialorder %v1126, 0.0004427343
      %v1128 = vsel %vm1127, %v1125, %v1122
      %v1129 = vadd.f32 %v889, 1.0
      %v1130 = vlog2.pop %v1129
      %v1131 = vmul.f32 %v1130, 0.6931472
      %v1132 = vmul.f32 -0.5, %v889
      %v1133 = vadd.f32 %v1132, 1.0
      %v1134 = vmul.f32 %v1133, %v889
      %v1135 = vand.u32 2147483647, %v889
      %vm1136 = vcmp.lt.f32.partialorder %v1135, 0.0004427343
      %v1137 = vsel %vm1136, %v1134, %v1131
      %v1138 = vadd.f32 %v891, 1.0
      %v1139 = vlog2.pop %v1138
      %v1140 = vmul.f32 %v1139, 0.6931472
      %v1141 = vmul.f32 -0.5, %v891
      %v1142 = vadd.f32 %v1141, 1.0
      %v1143 = vmul.f32 %v1142, %v891
      %v1144 = vand.u32 2147483647, %v891
      %vm1145 = vcmp.lt.f32.partialorder %v1144, 0.0004427343
      %v1146 = vsel %vm1145, %v1143, %v1140
      %v1147 = vadd.f32 %v893, 1.0
      %v1148 = vlog2.pop %v1147
      %v1149 = vmul.f32 %v1148, 0.6931472
      %v1150 = vmul.f32 -0.5, %v893
      %v1151 = vadd.f32 %v1150, 1.0
      %v1152 = vmul.f32 %v1151, %v893
      %v1153 = vand.u32 2147483647, %v893
      %vm1154 = vcmp.lt.f32.partialorder %v1153, 0.0004427343
      %v1155 = vsel %vm1154, %v1152, %v1149
      %v1156 = vadd.f32 %v895, 1.0
      %v1157 = vlog2.pop %v1156
      %v1158 = vmul.f32 %v1157, 0.6931472
      %v1159 = vmul.f32 -0.5, %v895
      %v1160 = vadd.f32 %v1159, 1.0
      %v1161 = vmul.f32 %v1160, %v895
      %v1162 = vand.u32 2147483647, %v895
      %vm1163 = vcmp.lt.f32.partialorder %v1162, 0.0004427343
      %v1164 = vsel %vm1163, %v1161, %v1158
      %v1165 = vadd.f32 %v897, 1.0
      %v1166 = vlog2.pop %v1165
      %v1167 = vmul.f32 %v1166, 0.6931472
      %v1168 = vmul.f32 -0.5, %v897
      %v1169 = vadd.f32 %v1168, 1.0
      %v1170 = vmul.f32 %v1169, %v897
      %v1171 = vand.u32 2147483647, %v897
      %vm1172 = vcmp.lt.f32.partialorder %v1171, 0.0004427343
      %v1173 = vsel %vm1172, %v1170, %v1167
      %v1174 = vadd.f32 %v899, 1.0
      %v1175 = vlog2.pop %v1174
      %v1176 = vmul.f32 %v1175, 0.6931472
      %v1177 = vmul.f32 -0.5, %v899
      %v1178 = vadd.f32 %v1177, 1.0
      %v1179 = vmul.f32 %v1178, %v899
      %v1180 = vand.u32 2147483647, %v899
      %vm1181 = vcmp.lt.f32.partialorder %v1180, 0.0004427343
      %v1182 = vsel %vm1181, %v1179, %v1176
      %v1183 = vadd.f32 %v901, 1.0
      %v1184 = vlog2.pop %v1183
      %v1185 = vmul.f32 %v1184, 0.6931472
      %v1186 = vmul.f32 -0.5, %v901
      %v1187 = vadd.f32 %v1186, 1.0
      %v1188 = vmul.f32 %v1187, %v901
      %v1189 = vand.u32 2147483647, %v901
      %vm1190 = vcmp.lt.f32.partialorder %v1189, 0.0004427343
      %v1191 = vsel %vm1190, %v1188, %v1185
      %v1192 = vadd.f32 %v903, 1.0
      %v1193 = vlog2.pop %v1192
      %v1194 = vmul.f32 %v1193, 0.6931472
      %v1195 = vmul.f32 -0.5, %v903
      %v1196 = vadd.f32 %v1195, 1.0
      %v1197 = vmul.f32 %v1196, %v903
      %v1198 = vand.u32 2147483647, %v903
      %vm1199 = vcmp.lt.f32.partialorder %v1198, 0.0004427343
      %v1200 = vsel %vm1199, %v1197, %v1194
      %v1201 = vadd.f32 %v905, 1.0
      %v1202 = vlog2.pop %v1201
      %v1203 = vmul.f32 %v1202, 0.6931472
      %v1204 = vmul.f32 -0.5, %v905
      %v1205 = vadd.f32 %v1204, 1.0
      %v1206 = vmul.f32 %v1205, %v905
      %v1207 = vand.u32 2147483647, %v905
      %vm1208 = vcmp.lt.f32.partialorder %v1207, 0.0004427343
      %v1209 = vsel %vm1208, %v1206, %v1203
      %v1210 = vadd.f32 %v907, 1.0
      %v1211 = vlog2.pop %v1210
      %v1212 = vmul.f32 %v1211, 0.6931472
      %v1213 = vmul.f32 -0.5, %v907
      %v1214 = vadd.f32 %v1213, 1.0
      %v1215 = vmul.f32 %v1214, %v907
      %v1216 = vand.u32 2147483647, %v907
      %vm1217 = vcmp.lt.f32.partialorder %v1216, 0.0004427343
      %v1218 = vsel %vm1217, %v1215, %v1212
      %v1219 = vadd.f32 %v909, 1.0
      %v1220 = vlog2.pop %v1219
      %v1221 = vmul.f32 %v1220, 0.6931472
      %v1222 = vmul.f32 -0.5, %v909
      %v1223 = vadd.f32 %v1222, 1.0
      %v1224 = vmul.f32 %v1223, %v909
      %v1225 = vand.u32 2147483647, %v909
      %vm1226 = vcmp.lt.f32.partialorder %v1225, 0.0004427343
      %v1227 = vsel %vm1226, %v1224, %v1221
      %v1228 = vadd.f32 %v911, 1.0
      %v1229 = vlog2.pop %v1228
      %v1230 = vmul.f32 %v1229, 0.6931472
      %v1231 = vmul.f32 -0.5, %v911
      %v1232 = vadd.f32 %v1231, 1.0
      %v1233 = vmul.f32 %v1232, %v911
      %v1234 = vand.u32 2147483647, %v911
      %vm1235 = vcmp.lt.f32.partialorder %v1234, 0.0004427343
      %v1236 = vsel %vm1235, %v1233, %v1230
      %v1237 = vadd.f32 %v913, 1.0
      %v1238 = vlog2.pop %v1237
      %v1239 = vmul.f32 %v1238, 0.6931472
      %v1240 = vmul.f32 -0.5, %v913
      %v1241 = vadd.f32 %v1240, 1.0
      %v1242 = vmul.f32 %v1241, %v913
      %v1243 = vand.u32 2147483647, %v913
      %vm1244 = vcmp.lt.f32.partialorder %v1243, 0.0004427343
      %v1245 = vsel %vm1244, %v1242, %v1239
      %v1246 = vadd.f32 %v915, 1.0
      %v1247 = vlog2.pop %v1246
      %v1248 = vmul.f32 %v1247, 0.6931472
      %v1249 = vmul.f32 -0.5, %v915
      %v1250 = vadd.f32 %v1249, 1.0
      %v1251 = vmul.f32 %v1250, %v915
      %v1252 = vand.u32 2147483647, %v915
      %vm1253 = vcmp.lt.f32.partialorder %v1252, 0.0004427343
      %v1254 = vsel %vm1253, %v1251, %v1248
      %v1255 = vadd.f32 %v917, 1.0
      %v1256 = vlog2.pop %v1255
      %v1257 = vmul.f32 %v1256, 0.6931472
      %v1258 = vmul.f32 -0.5, %v917
      %v1259 = vadd.f32 %v1258, 1.0
      %v1260 = vmul.f32 %v1259, %v917
      %v1261 = vand.u32 2147483647, %v917
      %vm1262 = vcmp.lt.f32.partialorder %v1261, 0.0004427343
      %v1263 = vsel %vm1262, %v1260, %v1257
      %v1264 = vadd.f32 %v919, 1.0
      %v1265 = vlog2.pop %v1264
      %v1266 = vmul.f32 %v1265, 0.6931472
      %v1267 = vmul.f32 -0.5, %v919
      %v1268 = vadd.f32 %v1267, 1.0
      %v1269 = vmul.f32 %v1268, %v919
      %v1270 = vand.u32 2147483647, %v919
      %vm1271 = vcmp.lt.f32.partialorder %v1270, 0.0004427343
      %v1272 = vsel %vm1271, %v1269, %v1266
      %v1273 = vadd.f32 %v921, 1.0
      %v1274 = vlog2.pop %v1273
      %v1275 = vmul.f32 %v1274, 0.6931472
      %v1276 = vmul.f32 -0.5, %v921
      %v1277 = vadd.f32 %v1276, 1.0
      %v1278 = vmul.f32 %v1277, %v921
      %v1279 = vand.u32 2147483647, %v921
      %vm1280 = vcmp.lt.f32.partialorder %v1279, 0.0004427343
      %v1281 = vsel %vm1280, %v1278, %v1275
      %v1282 = vadd.f32 %v922, %v966
      %v1283 = vadd.f32 %v923, %v975
      %v1284 = vadd.f32 %v924, %v984
      %v1285 = vadd.f32 %v925, %v993
      %v1286 = vadd.f32 %v926, %v1002
      %v1287 = vadd.f32 %v927, %v1011
      %v1288 = vadd.f32 %v928, %v1020
      %v1289 = vadd.f32 %v929, %v1029
      %v1290 = vadd.f32 %v930, %v1038
      %v1291 = vadd.f32 %v931, %v1047
      %v1292 = vadd.f32 %v932, %v1056
      %v1293 = vadd.f32 %v933, %v1065
      %v1294 = vadd.f32 %v934, %v1074
      %v1295 = vadd.f32 %v935, %v1083
      %v1296 = vadd.f32 %v936, %v1092
      %v1297 = vadd.f32 %v937, %v1101
      %v1298 = vadd.f32 %v938, %v1110
      %v1299 = vadd.f32 %v939, %v1119
      %v1300 = vadd.f32 %v940, %v1128
      %v1301 = vadd.f32 %v941, %v1137
      %v1302 = vadd.f32 %v942, %v1146
      %v1303 = vadd.f32 %v943, %v1155
      %v1304 = vadd.f32 %v944, %v1164
      %v1305 = vadd.f32 %v945, %v1173
      %v1306 = vadd.f32 %v946, %v1182
      %v1307 = vadd.f32 %v947, %v1191
      %v1308 = vadd.f32 %v948, %v1200
      %v1309 = vadd.f32 %v949, %v1209
      %v1310 = vadd.f32 %v950, %v1218
      %v1311 = vadd.f32 %v951, %v1227
      %v1312 = vadd.f32 %v952, %v1236
      %v1313 = vadd.f32 %v953, %v1245
      %v1314 = vadd.f32 %v954, %v1254
      %v1315 = vadd.f32 %v955, %v1263
      %v1316 = vadd.f32 %v956, %v1272
      %v1317 = vadd.f32 %v957, %v1281
      %v1318 = vrcp.pop 100.0
      %v1319 = vmul.f32 %v1282, %v1318
      %v1320 = vmul.f32 %v1283, %v1318
      %v1321 = vmul.f32 %v1284, %v1318
      %v1322 = vmul.f32 %v1285, %v1318
      %v1323 = vmul.f32 %v1286, %v1318
      %v1324 = vmul.f32 %v1287, %v1318
      %v1325 = vmul.f32 %v1288, %v1318
      %v1326 = vmul.f32 %v1289, %v1318
      %v1327 = vmul.f32 %v1290, %v1318
      %v1328 = vmul.f32 %v1291, %v1318
      %v1329 = vmul.f32 %v1292, %v1318
      %v1330 = vmul.f32 %v1293, %v1318
      %v1331 = vmul.f32 %v1294, %v1318
      %v1332 = vmul.f32 %v1295, %v1318
      %v1333 = vmul.f32 %v1296, %v1318
      %v1334 = vmul.f32 %v1297, %v1318
      %v1335 = vmul.f32 %v1298, %v1318
      %v1336 = vmul.f32 %v1299, %v1318
      %v1337 = vmul.f32 %v1300, %v1318
      %v1338 = vmul.f32 %v1301, %v1318
      %v1339 = vmul.f32 %v1302, %v1318
      %v1340 = vmul.f32 %v1303, %v1318
      %v1341 = vmul.f32 %v1304, %v1318
      %v1342 = vmul.f32 %v1305, %v1318
      %v1343 = vmul.f32 %v1306, %v1318
      %v1344 = vmul.f32 %v1307, %v1318
      %v1345 = vmul.f32 %v1308, %v1318
      %v1346 = vmul.f32 %v1309, %v1318
      %v1347 = vmul.f32 %v1310, %v1318
      %v1348 = vmul.f32 %v1311, %v1318
      %v1349 = vmul.f32 %v1312, %v1318
      %v1350 = vmul.f32 %v1313, %v1318
      %v1351 = vmul.f32 %v1314, %v1318
      %v1352 = vmul.f32 %v1315, %v1318
      %v1353 = vmul.f32 %v1316, %v1318
      %v1354 = vmul.f32 %v1317, %v1318
      %vm1355 = vcmp.ge.f32.partialorder %v742, 0.0
      %vm1356 = vcmp.ge.f32.partialorder %v743, 0.0
      %vm1357 = vcmp.ge.f32.partialorder %v744, 0.0
      %vm1358 = vcmp.ge.f32.partialorder %v745, 0.0
      %vm1359 = vcmp.ge.f32.partialorder %v746, 0.0
      %vm1360 = vcmp.ge.f32.partialorder %v747, 0.0
      %vm1361 = vcmp.ge.f32.partialorder %v748, 0.0
      %vm1362 = vcmp.ge.f32.partialorder %v749, 0.0
      %vm1363 = vcmp.ge.f32.partialorder %v750, 0.0
      %vm1364 = vcmp.ge.f32.partialorder %v751, 0.0
      %vm1365 = vcmp.ge.f32.partialorder %v752, 0.0
      %vm1366 = vcmp.ge.f32.partialorder %v753, 0.0
      %vm1367 = vcmp.ge.f32.partialorder %v754, 0.0
      %vm1368 = vcmp.ge.f32.partialorder %v755, 0.0
      %vm1369 = vcmp.ge.f32.partialorder %v756, 0.0
      %vm1370 = vcmp.ge.f32.partialorder %v757, 0.0
      %vm1371 = vcmp.ge.f32.partialorder %v758, 0.0
      %vm1372 = vcmp.ge.f32.partialorder %v759, 0.0
      %vm1373 = vcmp.ge.f32.partialorder %v760, 0.0
      %vm1374 = vcmp.ge.f32.partialorder %v761, 0.0
      %vm1375 = vcmp.ge.f32.partialorder %v762, 0.0
      %vm1376 = vcmp.ge.f32.partialorder %v763, 0.0
      %vm1377 = vcmp.ge.f32.partialorder %v764, 0.0
      %vm1378 = vcmp.ge.f32.partialorder %v765, 0.0
      %vm1379 = vcmp.ge.f32.partialorder %v766, 0.0
      %vm1380 = vcmp.ge.f32.partialorder %v767, 0.0
      %vm1381 = vcmp.ge.f32.partialorder %v768, 0.0
      %vm1382 = vcmp.ge.f32.partialorder %v769, 0.0
      %vm1383 = vcmp.ge.f32.partialorder %v770, 0.0
      %vm1384 = vcmp.ge.f32.partialorder %v771, 0.0
      %vm1385 = vcmp.ge.f32.partialorder %v772, 0.0
      %vm1386 = vcmp.ge.f32.partialorder %v773, 0.0
      %vm1387 = vcmp.ge.f32.partialorder %v774, 0.0
      %vm1388 = vcmp.ge.f32.partialorder %v775, 0.0
      %vm1389 = vcmp.ge.f32.partialorder %v776, 0.0
      %vm1390 = vcmp.ge.f32.partialorder %v777, 0.0
      %v1391 = vsel %vm1355, 1.0, %v851
      %v1392 = vsel %vm1356, 1.0, %v853
      %v1393 = vsel %vm1357, 1.0, %v855
      %v1394 = vsel %vm1358, 1.0, %v857
      %v1395 = vsel %vm1359, 1.0, %v859
      %v1396 = vsel %vm1360, 1.0, %v861
      %v1397 = vsel %vm1361, 1.0, %v863
      %v1398 = vsel %vm1362, 1.0, %v865
      %v1399 = vsel %vm1363, 1.0, %v867
      %v1400 = vsel %vm1364, 1.0, %v869
      %v1401 = vsel %vm1365, 1.0, %v871
      %v1402 = vsel %vm1366, 1.0, %v873
      %v1403 = vsel %vm1367, 1.0, %v875
      %v1404 = vsel %vm1368, 1.0, %v877
      %v1405 = vsel %vm1369, 1.0, %v879
      %v1406 = vsel %vm1370, 1.0, %v881
      %v1407 = vsel %vm1371, 1.0, %v883
      %v1408 = vsel %vm1372, 1.0, %v885
      %v1409 = vsel %vm1373, 1.0, %v887
      %v1410 = vsel %vm1374, 1.0, %v889
      %v1411 = vsel %vm1375, 1.0, %v891
      %v1412 = vsel %vm1376, 1.0, %v893
      %v1413 = vsel %vm1377, 1.0, %v895
      %v1414 = vsel %vm1378, 1.0, %v897
      %v1415 = vsel %vm1379, 1.0, %v899
      %v1416 = vsel %vm1380, 1.0, %v901
      %v1417 = vsel %vm1381, 1.0, %v903
      %v1418 = vsel %vm1382, 1.0, %v905
      %v1419 = vsel %vm1383, 1.0, %v907
      %v1420 = vsel %vm1384, 1.0, %v909
      %v1421 = vsel %vm1385, 1.0, %v911
      %v1422 = vsel %vm1386, 1.0, %v913
      %v1423 = vsel %vm1387, 1.0, %v915
      %v1424 = vsel %vm1388, 1.0, %v917
      %v1425 = vsel %vm1389, 1.0, %v919
      %v1426 = vsel %vm1390, 1.0, %v921
      %v1427 = vadd.f32 %v851, 1.0
      %v1428 = vadd.f32 %v853, 1.0
      %v1429 = vadd.f32 %v855, 1.0
      %v1430 = vadd.f32 %v857, 1.0
      %v1431 = vadd.f32 %v859, 1.0
      %v1432 = vadd.f32 %v861, 1.0
      %v1433 = vadd.f32 %v863, 1.0
      %v1434 = vadd.f32 %v865, 1.0
      %v1435 = vadd.f32 %v867, 1.0
      %v1436 = vadd.f32 %v869, 1.0
      %v1437 = vadd.f32 %v871, 1.0
      %v1438 = vadd.f32 %v873, 1.0
      %v1439 = vadd.f32 %v875, 1.0
      %v1440 = vadd.f32 %v877, 1.0
      %v1441 = vadd.f32 %v879, 1.0
      %v1442 = vadd.f32 %v881, 1.0
      %v1443 = vadd.f32 %v883, 1.0
      %v1444 = vadd.f32 %v885, 1.0
      %v1445 = vadd.f32 %v887, 1.0
      %v1446 = vadd.f32 %v889, 1.0
      %v1447 = vadd.f32 %v891, 1.0
      %v1448 = vadd.f32 %v893, 1.0
      %v1449 = vadd.f32 %v895, 1.0
      %v1450 = vadd.f32 %v897, 1.0
      %v1451 = vadd.f32 %v899, 1.0
      %v1452 = vadd.f32 %v901, 1.0
      %v1453 = vadd.f32 %v903, 1.0
      %v1454 = vadd.f32 %v905, 1.0
      %v1455 = vadd.f32 %v907, 1.0
      %v1456 = vadd.f32 %v909, 1.0
      %v1457 = vadd.f32 %v911, 1.0
      %v1458 = vadd.f32 %v913, 1.0
      %v1459 = vadd.f32 %v915, 1.0
      %v1460 = vadd.f32 %v917, 1.0
      %v1461 = vadd.f32 %v919, 1.0
      %v1462 = vadd.f32 %v921, 1.0
      %v1463 = vrcp.pop %v1427
      %v1464 = vmul.f32 %v1391, %v1463
      %v1465 = vrcp.pop %v1428
      %v1466 = vmul.f32 %v1392, %v1465
      %v1467 = vrcp.pop %v1429
      %v1468 = vmul.f32 %v1393, %v1467
      %v1469 = vrcp.pop %v1430
      %v1470 = vmul.f32 %v1394, %v1469
      %v1471 = vrcp.pop %v1431
      %v1472 = vmul.f32 %v1395, %v1471
      %v1473 = vrcp.pop %v1432
      %v1474 = vmul.f32 %v1396, %v1473
      %v1475 = vrcp.pop %v1433
      %v1476 = vmul.f32 %v1397, %v1475
      %v1477 = vrcp.pop %v1434
      %v1478 = vmul.f32 %v1398, %v1477
      %v1479 = vrcp.pop %v1435
      %v1480 = vmul.f32 %v1399, %v1479
      %v1481 = vrcp.pop %v1436
      %v1482 = vmul.f32 %v1400, %v1481
      %v1483 = vrcp.pop %v1437
      %v1484 = vmul.f32 %v1401, %v1483
      %v1485 = vrcp.pop %v1438
      %v1486 = vmul.f32 %v1402, %v1485
      %v1487 = vrcp.pop %v1439
      %v1488 = vmul.f32 %v1403, %v1487
      %v1489 = vrcp.pop %v1440
      %v1490 = vmul.f32 %v1404, %v1489
      %v1491 = vrcp.pop %v1441
      %v1492 = vmul.f32 %v1405, %v1491
      %v1493 = vrcp.pop %v1442
      %v1494 = vmul.f32 %v1406, %v1493
      %v1495 = vrcp.pop %v1443
      %v1496 = vmul.f32 %v1407, %v1495
      %v1497 = vrcp.pop %v1444
      %v1498 = vmul.f32 %v1408, %v1497
      %v1499 = vrcp.pop %v1445
      %v1500 = vmul.f32 %v1409, %v1499
      %v1501 = vrcp.pop %v1446
      %v1502 = vmul.f32 %v1410, %v1501
      %v1503 = vrcp.pop %v1447
      %v1504 = vmul.f32 %v1411, %v1503
      %v1505 = vrcp.pop %v1448
      %v1506 = vmul.f32 %v1412, %v1505
      %v1507 = vrcp.pop %v1449
      %v1508 = vmul.f32 %v1413, %v1507
      %v1509 = vrcp.pop %v1450
      %v1510 = vmul.f32 %v1414, %v1509
      %v1511 = vrcp.pop %v1451
      %v1512 = vmul.f32 %v1415, %v1511
      %v1513 = vrcp.pop %v1452
      %v1514 = vmul.f32 %v1416, %v1513
      %v1515 = vrcp.pop %v1453
      %v1516 = vmul.f32 %v1417, %v1515
      %v1517 = vrcp.pop %v1454
      %v1518 = vmul.f32 %v1418, %v1517
      %v1519 = vrcp.pop %v1455
      %v1520 = vmul.f32 %v1419, %v1519
      %v1521 = vrcp.pop %v1456
      %v1522 = vmul.f32 %v1420, %v1521
      %v1523 = vrcp.pop %v1457
      %v1524 = vmul.f32 %v1421, %v1523
      %v1525 = vrcp.pop %v1458
      %v1526 = vmul.f32 %v1422, %v1525
      %v1527 = vrcp.pop %v1459
      %v1528 = vmul.f32 %v1423, %v1527
      %v1529 = vrcp.pop %v1460
      %v1530 = vmul.f32 %v1424, %v1529
      %v1531 = vrcp.pop %v1461
      %v1532 = vmul.f32 %v1425, %v1531
      %v1533 = vrcp.pop %v1462
      %v1534 = vmul.f32 %v1426, %v1533
      %v1535 = vpack.c.bf16 %v1320, %v1319
      %v1536 = vpack.c.bf16 %v1322, %v1321
      %v1537 = vpack.c.bf16 %v1324, %v1323
      %v1538 = vpack.c.bf16 %v1326, %v1325
      %v1539 = vpack.c.bf16 %v1328, %v1327
      %v1540 = vpack.c.bf16 %v1330, %v1329
      %v1541 = vpack.c.bf16 %v1332, %v1331
      %v1542 = vpack.c.bf16 %v1334, %v1333
      %v1543 = vpack.c.bf16 %v1336, %v1335
      %v1544 = vpack.c.bf16 %v1338, %v1337
      %v1545 = vpack.c.bf16 %v1340, %v1339
      %v1546 = vpack.c.bf16 %v1342, %v1341
      %v1547 = vpack.c.bf16 %v1344, %v1343
      %v1548 = vpack.c.bf16 %v1346, %v1345
      %v1549 = vpack.c.bf16 %v1348, %v1347
      %v1550 = vpack.c.bf16 %v1350, %v1349
      %v1551 = vpack.c.bf16 %v1352, %v1351
      %v1552 = vpack.c.bf16 %v1354, %v1353
      %v1553 = vld [vmem:[%s3] sm:$0xf]
      %v1554 = vld [vmem:[%s3 + $0x4] sm:$0xf]
      %v1555 = vld [vmem:[%s3 + $0x8] sm:$0xf]
      %v1556 = vld [vmem:[%s3 + $0xc] sm:$0xf]
      %v1557 = vld [vmem:[%s3 + $0x10] sm:$0xf]
      %v1558 = vld [vmem:[%s3 + $0x14] sm:$0xf]
      %v1559 = vld [vmem:[%s3 + $0x18] sm:$0xf]
      %v1560 = vld [vmem:[%s3 + $0x1c] sm:$0xf]
      %v1561 = vld [vmem:[%s4] sm:$0x1]
      %v1563 = vlaneseq
      %v1564 = vshrl.u32 %v1563, 7
      %v1565 = vsub.s32 0, %v1564
      %v1566 = vrot.slane %v1561, %v1565
      %v1576 = vunpack.c.l.b16 %v1553
      %v1577 = vunpack.c.l.b16 %v1554
      %v1578 = vunpack.c.l.b16 %v1555
      %v1579 = vunpack.c.l.b16 %v1556
      %v1580 = vunpack.c.l.b16 %v1557
      %v1581 = vunpack.c.l.b16 %v1558
      %v1582 = vunpack.c.l.b16 %v1559
      %v1583 = vunpack.c.l.b16 %v1560
      %v1584 = vpack.c.b16 %v1577, %v1576
      %v1585 = vpack.c.b16 %v1579, %v1578
      %v1586 = vpack.c.b16 %v1581, %v1580
      %v1587 = vpack.c.b16 %v1583, %v1582
      %vm1592 = vcmask 523264
      %v1594 = vsel %vm1592, %v1535, 0
      %v1597 = vsel %vm1592, %v1536, 0
      %v1600 = vsel %vm1592, %v1537, 0
      %v1603 = vsel %vm1592, %v1538, 0
      %v1606 = vsel %vm1592, %v1539, 0
      %v1609 = vsel %vm1592, %v1540, 0
      %v1612 = vsel %vm1592, %v1541, 0
      %v1615 = vsel %vm1592, %v1542, 0
      %v1618 = vsel %vm1592, %v1543, 0
      %v1621 = vsel %vm1592, %v1544, 0
      %v1624 = vsel %vm1592, %v1545, 0
      %v1627 = vsel %vm1592, %v1546, 0
      %v1630 = vsel %vm1592, %v1547, 0
      %v1633 = vsel %vm1592, %v1548, 0
      %v1636 = vsel %vm1592, %v1549, 0
      %v1639 = vsel %vm1592, %v1550, 0
      %v1642 = vsel %vm1592, %v1551, 0
      %v1645 = vsel %vm1592, %v1552, 0
      %1647 = vmatprep.subr.bf16.mxu0 0
      %1648 = vmatpush1.bf16.msra.mxu0 %v1584
      %1649 = vmatprep.subr.bf16.mxu0 0
      %1650 = vmatpush1.bf16.msra.mxu0 %v1585
      %1651 = vmatprep.subr.bf16.mxu0 0
      %1652 = vmatpush1.bf16.msra.mxu0 %v1586
      %1653 = vmatprep.subr.bf16.mxu0 0
      %1654 = vmatpush1.bf16.msra.mxu0 %v1587
      %1655 = vmatprep.subr.bf16.mxu0 0
      %1656 = vmatpush1.bf16.msra.mxu0 0
      %1657 = vmatprep.subr.bf16.mxu0 0
      %1658 = vmatpush1.bf16.msra.mxu0 0
      %1659 = vmatprep.subr.bf16.mxu0 0
      %1660 = vmatpush1.bf16.msra.mxu0 0
      %1661 = vmatprep.subr.bf16.mxu0 0
      %1662 = vmatpush1.bf16.msra.mxu0 0
      %1663 = vmatprep.subr.bf16.mxu0 0
      %1664 = vmatpush1.bf16.msra.mxu0 0
      %1665 = vmatprep.subr.bf16.mxu0 0
      %1666 = vmatpush1.bf16.msra.mxu0 0
      %1667 = vmatprep.subr.bf16.mxu0 0
      %1668 = vmatpush1.bf16.msra.mxu0 0
      %1669 = vmatprep.subr.bf16.mxu0 0
      %1670 = vmatpush1.bf16.msra.mxu0 0
      %1671 = vmatprep.subr.bf16.mxu0 0
      %1672 = vmatpush1.bf16.msra.mxu0 0
      %1673 = vmatprep.subr.bf16.mxu0 0
      %1674 = vmatpush1.bf16.msra.mxu0 0
      %1675 = vmatprep.subr.bf16.mxu0 0
      %1676 = vmatpush1.bf16.msra.mxu0 0
      %1677 = vmatprep.subr.bf16.mxu0 0
      %1678 = vmatpush1.bf16.msra.mxu0 0
      %1679 = vmatprep.mubr.bf16.mxu0 0
      %1680 = vmatmul.mubr.bf16.gmra.mrb[0].mxu0 %v1594
      %v1681 = vpop.f32.mrb[0].mxu0
      %v1682 = vadd.f32 %v1566, %v1681
      %v1683 = vpop.f32.mrb[0].mxu0
      %v1684 = vpop.f32.mrb[0].mxu0
      %v1685 = vadd.f32 %v1566, %v1684
      %v1686 = vpop.f32.mrb[0].mxu0
      %1687 = vmatprep.mubr.bf16.mxu0 0
      %1688 = vmatmul.mubr.bf16.gmra.mrb[0].mxu0 %v1597
      %v1689 = vpop.f32.mrb[0].mxu0
      %v1690 = vadd.f32 %v1566, %v1689
      %v1691 = vpop.f32.mrb[0].mxu0
      %v1692 = vpop.f32.mrb[0].mxu0
      %v1693 = vadd.f32 %v1566, %v1692
      %v1694 = vpop.f32.mrb[0].mxu0
      %1695 = vmatprep.mubr.bf16.mxu0 0
      %1696 = vmatmul.mubr.bf16.gmra.mrb[0].mxu0 %v1600
      %v1697 = vpop.f32.mrb[0].mxu0
      %v1698 = vadd.f32 %v1566, %v1697
      %v1699 = vpop.f32.mrb[0].mxu0
      %v1700 = vpop.f32.mrb[0].mxu0
      %v1701 = vadd.f32 %v1566, %v1700
      %v1702 = vpop.f32.mrb[0].mxu0
      %1703 = vmatprep.mubr.bf16.mxu0 0
      %1704 = vmatmul.mubr.bf16.gmra.mrb[0].mxu0 %v1603
      %v1705 = vpop.f32.mrb[0].mxu0
      %v1706 = vadd.f32 %v1566, %v1705
      %v1707 = vpop.f32.mrb[0].mxu0
      %v1708 = vpop.f32.mrb[0].mxu0
      %v1709 = vadd.f32 %v1566, %v1708
      %v1710 = vpop.f32.mrb[0].mxu0
      %1711 = vmatprep.mubr.bf16.mxu0 0
      %1712 = vmatmul.mubr.bf16.gmra.mrb[0].mxu0 %v1606
      %v1713 = vpop.f32.mrb[0].mxu0
      %v1714 = vadd.f32 %v1566, %v1713
      %v1715 = vpop.f32.mrb[0].mxu0
      %v1716 = vpop.f32.mrb[0].mxu0
      %v1717 = vadd.f32 %v1566, %v1716
      %v1718 = vpop.f32.mrb[0].mxu0
      %1719 = vmatprep.mubr.bf16.mxu0 0
      %1720 = vmatmul.mubr.bf16.gmra.mrb[0].mxu0 %v1609
      %v1721 = vpop.f32.mrb[0].mxu0
      %v1722 = vadd.f32 %v1566, %v1721
      %v1723 = vpop.f32.mrb[0].mxu0
      %v1724 = vpop.f32.mrb[0].mxu0
      %v1725 = vadd.f32 %v1566, %v1724
      %v1726 = vpop.f32.mrb[0].mxu0
      %1727 = vmatprep.mubr.bf16.mxu0 0
      %1728 = vmatmul.mubr.bf16.gmra.mrb[0].mxu0 %v1612
      %v1729 = vpop.f32.mrb[0].mxu0
      %v1730 = vadd.f32 %v1566, %v1729
      %v1731 = vpop.f32.mrb[0].mxu0
      %v1732 = vpop.f32.mrb[0].mxu0
      %v1733 = vadd.f32 %v1566, %v1732
      %v1734 = vpop.f32.mrb[0].mxu0
      %1735 = vmatprep.mubr.bf16.mxu0 0
      %1736 = vmatmul.mubr.bf16.gmra.mrb[0].mxu0 %v1615
      %v1737 = vpop.f32.mrb[0].mxu0
      %v1738 = vadd.f32 %v1566, %v1737
      %v1739 = vpop.f32.mrb[0].mxu0
      %v1740 = vpop.f32.mrb[0].mxu0
      %v1741 = vadd.f32 %v1566, %v1740
      %v1742 = vpop.f32.mrb[0].mxu0
      %1743 = vmatprep.mubr.bf16.mxu0 0
      %1744 = vmatmul.mubr.bf16.gmra.mrb[0].mxu0 %v1618
      %v1745 = vpop.f32.mrb[0].mxu0
      %v1746 = vadd.f32 %v1566, %v1745
      %v1747 = vpop.f32.mrb[0].mxu0
      %v1748 = vpop.f32.mrb[0].mxu0
      %v1749 = vadd.f32 %v1566, %v1748
      %v1750 = vpop.f32.mrb[0].mxu0
      %1751 = vmatprep.mubr.bf16.mxu0 0
      %1752 = vmatmul.mubr.bf16.gmra.mrb[0].mxu0 %v1621
      %v1753 = vpop.f32.mrb[0].mxu0
      %v1754 = vadd.f32 %v1566, %v1753
      %v1755 = vpop.f32.mrb[0].mxu0
      %v1756 = vpop.f32.mrb[0].mxu0
      %v1757 = vadd.f32 %v1566, %v1756
      %v1758 = vpop.f32.mrb[0].mxu0
      %1759 = vmatprep.mubr.bf16.mxu0 0
      %1760 = vmatmul.mubr.bf16.gmra.mrb[0].mxu0 %v1624
      %v1761 = vpop.f32.mrb[0].mxu0
      %v1762 = vadd.f32 %v1566, %v1761
      %v1763 = vpop.f32.mrb[0].mxu0
      %v1764 = vpop.f32.mrb[0].mxu0
      %v1765 = vadd.f32 %v1566, %v1764
      %v1766 = vpop.f32.mrb[0].mxu0
      %1767 = vmatprep.mubr.bf16.mxu0 0
      %1768 = vmatmul.mubr.bf16.gmra.mrb[0].mxu0 %v1627
      %v1769 = vpop.f32.mrb[0].mxu0
      %v1770 = vadd.f32 %v1566, %v1769
      %v1771 = vpop.f32.mrb[0].mxu0
      %v1772 = vpop.f32.mrb[0].mxu0
      %v1773 = vadd.f32 %v1566, %v1772
      %v1774 = vpop.f32.mrb[0].mxu0
      %1775 = vmatprep.mubr.bf16.mxu0 0
      %1776 = vmatmul.mubr.bf16.gmra.mrb[0].mxu0 %v1630
      %v1777 = vpop.f32.mrb[0].mxu0
      %v1778 = vadd.f32 %v1566, %v1777
      %v1779 = vpop.f32.mrb[0].mxu0
      %v1780 = vpop.f32.mrb[0].mxu0
      %v1781 = vadd.f32 %v1566, %v1780
      %v1782 = vpop.f32.mrb[0].mxu0
      %1783 = vmatprep.mubr.bf16.mxu0 0
      %1784 = vmatmul.mubr.bf16.gmra.mrb[0].mxu0 %v1633
      %v1785 = vpop.f32.mrb[0].mxu0
      %v1786 = vadd.f32 %v1566, %v1785
      %v1787 = vpop.f32.mrb[0].mxu0
      %v1788 = vpop.f32.mrb[0].mxu0
      %v1789 = vadd.f32 %v1566, %v1788
      %v1790 = vpop.f32.mrb[0].mxu0
      %1791 = vmatprep.mubr.bf16.mxu0 0
      %1792 = vmatmul.mubr.bf16.gmra.mrb[0].mxu0 %v1636
      %v1793 = vpop.f32.mrb[0].mxu0
      %v1794 = vadd.f32 %v1566, %v1793
      %v1795 = vpop.f32.mrb[0].mxu0
      %v1796 = vpop.f32.mrb[0].mxu0
      %v1797 = vadd.f32 %v1566, %v1796
      %v1798 = vpop.f32.mrb[0].mxu0
      %1799 = vmatprep.mubr.bf16.mxu0 0
      %1800 = vmatmul.mubr.bf16.gmra.mrb[0].mxu0 %v1639
      %v1801 = vpop.f32.mrb[0].mxu0
      %v1802 = vadd.f32 %v1566, %v1801
      %v1803 = vpop.f32.mrb[0].mxu0
      %v1804 = vpop.f32.mrb[0].mxu0
      %v1805 = vadd.f32 %v1566, %v1804
      %v1806 = vpop.f32.mrb[0].mxu0
      %1807 = vmatprep.mubr.bf16.mxu0 0
      %1808 = vmatmul.mubr.bf16.gmra.mrb[0].mxu0 %v1642
      %v1809 = vpop.f32.mrb[0].mxu0
      %v1810 = vadd.f32 %v1566, %v1809
      %v1811 = vpop.f32.mrb[0].mxu0
      %v1812 = vpop.f32.mrb[0].mxu0
      %v1813 = vadd.f32 %v1566, %v1812
      %v1814 = vpop.f32.mrb[0].mxu0
      %1815 = vmatprep.mubr.bf16.mxu0 0
      %1816 = vmatmul.mubr.bf16.gmra.mrb[0].mxu0 %v1645
      %v1817 = vpop.f32.mrb[0].mxu0
      %v1818 = vadd.f32 %v1566, %v1817
      %v1819 = vpop.f32.mrb[0].mxu0
      %v1820 = vpop.f32.mrb[0].mxu0
      %v1821 = vadd.f32 %v1566, %v1820
      %v1822 = vpop.f32.mrb[0].mxu0
      %1823 = vdwg.mxu0
      %v1824 = vmul.f32 %v1682, 100.0
      %v1825 = vmul.f32 %v1685, 100.0
      %v1826 = vmul.f32 %v1690, 100.0
      %v1827 = vmul.f32 %v1693, 100.0
      %v1828 = vmul.f32 %v1698, 100.0
      %v1829 = vmul.f32 %v1701, 100.0
      %v1830 = vmul.f32 %v1706, 100.0
      %v1831 = vmul.f32 %v1709, 100.0
      %v1832 = vmul.f32 %v1714, 100.0
      %v1833 = vmul.f32 %v1717, 100.0
      %v1834 = vmul.f32 %v1722, 100.0
      %v1835 = vmul.f32 %v1725, 100.0
      %v1836 = vmul.f32 %v1730, 100.0
      %v1837 = vmul.f32 %v1733, 100.0
      %v1838 = vmul.f32 %v1738, 100.0
      %v1839 = vmul.f32 %v1741, 100.0
      %v1840 = vmul.f32 %v1746, 100.0
      %v1841 = vmul.f32 %v1749, 100.0
      %v1842 = vmul.f32 %v1754, 100.0
      %v1843 = vmul.f32 %v1757, 100.0
      %v1844 = vmul.f32 %v1762, 100.0
      %v1845 = vmul.f32 %v1765, 100.0
      %v1846 = vmul.f32 %v1770, 100.0
      %v1847 = vmul.f32 %v1773, 100.0
      %v1848 = vmul.f32 %v1778, 100.0
      %v1849 = vmul.f32 %v1781, 100.0
      %v1850 = vmul.f32 %v1786, 100.0
      %v1851 = vmul.f32 %v1789, 100.0
      %v1852 = vmul.f32 %v1794, 100.0
      %v1853 = vmul.f32 %v1797, 100.0
      %v1854 = vmul.f32 %v1802, 100.0
      %v1855 = vmul.f32 %v1805, 100.0
      %v1856 = vmul.f32 %v1810, 100.0
      %v1857 = vmul.f32 %v1813, 100.0
      %v1858 = vmul.f32 %v1818, 100.0
      %v1859 = vmul.f32 %v1821, 100.0
      %v1860 = vand.u32 2147483647, %v1824
      %v1861 = vand.u32 2147483647, %v1825
      %v1862 = vand.u32 2147483647, %v1826
      %v1863 = vand.u32 2147483647, %v1827
      %v1864 = vand.u32 2147483647, %v1828
      %v1865 = vand.u32 2147483647, %v1829
      %v1866 = vand.u32 2147483647, %v1830
      %v1867 = vand.u32 2147483647, %v1831
      %v1868 = vand.u32 2147483647, %v1832
      %v1869 = vand.u32 2147483647, %v1833
      %v1870 = vand.u32 2147483647, %v1834
      %v1871 = vand.u32 2147483647, %v1835
      %v1872 = vand.u32 2147483647, %v1836
      %v1873 = vand.u32 2147483647, %v1837
      %v1874 = vand.u32 2147483647, %v1838
      %v1875 = vand.u32 2147483647, %v1839
      %v1876 = vand.u32 2147483647, %v1840
      %v1877 = vand.u32 2147483647, %v1841
      %v1878 = vand.u32 2147483647, %v1842
      %v1879 = vand.u32 2147483647, %v1843
      %v1880 = vand.u32 2147483647, %v1844
      %v1881 = vand.u32 2147483647, %v1845
      %v1882 = vand.u32 2147483647, %v1846
      %v1883 = vand.u32 2147483647, %v1847
      %v1884 = vand.u32 2147483647, %v1848
      %v1885 = vand.u32 2147483647, %v1849
      %v1886 = vand.u32 2147483647, %v1850
      %v1887 = vand.u32 2147483647, %v1851
      %v1888 = vand.u32 2147483647, %v1852
      %v1889 = vand.u32 2147483647, %v1853
      %v1890 = vand.u32 2147483647, %v1854
      %v1891 = vand.u32 2147483647, %v1855
      %v1892 = vand.u32 2147483647, %v1856
      %v1893 = vand.u32 2147483647, %v1857
      %v1894 = vand.u32 2147483647, %v1858
      %v1895 = vand.u32 2147483647, %v1859
      %v1896 = vsub.f32 0.0, %v1860
      %v1897 = vsub.f32 0.0, %v1861
      %v1898 = vsub.f32 0.0, %v1862
      %v1899 = vsub.f32 0.0, %v1863
      %v1900 = vsub.f32 0.0, %v1864
      %v1901 = vsub.f32 0.0, %v1865
      %v1902 = vsub.f32 0.0, %v1866
      %v1903 = vsub.f32 0.0, %v1867
      %v1904 = vsub.f32 0.0, %v1868
      %v1905 = vsub.f32 0.0, %v1869
      %v1906 = vsub.f32 0.0, %v1870
      %v1907 = vsub.f32 0.0, %v1871
      %v1908 = vsub.f32 0.0, %v1872
      %v1909 = vsub.f32 0.0, %v1873
      %v1910 = vsub.f32 0.0, %v1874
      %v1911 = vsub.f32 0.0, %v1875
      %v1912 = vsub.f32 0.0, %v1876
      %v1913 = vsub.f32 0.0, %v1877
      %v1914 = vsub.f32 0.0, %v1878
      %v1915 = vsub.f32 0.0, %v1879
      %v1916 = vsub.f32 0.0, %v1880
      %v1917 = vsub.f32 0.0, %v1881
      %v1918 = vsub.f32 0.0, %v1882
      %v1919 = vsub.f32 0.0, %v1883
      %v1920 = vsub.f32 0.0, %v1884
      %v1921 = vsub.f32 0.0, %v1885
      %v1922 = vsub.f32 0.0, %v1886
      %v1923 = vsub.f32 0.0, %v1887
      %v1924 = vsub.f32 0.0, %v1888
      %v1925 = vsub.f32 0.0, %v1889
      %v1926 = vsub.f32 0.0, %v1890
      %v1927 = vsub.f32 0.0, %v1891
      %v1928 = vsub.f32 0.0, %v1892
      %v1929 = vsub.f32 0.0, %v1893
      %v1930 = vsub.f32 0.0, %v1894
      %v1931 = vsub.f32 0.0, %v1895
      %v1932 = vmul.f32 %v1896, 1.442695
      %v1933 = vpow.pop %v1932
      %v1934 = vmul.f32 %v1897, 1.442695
      %v1935 = vpow.pop %v1934
      %v1936 = vmul.f32 %v1898, 1.442695
      %v1937 = vpow.pop %v1936
      %v1938 = vmul.f32 %v1899, 1.442695
      %v1939 = vpow.pop %v1938
      %v1940 = vmul.f32 %v1900, 1.442695
      %v1941 = vpow.pop %v1940
      %v1942 = vmul.f32 %v1901, 1.442695
      %v1943 = vpow.pop %v1942
      %v1944 = vmul.f32 %v1902, 1.442695
      %v1945 = vpow.pop %v1944
      %v1946 = vmul.f32 %v1903, 1.442695
      %v1947 = vpow.pop %v1946
      %v1948 = vmul.f32 %v1904, 1.442695
      %v1949 = vpow.pop %v1948
      %v1950 = vmul.f32 %v1905, 1.442695
      %v1951 = vpow.pop %v1950
      %v1952 = vmul.f32 %v1906, 1.442695
      %v1953 = vpow.pop %v1952
      %v1954 = vmul.f32 %v1907, 1.442695
      %v1955 = vpow.pop %v1954
      %v1956 = vmul.f32 %v1908, 1.442695
      %v1957 = vpow.pop %v1956
      %v1958 = vmul.f32 %v1909, 1.442695
      %v1959 = vpow.pop %v1958
      %v1960 = vmul.f32 %v1910, 1.442695
      %v1961 = vpow.pop %v1960
      %v1962 = vmul.f32 %v1911, 1.442695
      %v1963 = vpow.pop %v1962
      %v1964 = vmul.f32 %v1912, 1.442695
      %v1965 = vpow.pop %v1964
      %v1966 = vmul.f32 %v1913, 1.442695
      %v1967 = vpow.pop %v1966
      %v1968 = vmul.f32 %v1914, 1.442695
      %v1969 = vpow.pop %v1968
      %v1970 = vmul.f32 %v1915, 1.442695
      %v1971 = vpow.pop %v1970
      %v1972 = vmul.f32 %v1916, 1.442695
      %v1973 = vpow.pop %v1972
      %v1974 = vmul.f32 %v1917, 1.442695
      %v1975 = vpow.pop %v1974
      %v1976 = vmul.f32 %v1918, 1.442695
      %v1977 = vpow.pop %v1976
      %v1978 = vmul.f32 %v1919, 1.442695
      %v1979 = vpow.pop %v1978
      %v1980 = vmul.f32 %v1920, 1.442695
      %v1981 = vpow.pop %v1980
      %v1982 = vmul.f32 %v1921, 1.442695
      %v1983 = vpow.pop %v1982
      %v1984 = vmul.f32 %v1922, 1.442695
      %v1985 = vpow.pop %v1984
      %v1986 = vmul.f32 %v1923, 1.442695
      %v1987 = vpow.pop %v1986
      %v1988 = vmul.f32 %v1924, 1.442695
      %v1989 = vpow.pop %v1988
      %v1990 = vmul.f32 %v1925, 1.442695
      %v1991 = vpow.pop %v1990
      %v1992 = vmul.f32 %v1926, 1.442695
      %v1993 = vpow.pop %v1992
      %v1994 = vmul.f32 %v1927, 1.442695
      %v1995 = vpow.pop %v1994
      %v1996 = vmul.f32 %v1928, 1.442695
      %v1997 = vpow.pop %v1996
      %v1998 = vmul.f32 %v1929, 1.442695
      %v1999 = vpow.pop %v1998
      %v2000 = vmul.f32 %v1930, 1.442695
      %v2001 = vpow.pop %v2000
      %v2002 = vmul.f32 %v1931, 1.442695
      %v2003 = vpow.pop %v2002
      %v2004 = vmax.f32 %v1824, 0.0
      %v2005 = vmax.f32 %v1825, 0.0
      %v2006 = vmax.f32 %v1826, 0.0
      %v2007 = vmax.f32 %v1827, 0.0
      %v2008 = vmax.f32 %v1828, 0.0
      %v2009 = vmax.f32 %v1829, 0.0
      %v2010 = vmax.f32 %v1830, 0.0
      %v2011 = vmax.f32 %v1831, 0.0
      %v2012 = vmax.f32 %v1832, 0.0
      %v2013 = vmax.f32 %v1833, 0.0
      %v2014 = vmax.f32 %v1834, 0.0
      %v2015 = vmax.f32 %v1835, 0.0
      %v2016 = vmax.f32 %v1836, 0.0
      %v2017 = vmax.f32 %v1837, 0.0
      %v2018 = vmax.f32 %v1838, 0.0
      %v2019 = vmax.f32 %v1839, 0.0
      %v2020 = vmax.f32 %v1840, 0.0
      %v2021 = vmax.f32 %v1841, 0.0
      %v2022 = vmax.f32 %v1842, 0.0
      %v2023 = vmax.f32 %v1843, 0.0
      %v2024 = vmax.f32 %v1844, 0.0
      %v2025 = vmax.f32 %v1845, 0.0
      %v2026 = vmax.f32 %v1846, 0.0
      %v2027 = vmax.f32 %v1847, 0.0
      %v2028 = vmax.f32 %v1848, 0.0
      %v2029 = vmax.f32 %v1849, 0.0
      %v2030 = vmax.f32 %v1850, 0.0
      %v2031 = vmax.f32 %v1851, 0.0
      %v2032 = vmax.f32 %v1852, 0.0
      %v2033 = vmax.f32 %v1853, 0.0
      %v2034 = vmax.f32 %v1854, 0.0
      %v2035 = vmax.f32 %v1855, 0.0
      %v2036 = vmax.f32 %v1856, 0.0
      %v2037 = vmax.f32 %v1857, 0.0
      %v2038 = vmax.f32 %v1858, 0.0
      %v2039 = vmax.f32 %v1859, 0.0
      %v2040 = vadd.f32 %v1933, 1.0
      %v2041 = vlog2.pop %v2040
      %v2042 = vmul.f32 %v2041, 0.6931472
      %v2043 = vmul.f32 -0.5, %v1933
      %v2044 = vadd.f32 %v2043, 1.0
      %v2045 = vmul.f32 %v2044, %v1933
      %v2046 = vand.u32 2147483647, %v1933
      %vm2047 = vcmp.lt.f32.partialorder %v2046, 0.0004427343
      %v2048 = vsel %vm2047, %v2045, %v2042
      %v2049 = vadd.f32 %v1935, 1.0
      %v2050 = vlog2.pop %v2049
      %v2051 = vmul.f32 %v2050, 0.6931472
      %v2052 = vmul.f32 -0.5, %v1935
      %v2053 = vadd.f32 %v2052, 1.0
      %v2054 = vmul.f32 %v2053, %v1935
      %v2055 = vand.u32 2147483647, %v1935
      %vm2056 = vcmp.lt.f32.partialorder %v2055, 0.0004427343
      %v2057 = vsel %vm2056, %v2054, %v2051
      %v2058 = vadd.f32 %v1937, 1.0
      %v2059 = vlog2.pop %v2058
      %v2060 = vmul.f32 %v2059, 0.6931472
      %v2061 = vmul.f32 -0.5, %v1937
      %v2062 = vadd.f32 %v2061, 1.0
      %v2063 = vmul.f32 %v2062, %v1937
      %v2064 = vand.u32 2147483647, %v1937
      %vm2065 = vcmp.lt.f32.partialorder %v2064, 0.0004427343
      %v2066 = vsel %vm2065, %v2063, %v2060
      %v2067 = vadd.f32 %v1939, 1.0
      %v2068 = vlog2.pop %v2067
      %v2069 = vmul.f32 %v2068, 0.6931472
      %v2070 = vmul.f32 -0.5, %v1939
      %v2071 = vadd.f32 %v2070, 1.0
      %v2072 = vmul.f32 %v2071, %v1939
      %v2073 = vand.u32 2147483647, %v1939
      %vm2074 = vcmp.lt.f32.partialorder %v2073, 0.0004427343
      %v2075 = vsel %vm2074, %v2072, %v2069
      %v2076 = vadd.f32 %v1941, 1.0
      %v2077 = vlog2.pop %v2076
      %v2078 = vmul.f32 %v2077, 0.6931472
      %v2079 = vmul.f32 -0.5, %v1941
      %v2080 = vadd.f32 %v2079, 1.0
      %v2081 = vmul.f32 %v2080, %v1941
      %v2082 = vand.u32 2147483647, %v1941
      %vm2083 = vcmp.lt.f32.partialorder %v2082, 0.0004427343
      %v2084 = vsel %vm2083, %v2081, %v2078
      %v2085 = vadd.f32 %v1943, 1.0
      %v2086 = vlog2.pop %v2085
      %v2087 = vmul.f32 %v2086, 0.6931472
      %v2088 = vmul.f32 -0.5, %v1943
      %v2089 = vadd.f32 %v2088, 1.0
      %v2090 = vmul.f32 %v2089, %v1943
      %v2091 = vand.u32 2147483647, %v1943
      %vm2092 = vcmp.lt.f32.partialorder %v2091, 0.0004427343
      %v2093 = vsel %vm2092, %v2090, %v2087
      %v2094 = vadd.f32 %v1945, 1.0
      %v2095 = vlog2.pop %v2094
      %v2096 = vmul.f32 %v2095, 0.6931472
      %v2097 = vmul.f32 -0.5, %v1945
      %v2098 = vadd.f32 %v2097, 1.0
      %v2099 = vmul.f32 %v2098, %v1945
      %v2100 = vand.u32 2147483647, %v1945
      %vm2101 = vcmp.lt.f32.partialorder %v2100, 0.0004427343
      %v2102 = vsel %vm2101, %v2099, %v2096
      %v2103 = vadd.f32 %v1947, 1.0
      %v2104 = vlog2.pop %v2103
      %v2105 = vmul.f32 %v2104, 0.6931472
      %v2106 = vmul.f32 -0.5, %v1947
      %v2107 = vadd.f32 %v2106, 1.0
      %v2108 = vmul.f32 %v2107, %v1947
      %v2109 = vand.u32 2147483647, %v1947
      %vm2110 = vcmp.lt.f32.partialorder %v2109, 0.0004427343
      %v2111 = vsel %vm2110, %v2108, %v2105
      %v2112 = vadd.f32 %v1949, 1.0
      %v2113 = vlog2.pop %v2112
      %v2114 = vmul.f32 %v2113, 0.6931472
      %v2115 = vmul.f32 -0.5, %v1949
      %v2116 = vadd.f32 %v2115, 1.0
      %v2117 = vmul.f32 %v2116, %v1949
      %v2118 = vand.u32 2147483647, %v1949
      %vm2119 = vcmp.lt.f32.partialorder %v2118, 0.0004427343
      %v2120 = vsel %vm2119, %v2117, %v2114
      %v2121 = vadd.f32 %v1951, 1.0
      %v2122 = vlog2.pop %v2121
      %v2123 = vmul.f32 %v2122, 0.6931472
      %v2124 = vmul.f32 -0.5, %v1951
      %v2125 = vadd.f32 %v2124, 1.0
      %v2126 = vmul.f32 %v2125, %v1951
      %v2127 = vand.u32 2147483647, %v1951
      %vm2128 = vcmp.lt.f32.partialorder %v2127, 0.0004427343
      %v2129 = vsel %vm2128, %v2126, %v2123
      %v2130 = vadd.f32 %v1953, 1.0
      %v2131 = vlog2.pop %v2130
      %v2132 = vmul.f32 %v2131, 0.6931472
      %v2133 = vmul.f32 -0.5, %v1953
      %v2134 = vadd.f32 %v2133, 1.0
      %v2135 = vmul.f32 %v2134, %v1953
      %v2136 = vand.u32 2147483647, %v1953
      %vm2137 = vcmp.lt.f32.partialorder %v2136, 0.0004427343
      %v2138 = vsel %vm2137, %v2135, %v2132
      %v2139 = vadd.f32 %v1955, 1.0
      %v2140 = vlog2.pop %v2139
      %v2141 = vmul.f32 %v2140, 0.6931472
      %v2142 = vmul.f32 -0.5, %v1955
      %v2143 = vadd.f32 %v2142, 1.0
      %v2144 = vmul.f32 %v2143, %v1955
      %v2145 = vand.u32 2147483647, %v1955
      %vm2146 = vcmp.lt.f32.partialorder %v2145, 0.0004427343
      %v2147 = vsel %vm2146, %v2144, %v2141
      %v2148 = vadd.f32 %v1957, 1.0
      %v2149 = vlog2.pop %v2148
      %v2150 = vmul.f32 %v2149, 0.6931472
      %v2151 = vmul.f32 -0.5, %v1957
      %v2152 = vadd.f32 %v2151, 1.0
      %v2153 = vmul.f32 %v2152, %v1957
      %v2154 = vand.u32 2147483647, %v1957
      %vm2155 = vcmp.lt.f32.partialorder %v2154, 0.0004427343
      %v2156 = vsel %vm2155, %v2153, %v2150
      %v2157 = vadd.f32 %v1959, 1.0
      %v2158 = vlog2.pop %v2157
      %v2159 = vmul.f32 %v2158, 0.6931472
      %v2160 = vmul.f32 -0.5, %v1959
      %v2161 = vadd.f32 %v2160, 1.0
      %v2162 = vmul.f32 %v2161, %v1959
      %v2163 = vand.u32 2147483647, %v1959
      %vm2164 = vcmp.lt.f32.partialorder %v2163, 0.0004427343
      %v2165 = vsel %vm2164, %v2162, %v2159
      %v2166 = vadd.f32 %v1961, 1.0
      %v2167 = vlog2.pop %v2166
      %v2168 = vmul.f32 %v2167, 0.6931472
      %v2169 = vmul.f32 -0.5, %v1961
      %v2170 = vadd.f32 %v2169, 1.0
      %v2171 = vmul.f32 %v2170, %v1961
      %v2172 = vand.u32 2147483647, %v1961
      %vm2173 = vcmp.lt.f32.partialorder %v2172, 0.0004427343
      %v2174 = vsel %vm2173, %v2171, %v2168
      %v2175 = vadd.f32 %v1963, 1.0
      %v2176 = vlog2.pop %v2175
      %v2177 = vmul.f32 %v2176, 0.6931472
      %v2178 = vmul.f32 -0.5, %v1963
      %v2179 = vadd.f32 %v2178, 1.0
      %v2180 = vmul.f32 %v2179, %v1963
      %v2181 = vand.u32 2147483647, %v1963
      %vm2182 = vcmp.lt.f32.partialorder %v2181, 0.0004427343
      %v2183 = vsel %vm2182, %v2180, %v2177
      %v2184 = vadd.f32 %v1965, 1.0
      %v2185 = vlog2.pop %v2184
      %v2186 = vmul.f32 %v2185, 0.6931472
      %v2187 = vmul.f32 -0.5, %v1965
      %v2188 = vadd.f32 %v2187, 1.0
      %v2189 = vmul.f32 %v2188, %v1965
      %v2190 = vand.u32 2147483647, %v1965
      %vm2191 = vcmp.lt.f32.partialorder %v2190, 0.0004427343
      %v2192 = vsel %vm2191, %v2189, %v2186
      %v2193 = vadd.f32 %v1967, 1.0
      %v2194 = vlog2.pop %v2193
      %v2195 = vmul.f32 %v2194, 0.6931472
      %v2196 = vmul.f32 -0.5, %v1967
      %v2197 = vadd.f32 %v2196, 1.0
      %v2198 = vmul.f32 %v2197, %v1967
      %v2199 = vand.u32 2147483647, %v1967
      %vm2200 = vcmp.lt.f32.partialorder %v2199, 0.0004427343
      %v2201 = vsel %vm2200, %v2198, %v2195
      %v2202 = vadd.f32 %v1969, 1.0
      %v2203 = vlog2.pop %v2202
      %v2204 = vmul.f32 %v2203, 0.6931472
      %v2205 = vmul.f32 -0.5, %v1969
      %v2206 = vadd.f32 %v2205, 1.0
      %v2207 = vmul.f32 %v2206, %v1969
      %v2208 = vand.u32 2147483647, %v1969
      %vm2209 = vcmp.lt.f32.partialorder %v2208, 0.0004427343
      %v2210 = vsel %vm2209, %v2207, %v2204
      %v2211 = vadd.f32 %v1971, 1.0
      %v2212 = vlog2.pop %v2211
      %v2213 = vmul.f32 %v2212, 0.6931472
      %v2214 = vmul.f32 -0.5, %v1971
      %v2215 = vadd.f32 %v2214, 1.0
      %v2216 = vmul.f32 %v2215, %v1971
      %v2217 = vand.u32 2147483647, %v1971
      %vm2218 = vcmp.lt.f32.partialorder %v2217, 0.0004427343
      %v2219 = vsel %vm2218, %v2216, %v2213
      %v2220 = vadd.f32 %v1973, 1.0
      %v2221 = vlog2.pop %v2220
      %v2222 = vmul.f32 %v2221, 0.6931472
      %v2223 = vmul.f32 -0.5, %v1973
      %v2224 = vadd.f32 %v2223, 1.0
      %v2225 = vmul.f32 %v2224, %v1973
      %v2226 = vand.u32 2147483647, %v1973
      %vm2227 = vcmp.lt.f32.partialorder %v2226, 0.0004427343
      %v2228 = vsel %vm2227, %v2225, %v2222
      %v2229 = vadd.f32 %v1975, 1.0
      %v2230 = vlog2.pop %v2229
      %v2231 = vmul.f32 %v2230, 0.6931472
      %v2232 = vmul.f32 -0.5, %v1975
      %v2233 = vadd.f32 %v2232, 1.0
      %v2234 = vmul.f32 %v2233, %v1975
      %v2235 = vand.u32 2147483647, %v1975
      %vm2236 = vcmp.lt.f32.partialorder %v2235, 0.0004427343
      %v2237 = vsel %vm2236, %v2234, %v2231
      %v2238 = vadd.f32 %v1977, 1.0
      %v2239 = vlog2.pop %v2238
      %v2240 = vmul.f32 %v2239, 0.6931472
      %v2241 = vmul.f32 -0.5, %v1977
      %v2242 = vadd.f32 %v2241, 1.0
      %v2243 = vmul.f32 %v2242, %v1977
      %v2244 = vand.u32 2147483647, %v1977
      %vm2245 = vcmp.lt.f32.partialorder %v2244, 0.0004427343
      %v2246 = vsel %vm2245, %v2243, %v2240
      %v2247 = vadd.f32 %v1979, 1.0
      %v2248 = vlog2.pop %v2247
      %v2249 = vmul.f32 %v2248, 0.6931472
      %v2250 = vmul.f32 -0.5, %v1979
      %v2251 = vadd.f32 %v2250, 1.0
      %v2252 = vmul.f32 %v2251, %v1979
      %v2253 = vand.u32 2147483647, %v1979
      %vm2254 = vcmp.lt.f32.partialorder %v2253, 0.0004427343
      %v2255 = vsel %vm2254, %v2252, %v2249
      %v2256 = vadd.f32 %v1981, 1.0
      %v2257 = vlog2.pop %v2256
      %v2258 = vmul.f32 %v2257, 0.6931472
      %v2259 = vmul.f32 -0.5, %v1981
      %v2260 = vadd.f32 %v2259, 1.0
      %v2261 = vmul.f32 %v2260, %v1981
      %v2262 = vand.u32 2147483647, %v1981
      %vm2263 = vcmp.lt.f32.partialorder %v2262, 0.0004427343
      %v2264 = vsel %vm2263, %v2261, %v2258
      %v2265 = vadd.f32 %v1983, 1.0
      %v2266 = vlog2.pop %v2265
      %v2267 = vmul.f32 %v2266, 0.6931472
      %v2268 = vmul.f32 -0.5, %v1983
      %v2269 = vadd.f32 %v2268, 1.0
      %v2270 = vmul.f32 %v2269, %v1983
      %v2271 = vand.u32 2147483647, %v1983
      %vm2272 = vcmp.lt.f32.partialorder %v2271, 0.0004427343
      %v2273 = vsel %vm2272, %v2270, %v2267
      %v2274 = vadd.f32 %v1985, 1.0
      %v2275 = vlog2.pop %v2274
      %v2276 = vmul.f32 %v2275, 0.6931472
      %v2277 = vmul.f32 -0.5, %v1985
      %v2278 = vadd.f32 %v2277, 1.0
      %v2279 = vmul.f32 %v2278, %v1985
      %v2280 = vand.u32 2147483647, %v1985
      %vm2281 = vcmp.lt.f32.partialorder %v2280, 0.0004427343
      %v2282 = vsel %vm2281, %v2279, %v2276
      %v2283 = vadd.f32 %v1987, 1.0
      %v2284 = vlog2.pop %v2283
      %v2285 = vmul.f32 %v2284, 0.6931472
      %v2286 = vmul.f32 -0.5, %v1987
      %v2287 = vadd.f32 %v2286, 1.0
      %v2288 = vmul.f32 %v2287, %v1987
      %v2289 = vand.u32 2147483647, %v1987
      %vm2290 = vcmp.lt.f32.partialorder %v2289, 0.0004427343
      %v2291 = vsel %vm2290, %v2288, %v2285
      %v2292 = vadd.f32 %v1989, 1.0
      %v2293 = vlog2.pop %v2292
      %v2294 = vmul.f32 %v2293, 0.6931472
      %v2295 = vmul.f32 -0.5, %v1989
      %v2296 = vadd.f32 %v2295, 1.0
      %v2297 = vmul.f32 %v2296, %v1989
      %v2298 = vand.u32 2147483647, %v1989
      %vm2299 = vcmp.lt.f32.partialorder %v2298, 0.0004427343
      %v2300 = vsel %vm2299, %v2297, %v2294
      %v2301 = vadd.f32 %v1991, 1.0
      %v2302 = vlog2.pop %v2301
      %v2303 = vmul.f32 %v2302, 0.6931472
      %v2304 = vmul.f32 -0.5, %v1991
      %v2305 = vadd.f32 %v2304, 1.0
      %v2306 = vmul.f32 %v2305, %v1991
      %v2307 = vand.u32 2147483647, %v1991
      %vm2308 = vcmp.lt.f32.partialorder %v2307, 0.0004427343
      %v2309 = vsel %vm2308, %v2306, %v2303
      %v2310 = vadd.f32 %v1993, 1.0
      %v2311 = vlog2.pop %v2310
      %v2312 = vmul.f32 %v2311, 0.6931472
      %v2313 = vmul.f32 -0.5, %v1993
      %v2314 = vadd.f32 %v2313, 1.0
      %v2315 = vmul.f32 %v2314, %v1993
      %v2316 = vand.u32 2147483647, %v1993
      %vm2317 = vcmp.lt.f32.partialorder %v2316, 0.0004427343
      %v2318 = vsel %vm2317, %v2315, %v2312
      %v2319 = vadd.f32 %v1995, 1.0
      %v2320 = vlog2.pop %v2319
      %v2321 = vmul.f32 %v2320, 0.6931472
      %v2322 = vmul.f32 -0.5, %v1995
      %v2323 = vadd.f32 %v2322, 1.0
      %v2324 = vmul.f32 %v2323, %v1995
      %v2325 = vand.u32 2147483647, %v1995
      %vm2326 = vcmp.lt.f32.partialorder %v2325, 0.0004427343
      %v2327 = vsel %vm2326, %v2324, %v2321
      %v2328 = vadd.f32 %v1997, 1.0
      %v2329 = vlog2.pop %v2328
      %v2330 = vmul.f32 %v2329, 0.6931472
      %v2331 = vmul.f32 -0.5, %v1997
      %v2332 = vadd.f32 %v2331, 1.0
      %v2333 = vmul.f32 %v2332, %v1997
      %v2334 = vand.u32 2147483647, %v1997
      %vm2335 = vcmp.lt.f32.partialorder %v2334, 0.0004427343
      %v2336 = vsel %vm2335, %v2333, %v2330
      %v2337 = vadd.f32 %v1999, 1.0
      %v2338 = vlog2.pop %v2337
      %v2339 = vmul.f32 %v2338, 0.6931472
      %v2340 = vmul.f32 -0.5, %v1999
      %v2341 = vadd.f32 %v2340, 1.0
      %v2342 = vmul.f32 %v2341, %v1999
      %v2343 = vand.u32 2147483647, %v1999
      %vm2344 = vcmp.lt.f32.partialorder %v2343, 0.0004427343
      %v2345 = vsel %vm2344, %v2342, %v2339
      %v2346 = vadd.f32 %v2001, 1.0
      %v2347 = vlog2.pop %v2346
      %v2348 = vmul.f32 %v2347, 0.6931472
      %v2349 = vmul.f32 -0.5, %v2001
      %v2350 = vadd.f32 %v2349, 1.0
      %v2351 = vmul.f32 %v2350, %v2001
      %v2352 = vand.u32 2147483647, %v2001
      %vm2353 = vcmp.lt.f32.partialorder %v2352, 0.0004427343
      %v2354 = vsel %vm2353, %v2351, %v2348
      %v2355 = vadd.f32 %v2003, 1.0
      %v2356 = vlog2.pop %v2355
      %v2357 = vmul.f32 %v2356, 0.6931472
      %v2358 = vmul.f32 -0.5, %v2003
      %v2359 = vadd.f32 %v2358, 1.0
      %v2360 = vmul.f32 %v2359, %v2003
      %v2361 = vand.u32 2147483647, %v2003
      %vm2362 = vcmp.lt.f32.partialorder %v2361, 0.0004427343
      %v2363 = vsel %vm2362, %v2360, %v2357
      %v2364 = vadd.f32 %v2004, %v2048
      %v2365 = vadd.f32 %v2005, %v2057
      %v2366 = vadd.f32 %v2006, %v2066
      %v2367 = vadd.f32 %v2007, %v2075
      %v2368 = vadd.f32 %v2008, %v2084
      %v2369 = vadd.f32 %v2009, %v2093
      %v2370 = vadd.f32 %v2010, %v2102
      %v2371 = vadd.f32 %v2011, %v2111
      %v2372 = vadd.f32 %v2012, %v2120
      %v2373 = vadd.f32 %v2013, %v2129
      %v2374 = vadd.f32 %v2014, %v2138
      %v2375 = vadd.f32 %v2015, %v2147
      %v2376 = vadd.f32 %v2016, %v2156
      %v2377 = vadd.f32 %v2017, %v2165
      %v2378 = vadd.f32 %v2018, %v2174
      %v2379 = vadd.f32 %v2019, %v2183
      %v2380 = vadd.f32 %v2020, %v2192
      %v2381 = vadd.f32 %v2021, %v2201
      %v2382 = vadd.f32 %v2022, %v2210
      %v2383 = vadd.f32 %v2023, %v2219
      %v2384 = vadd.f32 %v2024, %v2228
      %v2385 = vadd.f32 %v2025, %v2237
      %v2386 = vadd.f32 %v2026, %v2246
      %v2387 = vadd.f32 %v2027, %v2255
      %v2388 = vadd.f32 %v2028, %v2264
      %v2389 = vadd.f32 %v2029, %v2273
      %v2390 = vadd.f32 %v2030, %v2282
      %v2391 = vadd.f32 %v2031, %v2291
      %v2392 = vadd.f32 %v2032, %v2300
      %v2393 = vadd.f32 %v2033, %v2309
      %v2394 = vadd.f32 %v2034, %v2318
      %v2395 = vadd.f32 %v2035, %v2327
      %v2396 = vadd.f32 %v2036, %v2336
      %v2397 = vadd.f32 %v2037, %v2345
      %v2398 = vadd.f32 %v2038, %v2354
      %v2399 = vadd.f32 %v2039, %v2363
      %v2400 = vmul.f32 %v2364, %v1318
      %v2401 = vmul.f32 %v2365, %v1318
      %v2402 = vmul.f32 %v2366, %v1318
      %v2403 = vmul.f32 %v2367, %v1318
      %v2404 = vmul.f32 %v2368, %v1318
      %v2405 = vmul.f32 %v2369, %v1318
      %v2406 = vmul.f32 %v2370, %v1318
      %v2407 = vmul.f32 %v2371, %v1318
      %v2408 = vmul.f32 %v2372, %v1318
      %v2409 = vmul.f32 %v2373, %v1318
      %v2410 = vmul.f32 %v2374, %v1318
      %v2411 = vmul.f32 %v2375, %v1318
      %v2412 = vmul.f32 %v2376, %v1318
      %v2413 = vmul.f32 %v2377, %v1318
      %v2414 = vmul.f32 %v2378, %v1318
      %v2415 = vmul.f32 %v2379, %v1318
      %v2416 = vmul.f32 %v2380, %v1318
      %v2417 = vmul.f32 %v2381, %v1318
      %v2418 = vmul.f32 %v2382, %v1318
      %v2419 = vmul.f32 %v2383, %v1318
      %v2420 = vmul.f32 %v2384, %v1318
      %v2421 = vmul.f32 %v2385, %v1318
      %v2422 = vmul.f32 %v2386, %v1318
      %v2423 = vmul.f32 %v2387, %v1318
      %v2424 = vmul.f32 %v2388, %v1318
      %v2425 = vmul.f32 %v2389, %v1318
      %v2426 = vmul.f32 %v2390, %v1318
      %v2427 = vmul.f32 %v2391, %v1318
      %v2428 = vmul.f32 %v2392, %v1318
      %v2429 = vmul.f32 %v2393, %v1318
      %v2430 = vmul.f32 %v2394, %v1318
      %v2431 = vmul.f32 %v2395, %v1318
      %v2432 = vmul.f32 %v2396, %v1318
      %v2433 = vmul.f32 %v2397, %v1318
      %v2434 = vmul.f32 %v2398, %v1318
      %v2435 = vmul.f32 %v2399, %v1318
      %vm2436 = vcmp.ge.f32.partialorder %v1824, 0.0
      %vm2437 = vcmp.ge.f32.partialorder %v1825, 0.0
      %vm2438 = vcmp.ge.f32.partialorder %v1826, 0.0
      %vm2439 = vcmp.ge.f32.partialorder %v1827, 0.0
      %vm2440 = vcmp.ge.f32.partialorder %v1828, 0.0
      %vm2441 = vcmp.ge.f32.partialorder %v1829, 0.0
      %vm2442 = vcmp.ge.f32.partialorder %v1830, 0.0
      %vm2443 = vcmp.ge.f32.partialorder %v1831, 0.0
      %vm2444 = vcmp.ge.f32.partialorder %v1832, 0.0
      %vm2445 = vcmp.ge.f32.partialorder %v1833, 0.0
      %vm2446 = vcmp.ge.f32.partialorder %v1834, 0.0
      %vm2447 = vcmp.ge.f32.partialorder %v1835, 0.0
      %vm2448 = vcmp.ge.f32.partialorder %v1836, 0.0
      %vm2449 = vcmp.ge.f32.partialorder %v1837, 0.0
      %vm2450 = vcmp.ge.f32.partialorder %v1838, 0.0
      %vm2451 = vcmp.ge.f32.partialorder %v1839, 0.0
      %vm2452 = vcmp.ge.f32.partialorder %v1840, 0.0
      %vm2453 = vcmp.ge.f32.partialorder %v1841, 0.0
      %vm2454 = vcmp.ge.f32.partialorder %v1842, 0.0
      %vm2455 = vcmp.ge.f32.partialorder %v1843, 0.0
      %vm2456 = vcmp.ge.f32.partialorder %v1844, 0.0
      %vm2457 = vcmp.ge.f32.partialorder %v1845, 0.0
      %vm2458 = vcmp.ge.f32.partialorder %v1846, 0.0
      %vm2459 = vcmp.ge.f32.partialorder %v1847, 0.0
      %vm2460 = vcmp.ge.f32.partialorder %v1848, 0.0
      %vm2461 = vcmp.ge.f32.partialorder %v1849, 0.0
      %vm2462 = vcmp.ge.f32.partialorder %v1850, 0.0
      %vm2463 = vcmp.ge.f32.partialorder %v1851, 0.0
      %vm2464 = vcmp.ge.f32.partialorder %v1852, 0.0
      %vm2465 = vcmp.ge.f32.partialorder %v1853, 0.0
      %vm2466 = vcmp.ge.f32.partialorder %v1854, 0.0
      %vm2467 = vcmp.ge.f32.partialorder %v1855, 0.0
      %vm2468 = vcmp.ge.f32.partialorder %v1856, 0.0
      %vm2469 = vcmp.ge.f32.partialorder %v1857, 0.0
      %vm2470 = vcmp.ge.f32.partialorder %v1858, 0.0
      %vm2471 = vcmp.ge.f32.partialorder %v1859, 0.0
      %v2472 = vsel %vm2436, 1.0, %v1933
      %v2473 = vsel %vm2437, 1.0, %v1935
      %v2474 = vsel %vm2438, 1.0, %v1937
      %v2475 = vsel %vm2439, 1.0, %v1939
      %v2476 = vsel %vm2440, 1.0, %v1941
      %v2477 = vsel %vm2441, 1.0, %v1943
      %v2478 = vsel %vm2442, 1.0, %v1945
      %v2479 = vsel %vm2443, 1.0, %v1947
      %v2480 = vsel %vm2444, 1.0, %v1949
      %v2481 = vsel %vm2445, 1.0, %v1951
      %v2482 = vsel %vm2446, 1.0, %v1953
      %v2483 = vsel %vm2447, 1.0, %v1955
      %v2484 = vsel %vm2448, 1.0, %v1957
      %v2485 = vsel %vm2449, 1.0, %v1959
      %v2486 = vsel %vm2450, 1.0, %v1961
      %v2487 = vsel %vm2451, 1.0, %v1963
      %v2488 = vsel %vm2452, 1.0, %v1965
      %v2489 = vsel %vm2453, 1.0, %v1967
      %v2490 = vsel %vm2454, 1.0, %v1969
      %v2491 = vsel %vm2455, 1.0, %v1971
      %v2492 = vsel %vm2456, 1.0, %v1973
      %v2493 = vsel %vm2457, 1.0, %v1975
      %v2494 = vsel %vm2458, 1.0, %v1977
      %v2495 = vsel %vm2459, 1.0, %v1979
      %v2496 = vsel %vm2460, 1.0, %v1981
      %v2497 = vsel %vm2461, 1.0, %v1983
      %v2498 = vsel %vm2462, 1.0, %v1985
      %v2499 = vsel %vm2463, 1.0, %v1987
      %v2500 = vsel %vm2464, 1.0, %v1989
      %v2501 = vsel %vm2465, 1.0, %v1991
      %v2502 = vsel %vm2466, 1.0, %v1993
      %v2503 = vsel %vm2467, 1.0, %v1995
      %v2504 = vsel %vm2468, 1.0, %v1997
      %v2505 = vsel %vm2469, 1.0, %v1999
      %v2506 = vsel %vm2470, 1.0, %v2001
      %v2507 = vsel %vm2471, 1.0, %v2003
      %v2508 = vadd.f32 %v1933, 1.0
      %v2509 = vadd.f32 %v1935, 1.0
      %v2510 = vadd.f32 %v1937, 1.0
      %v2511 = vadd.f32 %v1939, 1.0
      %v2512 = vadd.f32 %v1941, 1.0
      %v2513 = vadd.f32 %v1943, 1.0
      %v2514 = vadd.f32 %v1945, 1.0
      %v2515 = vadd.f32 %v1947, 1.0
      %v2516 = vadd.f32 %v1949, 1.0
      %v2517 = vadd.f32 %v1951, 1.0
      %v2518 = vadd.f32 %v1953, 1.0
      %v2519 = vadd.f32 %v1955, 1.0
      %v2520 = vadd.f32 %v1957, 1.0
      %v2521 = vadd.f32 %v1959, 1.0
      %v2522 = vadd.f32 %v1961, 1.0
      %v2523 = vadd.f32 %v1963, 1.0
      %v2524 = vadd.f32 %v1965, 1.0
      %v2525 = vadd.f32 %v1967, 1.0
      %v2526 = vadd.f32 %v1969, 1.0
      %v2527 = vadd.f32 %v1971, 1.0
      %v2528 = vadd.f32 %v1973, 1.0
      %v2529 = vadd.f32 %v1975, 1.0
      %v2530 = vadd.f32 %v1977, 1.0
      %v2531 = vadd.f32 %v1979, 1.0
      %v2532 = vadd.f32 %v1981, 1.0
      %v2533 = vadd.f32 %v1983, 1.0
      %v2534 = vadd.f32 %v1985, 1.0
      %v2535 = vadd.f32 %v1987, 1.0
      %v2536 = vadd.f32 %v1989, 1.0
      %v2537 = vadd.f32 %v1991, 1.0
      %v2538 = vadd.f32 %v1993, 1.0
      %v2539 = vadd.f32 %v1995, 1.0
      %v2540 = vadd.f32 %v1997, 1.0
      %v2541 = vadd.f32 %v1999, 1.0
      %v2542 = vadd.f32 %v2001, 1.0
      %v2543 = vadd.f32 %v2003, 1.0
      %v2544 = vrcp.pop %v2508
      %v2545 = vmul.f32 %v2472, %v2544
      %v2546 = vrcp.pop %v2509
      %v2547 = vmul.f32 %v2473, %v2546
      %v2548 = vrcp.pop %v2510
      %v2549 = vmul.f32 %v2474, %v2548
      %v2550 = vrcp.pop %v2511
      %v2551 = vmul.f32 %v2475, %v2550
      %v2552 = vrcp.pop %v2512
      %v2553 = vmul.f32 %v2476, %v2552
      %v2554 = vrcp.pop %v2513
      %v2555 = vmul.f32 %v2477, %v2554
      %v2556 = vrcp.pop %v2514
      %v2557 = vmul.f32 %v2478, %v2556
      %v2558 = vrcp.pop %v2515
      %v2559 = vmul.f32 %v2479, %v2558
      %v2560 = vrcp.pop %v2516
      %v2561 = vmul.f32 %v2480, %v2560
      %v2562 = vrcp.pop %v2517
      %v2563 = vmul.f32 %v2481, %v2562
      %v2564 = vrcp.pop %v2518
      %v2565 = vmul.f32 %v2482, %v2564
      %v2566 = vrcp.pop %v2519
      %v2567 = vmul.f32 %v2483, %v2566
      %v2568 = vrcp.pop %v2520
      %v2569 = vmul.f32 %v2484, %v2568
      %v2570 = vrcp.pop %v2521
      %v2571 = vmul.f32 %v2485, %v2570
      %v2572 = vrcp.pop %v2522
      %v2573 = vmul.f32 %v2486, %v2572
      %v2574 = vrcp.pop %v2523
      %v2575 = vmul.f32 %v2487, %v2574
      %v2576 = vrcp.pop %v2524
      %v2577 = vmul.f32 %v2488, %v2576
      %v2578 = vrcp.pop %v2525
      %v2579 = vmul.f32 %v2489, %v2578
      %v2580 = vrcp.pop %v2526
      %v2581 = vmul.f32 %v2490, %v2580
      %v2582 = vrcp.pop %v2527
      %v2583 = vmul.f32 %v2491, %v2582
      %v2584 = vrcp.pop %v2528
      %v2585 = vmul.f32 %v2492, %v2584
      %v2586 = vrcp.pop %v2529
      %v2587 = vmul.f32 %v2493, %v2586
      %v2588 = vrcp.pop %v2530
      %v2589 = vmul.f32 %v2494, %v2588
      %v2590 = vrcp.pop %v2531
      %v2591 = vmul.f32 %v2495, %v2590
      %v2592 = vrcp.pop %v2532
      %v2593 = vmul.f32 %v2496, %v2592
      %v2594 = vrcp.pop %v2533
      %v2595 = vmul.f32 %v2497, %v2594
      %v2596 = vrcp.pop %v2534
      %v2597 = vmul.f32 %v2498, %v2596
      %v2598 = vrcp.pop %v2535
      %v2599 = vmul.f32 %v2499, %v2598
      %v2600 = vrcp.pop %v2536
      %v2601 = vmul.f32 %v2500, %v2600
      %v2602 = vrcp.pop %v2537
      %v2603 = vmul.f32 %v2501, %v2602
      %v2604 = vrcp.pop %v2538
      %v2605 = vmul.f32 %v2502, %v2604
      %v2606 = vrcp.pop %v2539
      %v2607 = vmul.f32 %v2503, %v2606
      %v2608 = vrcp.pop %v2540
      %v2609 = vmul.f32 %v2504, %v2608
      %v2610 = vrcp.pop %v2541
      %v2611 = vmul.f32 %v2505, %v2610
      %v2612 = vrcp.pop %v2542
      %v2613 = vmul.f32 %v2506, %v2612
      %v2614 = vrcp.pop %v2543
      %v2615 = vmul.f32 %v2507, %v2614
      %v2616 = vld [vmem:[%s5] sm:$0x1]
      %v2618 = vlaneseq
      %v2619 = vshrl.u32 %v2618, 7
      %v2620 = vsub.s32 0, %v2619
      %v2621 = vrot.slane %v2616, %v2620
      %v2623 = vmul.f32 %v2545, %v2621
      %v2624 = vmul.f32 %v2547, %v2621
      %v2625 = vmul.f32 %v2549, %v2621
      %v2626 = vmul.f32 %v2551, %v2621
      %v2627 = vmul.f32 %v2553, %v2621
      %v2628 = vmul.f32 %v2555, %v2621
      %v2629 = vmul.f32 %v2557, %v2621
      %v2630 = vmul.f32 %v2559, %v2621
      %v2631 = vmul.f32 %v2561, %v2621
      %v2632 = vmul.f32 %v2563, %v2621
      %v2633 = vmul.f32 %v2565, %v2621
      %v2634 = vmul.f32 %v2567, %v2621
      %v2635 = vmul.f32 %v2569, %v2621
      %v2636 = vmul.f32 %v2571, %v2621
      %v2637 = vmul.f32 %v2573, %v2621
      %v2638 = vmul.f32 %v2575, %v2621
      %v2639 = vmul.f32 %v2577, %v2621
      %v2640 = vmul.f32 %v2579, %v2621
      %v2641 = vmul.f32 %v2581, %v2621
      %v2642 = vmul.f32 %v2583, %v2621
      %v2643 = vmul.f32 %v2585, %v2621
      %v2644 = vmul.f32 %v2587, %v2621
      %v2645 = vmul.f32 %v2589, %v2621
      %v2646 = vmul.f32 %v2591, %v2621
      %v2647 = vmul.f32 %v2593, %v2621
      %v2648 = vmul.f32 %v2595, %v2621
      %v2649 = vmul.f32 %v2597, %v2621
      %v2650 = vmul.f32 %v2599, %v2621
      %v2651 = vmul.f32 %v2601, %v2621
      %v2652 = vmul.f32 %v2603, %v2621
      %v2653 = vmul.f32 %v2605, %v2621
      %v2654 = vmul.f32 %v2607, %v2621
      %v2655 = vmul.f32 %v2609, %v2621
      %v2656 = vmul.f32 %v2611, %v2621
      %v2657 = vmul.f32 %v2613, %v2621
      %v2658 = vmul.f32 %v2615, %v2621
      %v2659 = vpack.c.bf16 %v2624, %v2623
      %v2660 = vpack.c.bf16 %v2626, %v2625
      %v2661 = vpack.c.bf16 %v2628, %v2627
      %v2662 = vpack.c.bf16 %v2630, %v2629
      %v2663 = vpack.c.bf16 %v2632, %v2631
      %v2664 = vpack.c.bf16 %v2634, %v2633
      %v2665 = vpack.c.bf16 %v2636, %v2635
      %v2666 = vpack.c.bf16 %v2638, %v2637
      %v2667 = vpack.c.bf16 %v2640, %v2639
      %v2668 = vpack.c.bf16 %v2642, %v2641
      %v2669 = vpack.c.bf16 %v2644, %v2643
      %v2670 = vpack.c.bf16 %v2646, %v2645
      %v2671 = vpack.c.bf16 %v2648, %v2647
      %v2672 = vpack.c.bf16 %v2650, %v2649
      %v2673 = vpack.c.bf16 %v2652, %v2651
      %v2674 = vpack.c.bf16 %v2654, %v2653
      %v2675 = vpack.c.bf16 %v2656, %v2655
      %v2676 = vpack.c.bf16 %v2658, %v2657
      %v2677 = vld [vmem:[%s6] sm:$0xf]
      %v2678 = vld [vmem:[%s6 + $0x4] sm:$0xf]
      %v2679 = vld [vmem:[%s6 + $0x8] sm:$0xf]
      %v2680 = vld [vmem:[%s6 + $0xc] sm:$0xf]
      %v2681 = vld [vmem:[%s6 + $0x10] sm:$0xf]
      %v2682 = vld [vmem:[%s6 + $0x14] sm:$0xf]
      %v2683 = vld [vmem:[%s6 + $0x18] sm:$0xf]
      %v2684 = vld [vmem:[%s6 + $0x1c] sm:$0xf]
      %v2693 = vunpack.c.l.b16 %v2677
      %v2694 = vunpack.c.l.b16 %v2678
      %v2695 = vunpack.c.l.b16 %v2679
      %v2696 = vunpack.c.l.b16 %v2680
      %v2697 = vunpack.c.l.b16 %v2681
      %v2698 = vunpack.c.l.b16 %v2682
      %v2699 = vunpack.c.l.b16 %v2683
      %v2700 = vunpack.c.l.b16 %v2684
      %v2701 = vpack.c.b16 %v2694, %v2693
      %v2702 = vpack.c.b16 %v2696, %v2695
      %v2703 = vpack.c.b16 %v2698, %v2697
      %v2704 = vpack.c.b16 %v2700, %v2699
      %v2710 = vsel %vm1592, %v2659, 0
      %v2713 = vsel %vm1592, %v2660, 0
      %v2716 = vsel %vm1592, %v2661, 0
      %v2719 = vsel %vm1592, %v2662, 0
      %v2722 = vsel %vm1592, %v2663, 0
      %v2725 = vsel %vm1592, %v2664, 0
      %v2728 = vsel %vm1592, %v2665, 0
      %v2731 = vsel %vm1592, %v2666, 0
      %v2734 = vsel %vm1592, %v2667, 0
      %v2737 = vsel %vm1592, %v2668, 0
      %v2740 = vsel %vm1592, %v2669, 0
      %v2743 = vsel %vm1592, %v2670, 0
      %v2746 = vsel %vm1592, %v2671, 0
      %v2749 = vsel %vm1592, %v2672, 0
      %v2752 = vsel %vm1592, %v2673, 0
      %v2755 = vsel %vm1592, %v2674, 0
      %v2758 = vsel %vm1592, %v2675, 0
      %v2761 = vsel %vm1592, %v2676, 0
      %2763 = vmatprep.subr.bf16.mxu0 0
      %2764 = vmatpush1.bf16.msra.mxu0 %v2701
      %2765 = vmatprep.subr.bf16.mxu0 0
      %2766 = vmatpush1.bf16.msra.mxu0 %v2702
      %2767 = vmatprep.subr.bf16.mxu0 0
      %2768 = vmatpush1.bf16.msra.mxu0 %v2703
      %2769 = vmatprep.subr.bf16.mxu0 0
      %2770 = vmatpush1.bf16.msra.mxu0 %v2704
      %2771 = vmatprep.subr.bf16.mxu0 0
      %2772 = vmatpush1.bf16.msra.mxu0 0
      %2773 = vmatprep.subr.bf16.mxu0 0
      %2774 = vmatpush1.bf16.msra.mxu0 0
      %2775 = vmatprep.subr.bf16.mxu0 0
      %2776 = vmatpush1.bf16.msra.mxu0 0
      %2777 = vmatprep.subr.bf16.mxu0 0
      %2778 = vmatpush1.bf16.msra.mxu0 0
      %2779 = vmatprep.subr.bf16.mxu0 0
      %2780 = vmatpush1.bf16.msra.mxu0 0
      %2781 = vmatprep.subr.bf16.mxu0 0
      %2782 = vmatpush1.bf16.msra.mxu0 0
      %2783 = vmatprep.subr.bf16.mxu0 0
      %2784 = vmatpush1.bf16.msra.mxu0 0
      %2785 = vmatprep.subr.bf16.mxu0 0
      %2786 = vmatpush1.bf16.msra.mxu0 0
      %2787 = vmatprep.subr.bf16.mxu0 0
      %2788 = vmatpush1.bf16.msra.mxu0 0
      %2789 = vmatprep.subr.bf16.mxu0 0
      %2790 = vmatpush1.bf16.msra.mxu0 0
      %2791 = vmatprep.subr.bf16.mxu0 0
      %2792 = vmatpush1.bf16.msra.mxu0 0
      %2793 = vmatprep.subr.bf16.mxu0 0
      %2794 = vmatpush1.bf16.msra.mxu0 0
      %2795 = vmatprep.mubr.bf16.mxu0 0
      %2796 = vmatmul.mubr.bf16.gmra.mrb[0].mxu0 %v2710
      %v2797 = vpop.f32.mrb[0].mxu0
      %v2798 = vadd.f32 0.0, %v2797
      %v2799 = vpop.f32.mrb[0].mxu0
      %v2800 = vpop.f32.mrb[0].mxu0
      %v2801 = vadd.f32 0.0, %v2800
      %v2802 = vpop.f32.mrb[0].mxu0
      %2803 = vmatprep.mubr.bf16.mxu0 0
      %2804 = vmatmul.mubr.bf16.gmra.mrb[0].mxu0 %v2713
      %v2805 = vpop.f32.mrb[0].mxu0
      %v2806 = vadd.f32 0.0, %v2805
      %v2807 = vpop.f32.mrb[0].mxu0
      %v2808 = vpop.f32.mrb[0].mxu0
      %v2809 = vadd.f32 0.0, %v2808
      %v2810 = vpop.f32.mrb[0].mxu0
      %2811 = vmatprep.mubr.bf16.mxu0 0
      %2812 = vmatmul.mubr.bf16.gmra.mrb[0].mxu0 %v2716
      %v2813 = vpop.f32.mrb[0].mxu0
      %v2814 = vadd.f32 0.0, %v2813
      %v2815 = vpop.f32.mrb[0].mxu0
      %v2816 = vpop.f32.mrb[0].mxu0
      %v2817 = vadd.f32 0.0, %v2816
      %v2818 = vpop.f32.mrb[0].mxu0
      %2819 = vmatprep.mubr.bf16.mxu0 0
      %2820 = vmatmul.mubr.bf16.gmra.mrb[0].mxu0 %v2719
      %v2821 = vpop.f32.mrb[0].mxu0
      %v2822 = vadd.f32 0.0, %v2821
      %v2823 = vpop.f32.mrb[0].mxu0
      %v2824 = vpop.f32.mrb[0].mxu0
      %v2825 = vadd.f32 0.0, %v2824
      %v2826 = vpop.f32.mrb[0].mxu0
      %2827 = vmatprep.mubr.bf16.mxu0 0
      %2828 = vmatmul.mubr.bf16.gmra.mrb[0].mxu0 %v2722
      %v2829 = vpop.f32.mrb[0].mxu0
      %v2830 = vadd.f32 0.0, %v2829
      %v2831 = vpop.f32.mrb[0].mxu0
      %v2832 = vpop.f32.mrb[0].mxu0
      %v2833 = vadd.f32 0.0, %v2832
      %v2834 = vpop.f32.mrb[0].mxu0
      %2835 = vmatprep.mubr.bf16.mxu0 0
      %2836 = vmatmul.mubr.bf16.gmra.mrb[0].mxu0 %v2725
      %v2837 = vpop.f32.mrb[0].mxu0
      %v2838 = vadd.f32 0.0, %v2837
      %v2839 = vpop.f32.mrb[0].mxu0
      %v2840 = vpop.f32.mrb[0].mxu0
      %v2841 = vadd.f32 0.0, %v2840
      %v2842 = vpop.f32.mrb[0].mxu0
      %2843 = vmatprep.mubr.bf16.mxu0 0
      %2844 = vmatmul.mubr.bf16.gmra.mrb[0].mxu0 %v2728
      %v2845 = vpop.f32.mrb[0].mxu0
      %v2846 = vadd.f32 0.0, %v2845
      %v2847 = vpop.f32.mrb[0].mxu0
      %v2848 = vpop.f32.mrb[0].mxu0
      %v2849 = vadd.f32 0.0, %v2848
      %v2850 = vpop.f32.mrb[0].mxu0
      %2851 = vmatprep.mubr.bf16.mxu0 0
      %2852 = vmatmul.mubr.bf16.gmra.mrb[0].mxu0 %v2731
      %v2853 = vpop.f32.mrb[0].mxu0
      %v2854 = vadd.f32 0.0, %v2853
      %v2855 = vpop.f32.mrb[0].mxu0
      %v2856 = vpop.f32.mrb[0].mxu0
      %v2857 = vadd.f32 0.0, %v2856
      %v2858 = vpop.f32.mrb[0].mxu0
      %2859 = vmatprep.mubr.bf16.mxu0 0
      %2860 = vmatmul.mubr.bf16.gmra.mrb[0].mxu0 %v2734
      %v2861 = vpop.f32.mrb[0].mxu0
      %v2862 = vadd.f32 0.0, %v2861
      %v2863 = vpop.f32.mrb[0].mxu0
      %v2864 = vpop.f32.mrb[0].mxu0
      %v2865 = vadd.f32 0.0, %v2864
      %v2866 = vpop.f32.mrb[0].mxu0
      %2867 = vmatprep.mubr.bf16.mxu0 0
      %2868 = vmatmul.mubr.bf16.gmra.mrb[0].mxu0 %v2737
      %v2869 = vpop.f32.mrb[0].mxu0
      %v2870 = vadd.f32 0.0, %v2869
      %v2871 = vpop.f32.mrb[0].mxu0
      %v2872 = vpop.f32.mrb[0].mxu0
      %v2873 = vadd.f32 0.0, %v2872
      %v2874 = vpop.f32.mrb[0].mxu0
      %2875 = vmatprep.mubr.bf16.mxu0 0
      %2876 = vmatmul.mubr.bf16.gmra.mrb[0].mxu0 %v2740
      %v2877 = vpop.f32.mrb[0].mxu0
      %v2878 = vadd.f32 0.0, %v2877
      %v2879 = vpop.f32.mrb[0].mxu0
      %v2880 = vpop.f32.mrb[0].mxu0
      %v2881 = vadd.f32 0.0, %v2880
      %v2882 = vpop.f32.mrb[0].mxu0
      %2883 = vmatprep.mubr.bf16.mxu0 0
      %2884 = vmatmul.mubr.bf16.gmra.mrb[0].mxu0 %v2743
      %v2885 = vpop.f32.mrb[0].mxu0
      %v2886 = vadd.f32 0.0, %v2885
      %v2887 = vpop.f32.mrb[0].mxu0
      %v2888 = vpop.f32.mrb[0].mxu0
      %v2889 = vadd.f32 0.0, %v2888
      %v2890 = vpop.f32.mrb[0].mxu0
      %2891 = vmatprep.mubr.bf16.mxu0 0
      %2892 = vmatmul.mubr.bf16.gmra.mrb[0].mxu0 %v2746
      %v2893 = vpop.f32.mrb[0].mxu0
      %v2894 = vadd.f32 0.0, %v2893
      %v2895 = vpop.f32.mrb[0].mxu0
      %v2896 = vpop.f32.mrb[0].mxu0
      %v2897 = vadd.f32 0.0, %v2896
      %v2898 = vpop.f32.mrb[0].mxu0
      %2899 = vmatprep.mubr.bf16.mxu0 0
      %2900 = vmatmul.mubr.bf16.gmra.mrb[0].mxu0 %v2749
      %v2901 = vpop.f32.mrb[0].mxu0
      %v2902 = vadd.f32 0.0, %v2901
      %v2903 = vpop.f32.mrb[0].mxu0
      %v2904 = vpop.f32.mrb[0].mxu0
      %v2905 = vadd.f32 0.0, %v2904
      %v2906 = vpop.f32.mrb[0].mxu0
      %2907 = vmatprep.mubr.bf16.mxu0 0
      %2908 = vmatmul.mubr.bf16.gmra.mrb[0].mxu0 %v2752
      %v2909 = vpop.f32.mrb[0].mxu0
      %v2910 = vadd.f32 0.0, %v2909
      %v2911 = vpop.f32.mrb[0].mxu0
      %v2912 = vpop.f32.mrb[0].mxu0
      %v2913 = vadd.f32 0.0, %v2912
      %v2914 = vpop.f32.mrb[0].mxu0
      %2915 = vmatprep.mubr.bf16.mxu0 0
      %2916 = vmatmul.mubr.bf16.gmra.mrb[0].mxu0 %v2755
      %v2917 = vpop.f32.mrb[0].mxu0
      %v2918 = vadd.f32 0.0, %v2917
      %v2919 = vpop.f32.mrb[0].mxu0
      %v2920 = vpop.f32.mrb[0].mxu0
      %v2921 = vadd.f32 0.0, %v2920
      %v2922 = vpop.f32.mrb[0].mxu0
      %2923 = vmatprep.mubr.bf16.mxu0 0
      %2924 = vmatmul.mubr.bf16.gmra.mrb[0].mxu0 %v2758
      %v2925 = vpop.f32.mrb[0].mxu0
      %v2926 = vadd.f32 0.0, %v2925
      %v2927 = vpop.f32.mrb[0].mxu0
      %v2928 = vpop.f32.mrb[0].mxu0
      %v2929 = vadd.f32 0.0, %v2928
      %v2930 = vpop.f32.mrb[0].mxu0
      %2931 = vmatprep.mubr.bf16.mxu0 0
      %2932 = vmatmul.mubr.bf16.gmra.mrb[0].mxu0 %v2761
      %v2933 = vpop.f32.mrb[0].mxu0
      %v2934 = vadd.f32 0.0, %v2933
      %v2935 = vpop.f32.mrb[0].mxu0
      %v2936 = vpop.f32.mrb[0].mxu0
      %v2937 = vadd.f32 0.0, %v2936
      %v2938 = vpop.f32.mrb[0].mxu0
      %2939 = vdwg.mxu0
      %v2940 = vmul.f32 %v1464, %v2798
      %v2941 = vmul.f32 %v1466, %v2801
      %v2942 = vmul.f32 %v1468, %v2806
      %v2943 = vmul.f32 %v1470, %v2809
      %v2944 = vmul.f32 %v1472, %v2814
      %v2945 = vmul.f32 %v1474, %v2817
      %v2946 = vmul.f32 %v1476, %v2822
      %v2947 = vmul.f32 %v1478, %v2825
      %v2948 = vmul.f32 %v1480, %v2830
      %v2949 = vmul.f32 %v1482, %v2833
      %v2950 = vmul.f32 %v1484, %v2838
      %v2951 = vmul.f32 %v1486, %v2841
      %v2952 = vmul.f32 %v1488, %v2846
      %v2953 = vmul.f32 %v1490, %v2849
      %v2954 = vmul.f32 %v1492, %v2854
      %v2955 = vmul.f32 %v1494, %v2857
      %v2956 = vmul.f32 %v1496, %v2862
      %v2957 = vmul.f32 %v1498, %v2865
      %v2958 = vmul.f32 %v1500, %v2870
      %v2959 = vmul.f32 %v1502, %v2873
      %v2960 = vmul.f32 %v1504, %v2878
      %v2961 = vmul.f32 %v1506, %v2881
      %v2962 = vmul.f32 %v1508, %v2886
      %v2963 = vmul.f32 %v1510, %v2889
      %v2964 = vmul.f32 %v1512, %v2894
      %v2965 = vmul.f32 %v1514, %v2897
      %v2966 = vmul.f32 %v1516, %v2902
      %v2967 = vmul.f32 %v1518, %v2905
      %v2968 = vmul.f32 %v1520, %v2910
      %v2969 = vmul.f32 %v1522, %v2913
      %v2970 = vmul.f32 %v1524, %v2918
      %v2971 = vmul.f32 %v1526, %v2921
      %v2972 = vmul.f32 %v1528, %v2926
      %v2973 = vmul.f32 %v1530, %v2929
      %v2974 = vmul.f32 %v1532, %v2934
      %v2975 = vmul.f32 %v1534, %v2937
      %v2976 = vpack.c.bf16 %v2401, %v2400
      %v2977 = vpack.c.bf16 %v2403, %v2402
      %v2978 = vpack.c.bf16 %v2405, %v2404
      %v2979 = vpack.c.bf16 %v2407, %v2406
      %v2980 = vpack.c.bf16 %v2409, %v2408
      %v2981 = vpack.c.bf16 %v2411, %v2410
      %v2982 = vpack.c.bf16 %v2413, %v2412
      %v2983 = vpack.c.bf16 %v2415, %v2414
      %v2984 = vpack.c.bf16 %v2417, %v2416
      %v2985 = vpack.c.bf16 %v2419, %v2418
      %v2986 = vpack.c.bf16 %v2421, %v2420
      %v2987 = vpack.c.bf16 %v2423, %v2422
      %v2988 = vpack.c.bf16 %v2425, %v2424
      %v2989 = vpack.c.bf16 %v2427, %v2426
      %v2990 = vpack.c.bf16 %v2429, %v2428
      %v2991 = vpack.c.bf16 %v2431, %v2430
      %v2992 = vpack.c.bf16 %v2433, %v2432
      %v2993 = vpack.c.bf16 %v2435, %v2434
      %v2994 = vpack.c.bf16 %v2941, %v2940
      %v2995 = vpack.c.bf16 %v2943, %v2942
      %v2996 = vpack.c.bf16 %v2945, %v2944
      %v2997 = vpack.c.bf16 %v2947, %v2946
      %v2998 = vpack.c.bf16 %v2949, %v2948
      %v2999 = vpack.c.bf16 %v2951, %v2950
      %v3000 = vpack.c.bf16 %v2953, %v2952
      %v3001 = vpack.c.bf16 %v2955, %v2954
      %v3002 = vpack.c.bf16 %v2957, %v2956
      %v3003 = vpack.c.bf16 %v2959, %v2958
      %v3004 = vpack.c.bf16 %v2961, %v2960
      %v3005 = vpack.c.bf16 %v2963, %v2962
      %v3006 = vpack.c.bf16 %v2965, %v2964
      %v3007 = vpack.c.bf16 %v2967, %v2966
      %v3008 = vpack.c.bf16 %v2969, %v2968
      %v3009 = vpack.c.bf16 %v2971, %v2970
      %v3010 = vpack.c.bf16 %v2973, %v2972
      %v3011 = vpack.c.bf16 %v2975, %v2974
      %3030 = vrot.lane.b32.xlu0 %v2994, 64
      %v3031 = vpop.permute.xlu0 %3030
      %3032 = vrot.lane.b32.xlu0 %v2995, 64
      %v3033 = vpop.permute.xlu0 %3032
      %3034 = vrot.lane.b32.xlu0 %v2996, 64
      %v3035 = vpop.permute.xlu0 %3034
      %3036 = vrot.lane.b32.xlu0 %v2997, 64
      %v3037 = vpop.permute.xlu0 %3036
      %3038 = vrot.lane.b32.xlu0 %v2998, 64
      %v3039 = vpop.permute.xlu0 %3038
      %3040 = vrot.lane.b32.xlu0 %v2999, 64
      %v3041 = vpop.permute.xlu0 %3040
      %3042 = vrot.lane.b32.xlu0 %v3000, 64
      %v3043 = vpop.permute.xlu0 %3042
      %3044 = vrot.lane.b32.xlu0 %v3001, 64
      %v3045 = vpop.permute.xlu0 %3044
      %3046 = vrot.lane.b32.xlu0 %v3002, 64
      %v3047 = vpop.permute.xlu0 %3046
      %3048 = vrot.lane.b32.xlu0 %v3003, 64
      %v3049 = vpop.permute.xlu0 %3048
      %3050 = vrot.lane.b32.xlu0 %v3004, 64
      %v3051 = vpop.permute.xlu0 %3050
      %3052 = vrot.lane.b32.xlu0 %v3005, 64
      %v3053 = vpop.permute.xlu0 %3052
      %3054 = vrot.lane.b32.xlu0 %v3006, 64
      %v3055 = vpop.permute.xlu0 %3054
      %3056 = vrot.lane.b32.xlu0 %v3007, 64
      %v3057 = vpop.permute.xlu0 %3056
      %3058 = vrot.lane.b32.xlu0 %v3008, 64
      %v3059 = vpop.permute.xlu0 %3058
      %3060 = vrot.lane.b32.xlu0 %v3009, 64
      %v3061 = vpop.permute.xlu0 %3060
      %3062 = vrot.lane.b32.xlu0 %v3010, 64
      %v3063 = vpop.permute.xlu0 %3062
      %3064 = vrot.lane.b32.xlu0 %v3011, 64
      %v3065 = vpop.permute.xlu0 %3064
      %v3068 = vsel %vm1592, %v2976, %v3031
      %v3072 = vsel %vm1592, %v2977, %v3033
      %v3076 = vsel %vm1592, %v2978, %v3035
      %v3080 = vsel %vm1592, %v2979, %v3037
      %v3084 = vsel %vm1592, %v2980, %v3039
      %v3088 = vsel %vm1592, %v2981, %v3041
      %v3092 = vsel %vm1592, %v2982, %v3043
      %v3096 = vsel %vm1592, %v2983, %v3045
      %v3100 = vsel %vm1592, %v2984, %v3047
      %v3104 = vsel %vm1592, %v2985, %v3049
      %v3108 = vsel %vm1592, %v2986, %v3051
      %v3112 = vsel %vm1592, %v2987, %v3053
      %v3116 = vsel %vm1592, %v2988, %v3055
      %v3120 = vsel %vm1592, %v2989, %v3057
      %v3124 = vsel %vm1592, %v2990, %v3059
      %v3128 = vsel %vm1592, %v2991, %v3061
      %v3132 = vsel %vm1592, %v2992, %v3063
      %v3136 = vsel %vm1592, %v2993, %v3065
      %v3138 = vld [vmem:[%s7] sm:$0xf]
      %v3139 = vld [vmem:[%s7 + $0x4] sm:$0xf]
      %v3140 = vld [vmem:[%s7 + $0x8] sm:$0xf]
      %v3141 = vld [vmem:[%s7 + $0xc] sm:$0xf]
      %v3142 = vld [vmem:[%s7 + $0x10] sm:$0xf]
      %v3143 = vld [vmem:[%s7 + $0x14] sm:$0xf]
      %v3144 = vld [vmem:[%s7 + $0x18] sm:$0xf]
      %v3145 = vld [vmem:[%s7 + $0x1c] sm:$0xf]
      %v3146 = vld [vmem:[%s7 + $0x20] sm:$0xf]
      %v3147 = vld [vmem:[%s7 + $0x24] sm:$0xf]
      %v3148 = vld [vmem:[%s7 + $0x28] sm:$0xf]
      %v3149 = vld [vmem:[%s7 + $0x2c] sm:$0xf]
      %v3150 = vld [vmem:[%s7 + $0x30] sm:$0xf]
      %v3151 = vld [vmem:[%s7 + $0x34] sm:$0xf]
      %v3152 = vld [vmem:[%s7 + $0x38] sm:$0xf]
      %v3153 = vld [vmem:[%s7 + $0x3c] sm:$0xf]
      %v3154 = vld [vmem:[%s8] sm:$0x1]
      %v3156 = vlaneseq
      %v3157 = vshrl.u32 %v3156, 7
      %v3158 = vsub.s32 0, %v3157
      %v3159 = vrot.slane %v3154, %v3158
      %v3177 = vunpack.c.l.b16 %v3138
      %v3178 = vunpack.c.l.b16 %v3139
      %v3179 = vunpack.c.l.b16 %v3140
      %v3180 = vunpack.c.l.b16 %v3141
      %v3181 = vunpack.c.l.b16 %v3142
      %v3182 = vunpack.c.l.b16 %v3143
      %v3183 = vunpack.c.l.b16 %v3144
      %v3184 = vunpack.c.l.b16 %v3145
      %v3185 = vunpack.c.l.b16 %v3146
      %v3186 = vunpack.c.l.b16 %v3147
      %v3187 = vunpack.c.l.b16 %v3148
      %v3188 = vunpack.c.l.b16 %v3149
      %v3189 = vunpack.c.l.b16 %v3150
      %v3190 = vunpack.c.l.b16 %v3151
      %v3191 = vunpack.c.l.b16 %v3152
      %v3192 = vunpack.c.l.b16 %v3153
      %v3193 = vpack.c.b16 %v3178, %v3177
      %v3194 = vpack.c.b16 %v3180, %v3179
      %v3195 = vpack.c.b16 %v3182, %v3181
      %v3196 = vpack.c.b16 %v3184, %v3183
      %v3197 = vpack.c.b16 %v3186, %v3185
      %v3198 = vpack.c.b16 %v3188, %v3187
      %v3199 = vpack.c.b16 %v3190, %v3189
      %v3200 = vpack.c.b16 %v3192, %v3191
      %3209 = vmatprep.subr.bf16.mxu0 0
      %3210 = vmatpush1.bf16.msra.mxu0 %v3193
      %3211 = vmatprep.subr.bf16.mxu0 0
      %3212 = vmatpush1.bf16.msra.mxu0 %v3194
      %3213 = vmatprep.subr.bf16.mxu0 0
      %3214 = vmatpush1.bf16.msra.mxu0 %v3195
      %3215 = vmatprep.subr.bf16.mxu0 0
      %3216 = vmatpush1.bf16.msra.mxu0 %v3196
      %3217 = vmatprep.subr.bf16.mxu0 0
      %3218 = vmatpush1.bf16.msra.mxu0 %v3197
      %3219 = vmatprep.subr.bf16.mxu0 0
      %3220 = vmatpush1.bf16.msra.mxu0 %v3198
      %3221 = vmatprep.subr.bf16.mxu0 0
      %3222 = vmatpush1.bf16.msra.mxu0 %v3199
      %3223 = vmatprep.subr.bf16.mxu0 0
      %3224 = vmatpush1.bf16.msra.mxu0 %v3200
      %3225 = vmatprep.subr.bf16.mxu0 0
      %3226 = vmatpush1.bf16.msra.mxu0 0
      %3227 = vmatprep.subr.bf16.mxu0 0
      %3228 = vmatpush1.bf16.msra.mxu0 0
      %3229 = vmatprep.subr.bf16.mxu0 0
      %3230 = vmatpush1.bf16.msra.mxu0 0
      %3231 = vmatprep.subr.bf16.mxu0 0
      %3232 = vmatpush1.bf16.msra.mxu0 0
      %3233 = vmatprep.subr.bf16.mxu0 0
      %3234 = vmatpush1.bf16.msra.mxu0 0
      %3235 = vmatprep.subr.bf16.mxu0 0
      %3236 = vmatpush1.bf16.msra.mxu0 0
      %3237 = vmatprep.subr.bf16.mxu0 0
      %3238 = vmatpush1.bf16.msra.mxu0 0
      %3239 = vmatprep.subr.bf16.mxu0 0
      %3240 = vmatpush1.bf16.msra.mxu0 0
      %3241 = vmatprep.mubr.bf16.mxu0 0
      %3242 = vmatmul.mubr.bf16.gmra.mrb[0].mxu0 %v3068
      %v3243 = vpop.f32.mrb[0].mxu0
      %v3244 = vadd.f32 %v3159, %v3243
      %v3245 = vpop.f32.mrb[0].mxu0
      %v3246 = vpop.f32.mrb[0].mxu0
      %v3247 = vadd.f32 %v3159, %v3246
      %v3248 = vpop.f32.mrb[0].mxu0
      %3249 = vmatprep.mubr.bf16.mxu0 0
      %3250 = vmatmul.mubr.bf16.gmra.mrb[0].mxu0 %v3072
      %v3251 = vpop.f32.mrb[0].mxu0
      %v3252 = vadd.f32 %v3159, %v3251
      %v3253 = vpop.f32.mrb[0].mxu0
      %v3254 = vpop.f32.mrb[0].mxu0
      %v3255 = vadd.f32 %v3159, %v3254
      %v3256 = vpop.f32.mrb[0].mxu0
      %3257 = vmatprep.mubr.bf16.mxu0 0
      %3258 = vmatmul.mubr.bf16.gmra.mrb[0].mxu0 %v3076
      %v3259 = vpop.f32.mrb[0].mxu0
      %v3260 = vadd.f32 %v3159, %v3259
      %v3261 = vpop.f32.mrb[0].mxu0
      %v3262 = vpop.f32.mrb[0].mxu0
      %v3263 = vadd.f32 %v3159, %v3262
      %v3264 = vpop.f32.mrb[0].mxu0
      %3265 = vmatprep.mubr.bf16.mxu0 0
      %3266 = vmatmul.mubr.bf16.gmra.mrb[0].mxu0 %v3080
      %v3267 = vpop.f32.mrb[0].mxu0
      %v3268 = vadd.f32 %v3159, %v3267
      %v3269 = vpop.f32.mrb[0].mxu0
      %v3270 = vpop.f32.mrb[0].mxu0
      %v3271 = vadd.f32 %v3159, %v3270
      %v3272 = vpop.f32.mrb[0].mxu0
      %3273 = vmatprep.mubr.bf16.mxu0 0
      %3274 = vmatmul.mubr.bf16.gmra.mrb[0].mxu0 %v3084
      %v3275 = vpop.f32.mrb[0].mxu0
      %v3276 = vadd.f32 %v3159, %v3275
      %v3277 = vpop.f32.mrb[0].mxu0
      %v3278 = vpop.f32.mrb[0].mxu0
      %v3279 = vadd.f32 %v3159, %v3278
      %v3280 = vpop.f32.mrb[0].mxu0
      %3281 = vmatprep.mubr.bf16.mxu0 0
      %3282 = vmatmul.mubr.bf16.gmra.mrb[0].mxu0 %v3088
      %v3283 = vpop.f32.mrb[0].mxu0
      %v3284 = vadd.f32 %v3159, %v3283
      %v3285 = vpop.f32.mrb[0].mxu0
      %v3286 = vpop.f32.mrb[0].mxu0
      %v3287 = vadd.f32 %v3159, %v3286
      %v3288 = vpop.f32.mrb[0].mxu0
      %3289 = vmatprep.mubr.bf16.mxu0 0
      %3290 = vmatmul.mubr.bf16.gmra.mrb[0].mxu0 %v3092
      %v3291 = vpop.f32.mrb[0].mxu0
      %v3292 = vadd.f32 %v3159, %v3291
      %v3293 = vpop.f32.mrb[0].mxu0
      %v3294 = vpop.f32.mrb[0].mxu0
      %v3295 = vadd.f32 %v3159, %v3294
      %v3296 = vpop.f32.mrb[0].mxu0
      %3297 = vmatprep.mubr.bf16.mxu0 0
      %3298 = vmatmul.mubr.bf16.gmra.mrb[0].mxu0 %v3096
      %v3299 = vpop.f32.mrb[0].mxu0
      %v3300 = vadd.f32 %v3159, %v3299
      %v3301 = vpop.f32.mrb[0].mxu0
      %v3302 = vpop.f32.mrb[0].mxu0
      %v3303 = vadd.f32 %v3159, %v3302
      %v3304 = vpop.f32.mrb[0].mxu0
      %3305 = vmatprep.mubr.bf16.mxu0 0
      %3306 = vmatmul.mubr.bf16.gmra.mrb[0].mxu0 %v3100
      %v3307 = vpop.f32.mrb[0].mxu0
      %v3308 = vadd.f32 %v3159, %v3307
      %v3309 = vpop.f32.mrb[0].mxu0
      %v3310 = vpop.f32.mrb[0].mxu0
      %v3311 = vadd.f32 %v3159, %v3310
      %v3312 = vpop.f32.mrb[0].mxu0
      %3313 = vmatprep.mubr.bf16.mxu0 0
      %3314 = vmatmul.mubr.bf16.gmra.mrb[0].mxu0 %v3104
      %v3315 = vpop.f32.mrb[0].mxu0
      %v3316 = vadd.f32 %v3159, %v3315
      %v3317 = vpop.f32.mrb[0].mxu0
      %v3318 = vpop.f32.mrb[0].mxu0
      %v3319 = vadd.f32 %v3159, %v3318
      %v3320 = vpop.f32.mrb[0].mxu0
      %3321 = vmatprep.mubr.bf16.mxu0 0
      %3322 = vmatmul.mubr.bf16.gmra.mrb[0].mxu0 %v3108
      %v3323 = vpop.f32.mrb[0].mxu0
      %v3324 = vadd.f32 %v3159, %v3323
      %v3325 = vpop.f32.mrb[0].mxu0
      %v3326 = vpop.f32.mrb[0].mxu0
      %v3327 = vadd.f32 %v3159, %v3326
      %v3328 = vpop.f32.mrb[0].mxu0
      %3329 = vmatprep.mubr.bf16.mxu0 0
      %3330 = vmatmul.mubr.bf16.gmra.mrb[0].mxu0 %v3112
      %v3331 = vpop.f32.mrb[0].mxu0
      %v3332 = vadd.f32 %v3159, %v3331
      %v3333 = vpop.f32.mrb[0].mxu0
      %v3334 = vpop.f32.mrb[0].mxu0
      %v3335 = vadd.f32 %v3159, %v3334
      %v3336 = vpop.f32.mrb[0].mxu0
      %3337 = vmatprep.mubr.bf16.mxu0 0
      %3338 = vmatmul.mubr.bf16.gmra.mrb[0].mxu0 %v3116
      %v3339 = vpop.f32.mrb[0].mxu0
      %v3340 = vadd.f32 %v3159, %v3339
      %v3341 = vpop.f32.mrb[0].mxu0
      %v3342 = vpop.f32.mrb[0].mxu0
      %v3343 = vadd.f32 %v3159, %v3342
      %v3344 = vpop.f32.mrb[0].mxu0
      %3345 = vmatprep.mubr.bf16.mxu0 0
      %3346 = vmatmul.mubr.bf16.gmra.mrb[0].mxu0 %v3120
      %v3347 = vpop.f32.mrb[0].mxu0
      %v3348 = vadd.f32 %v3159, %v3347
      %v3349 = vpop.f32.mrb[0].mxu0
      %v3350 = vpop.f32.mrb[0].mxu0
      %v3351 = vadd.f32 %v3159, %v3350
      %v3352 = vpop.f32.mrb[0].mxu0
      %3353 = vmatprep.mubr.bf16.mxu0 0
      %3354 = vmatmul.mubr.bf16.gmra.mrb[0].mxu0 %v3124
      %v3355 = vpop.f32.mrb[0].mxu0
      %v3356 = vadd.f32 %v3159, %v3355
      %v3357 = vpop.f32.mrb[0].mxu0
      %v3358 = vpop.f32.mrb[0].mxu0
      %v3359 = vadd.f32 %v3159, %v3358
      %v3360 = vpop.f32.mrb[0].mxu0
      %3361 = vmatprep.mubr.bf16.mxu0 0
      %3362 = vmatmul.mubr.bf16.gmra.mrb[0].mxu0 %v3128
      %v3363 = vpop.f32.mrb[0].mxu0
      %v3364 = vadd.f32 %v3159, %v3363
      %v3365 = vpop.f32.mrb[0].mxu0
      %v3366 = vpop.f32.mrb[0].mxu0
      %v3367 = vadd.f32 %v3159, %v3366
      %v3368 = vpop.f32.mrb[0].mxu0
      %3369 = vmatprep.mubr.bf16.mxu0 0
      %3370 = vmatmul.mubr.bf16.gmra.mrb[0].mxu0 %v3132
      %v3371 = vpop.f32.mrb[0].mxu0
      %v3372 = vadd.f32 %v3159, %v3371
      %v3373 = vpop.f32.mrb[0].mxu0
      %v3374 = vpop.f32.mrb[0].mxu0
      %v3375 = vadd.f32 %v3159, %v3374
      %v3376 = vpop.f32.mrb[0].mxu0
      %3377 = vmatprep.mubr.bf16.mxu0 0
      %3378 = vmatmul.mubr.bf16.gmra.mrb[0].mxu0 %v3136
      %v3379 = vpop.f32.mrb[0].mxu0
      %v3380 = vadd.f32 %v3159, %v3379
      %v3381 = vpop.f32.mrb[0].mxu0
      %v3382 = vpop.f32.mrb[0].mxu0
      %v3383 = vadd.f32 %v3159, %v3382
      %v3384 = vpop.f32.mrb[0].mxu0
      %3385 = vdwg.mxu0
      %3386 = vst [vmem:[%s334] sm:$0xff] %v3244
      %3387 = vst [vmem:[%s334 + $0x8] sm:$0xff] %v3247
      %3388 = vst [vmem:[%s334 + $0x10] sm:$0xff] %v3252
      %3389 = vst [vmem:[%s334 + $0x18] sm:$0xff] %v3255
      %3390 = vst [vmem:[%s334 + $0x20] sm:$0xff] %v3260
      %3391 = vst [vmem:[%s334 + $0x28] sm:$0xff] %v3263
      %3392 = vst [vmem:[%s334 + $0x30] sm:$0xff] %v3268
      %3393 = vst [vmem:[%s334 + $0x38] sm:$0xff] %v3271
      %3394 = vst [vmem:[%s334 + $0x40] sm:$0xff] %v3276
      %3395 = vst [vmem:[%s334 + $0x48] sm:$0xff] %v3279
      %3396 = vst [vmem:[%s334 + $0x50] sm:$0xff] %v3284
      %3397 = vst [vmem:[%s334 + $0x58] sm:$0xff] %v3287
      %3398 = vst [vmem:[%s334 + $0x60] sm:$0xff] %v3292
      %3399 = vst [vmem:[%s334 + $0x68] sm:$0xff] %v3295
      %3400 = vst [vmem:[%s334 + $0x70] sm:$0xff] %v3300
      %3401 = vst [vmem:[%s334 + $0x78] sm:$0xff] %v3303
      %3402 = vst [vmem:[%s334 + $0x80] sm:$0xff] %v3308
      %3403 = vst [vmem:[%s334 + $0x88] sm:$0xff] %v3311
      %3404 = vst [vmem:[%s334 + $0x90] sm:$0xff] %v3316
      %3405 = vst [vmem:[%s334 + $0x98] sm:$0xff] %v3319
      %3406 = vst [vmem:[%s334 + $0xa0] sm:$0xff] %v3324
      %3407 = vst [vmem:[%s334 + $0xa8] sm:$0xff] %v3327
      %3408 = vst [vmem:[%s334 + $0xb0] sm:$0xff] %v3332
      %3409 = vst [vmem:[%s334 + $0xb8] sm:$0xff] %v3335
      %3410 = vst [vmem:[%s334 + $0xc0] sm:$0xff] %v3340
      %3411 = vst [vmem:[%s334 + $0xc8] sm:$0xff] %v3343
      %3412 = vst [vmem:[%s334 + $0xd0] sm:$0xff] %v3348
      %3413 = vst [vmem:[%s334 + $0xd8] sm:$0xff] %v3351
      %3414 = vst [vmem:[%s334 + $0xe0] sm:$0xff] %v3356
      %3415 = vst [vmem:[%s334 + $0xe8] sm:$0xff] %v3359
      %3416 = vst [vmem:[%s334 + $0xf0] sm:$0xff] %v3364
      %3417 = vst [vmem:[%s334 + $0xf8] sm:$0xff] %v3367
      %3418 = vst [vmem:[%s334 + $0x100] sm:$0xff] %v3372
      %3419 = vst [vmem:[%s334 + $0x108] sm:$0xff] %v3375
      %3420 = vst [vmem:[%s334 + $0x110] sm:$0xff] %v3380
      %3421 = vst [vmem:[%s334 + $0x118] sm:$0xff] %v3383
      %s3422 = smul.u32 36, %s20
      %p3423 = scmp.lt.s32.totalorder %s3422, 71
      %s3424 = scalar_select %p3423, %s3422, 71
      %s3425 = smul.addr %s3424, 8
      %s3426 = scalar_lea.vmem %s9, %s3425
      // Predicated region
      $region57: #{gaussian_network_forward.3} parent=55 // pred_check
        %p3427 = pneg %p232
      $region58: #{gaussian_network_forward.3} parent=55 // pred_check_branch
        %3429 = sbr.rel (%p3427) target = $region60
      $region59: #{gaussian_network_forward.3} parent=55 // pred_region
        %s3430 = smul.u32 36, %s20
      $region60: #{gaussian_network_forward.3} parent=55 // pred_fallthru
        _
    $region56: #{gaussian_network_forward.3} parent=5 // pred_fallthru
      _
    %p3431 = scmp.le.s32.totalorder 2, %s15
    // Predicated region
    $region61: #{gaussian_network_forward.3} parent=5 // pred_check
      %p3432 = pneg %p3431
    $region62: #{gaussian_network_forward.3} parent=5 // pred_check_branch
      %3434 = sbr.rel (%p3432) target = $region64
    $region63: #{gaussian_network_forward.3} parent=5 // pred_region
      %s3435 = ssub.s32 %s15, 2
      // Predicated region
      $region65: #{gaussian_network_forward.3} parent=63 // pred_check
        %p3436 = pneg %p238
      $region66: #{gaussian_network_forward.3} parent=63 // pred_check_branch
        %3438 = sbr.rel (%p3436) target = $region68
      $region67: #{gaussian_network_forward.3} parent=63 // pred_region
        %s3439 = smul.u32 36, %s21
        %p3440 = scmp.lt.s32.totalorder %s3439, 71
        %s3441 = scalar_select %p3440, %s3439, 71
        %s3442 = smul.addr %s3441, 8
        %s3443 = scalar_lea.vmem %s9, %s3442
      $region68: #{gaussian_network_forward.3} parent=63 // pred_fallthru
        _
    $region64: #{gaussian_network_forward.3} parent=5 // pred_fallthru
      _
  $region6: #{gaussian_network_forward.3} parent=0 // loop_footer
    %s19 = sadd.s32 1, %s15
  $region7: #{gaussian_network_forward.3} parent=0 // loop_footer_branch
    %14 = sbr.rel target = $region3
  $region8: #{gaussian_network_forward.3} parent=0 // loop_exit
    _

// kernel: gaussian_network_forward.4
$region0: #{gaussian_network_forward.4}
  #allocation0 [shape = 'u32[]', space=smem, size = 0x4, offset = 0x4, fixed_abs, tag = 'smem constant byte address 0x4 - core index']
  #allocation1 [shape = 'u32[144,128]{1,0:T(1,128)}', space=vmem, size = 0x12000, scoped, tag = 'internal scratch']
  %s0 = inlined_call_operand.vmem [shape: bf16[128,264], index: 0, kind: input, shape index: {}]
  %s1 = inlined_call_operand.vmem [shape: bf16[264,64], index: 1, kind: input, shape index: {}]
  %s2 = inlined_call_operand.vmem [shape: f32[1,64], index: 2, kind: input, shape index: {}]
  %s3 = inlined_call_operand.vmem [shape: bf16[64,64], index: 3, kind: input, shape index: {}]
  %s4 = inlined_call_operand.vmem [shape: f32[1,64], index: 4, kind: input, shape index: {}]
  %s5 = inlined_call_operand.vmem [shape: bf16[64,24], index: 5, kind: input, shape index: {}]
  %s6 = inlined_call_operand.vmem [shape: f32[1,24], index: 6, kind: input, shape index: {}]
  %s7 = inlined_call_operand.vmem [shape: f32[128,24], index: 7, kind: output, shape index: {}]
  %s8 = sld [smem:[#allocation0]]
  $region61: #{gaussian_network_forward.4} parent=0
    _
  %s10 = ssub.s32 1, %s8
  %s11 = scalar_select 0, %s10, %s8
  loop: start=0, step=1, limit=4
  $region2: #{gaussian_network_forward.4} parent=0 // loop_pre_header
    _
  $region3: #{gaussian_network_forward.4} parent=0 // loop_header
    %s13 = sphi 0, %s17
    %p14 = scmp.ge.s32.totalorder %s13, 4
    %s23 = sphi 0, %s25
    %s26 = sphi 0, %s23
    %s27 = sphi 0, %s26
    %s43 = sphi 0, %s27
    %s47 = sphi 0, %s47
    %s49 = sphi 0, %s47
    %s50 = sphi 0, %s49
    %s64 = sphi 0, %s50
    %s68 = sphi 0, %s68
    %s70 = sphi 0, %s68
    %s71 = sphi 0, %s70
    %s85 = sphi 0, %s71
    %s89 = sphi 0, %s89
    %s91 = sphi 0, %s89
    %s92 = sphi 0, %s91
    %s106 = sphi 0, %s92
    %s110 = sphi 0, %s110
    %s112 = sphi 0, %s110
    %s113 = sphi 0, %s112
    %s127 = sphi 0, %s113
    %s131 = sphi 0, %s131
    %s133 = sphi 0, %s131
    %s134 = sphi 0, %s133
    %s148 = sphi 0, %s134
    %s152 = sphi 0, %s152
    %s154 = sphi 0, %s152
    %s155 = sphi 0, %s154
    %s169 = sphi 0, %s155
    %s175 = sphi 0, %s177
    %s178 = sphi 0, %s175
    %s179 = sphi 0, %s178
    %s195 = sphi 0, %s179
  $region4: #{gaussian_network_forward.4} parent=0 // loop_header_branch
    %16 = sbr.rel (%p14) target = $region8
  $region5: #{gaussian_network_forward.4} parent=0 // loop_body
    %s18 = ssub.s32 %s13, 1
    %s19 = ssub.s32 %s13, 2
    %s20 = sadd.s32 %s13, 1
    %s21 = ssub.s32 %s13, %s20
    %p22 = scmp.eq.s32.totalorder %s21, 0
    %s24 = sadd.s32 %s23, 1
    %s25 = scalar_select %p22, %s23, %s24
    %p28 = pneg %p22
    %p29 = scmp.eq.s32.totalorder %s13, 1
    %p30 = por %p28, %p29
    %p31 = scmp.ne.s32.totalorder %s23, %s26
    %p32 = scmp.eq.s32.totalorder %s13, 0
    %p33 = por %p31, %p32
    %p34 = scmp.ne.s32.totalorder %s23, %s26
    %p35 = scmp.eq.s32.totalorder %s18, 1
    %p36 = por %p34, %p35
    %p37 = scmp.ne.s32.totalorder %s26, %s27
    %p38 = scmp.eq.s32.totalorder %s18, 0
    %p39 = por %p37, %p38
    %p40 = scmp.ne.s32.totalorder %s26, %s27
    %p41 = scmp.eq.s32.totalorder %s19, 1
    %p42 = por %p40, %p41
    %p44 = scmp.ne.s32.totalorder %s27, %s43
    %p45 = scmp.eq.s32.totalorder %s19, 0
    %p46 = por %p44, %p45
    %s48 = sadd.s32 %s47, 1
    %p51 = scmp.eq.s32.totalorder %s13, 1
    %p52 = scmp.ne.s32.totalorder %s47, %s49
    %p53 = scmp.eq.s32.totalorder %s13, 0
    %p54 = por %p52, %p53
    %p55 = scmp.ne.s32.totalorder %s47, %s49
    %p56 = scmp.eq.s32.totalorder %s18, 1
    %p57 = por %p55, %p56
    %p58 = scmp.ne.s32.totalorder %s49, %s50
    %p59 = scmp.eq.s32.totalorder %s18, 0
    %p60 = por %p58, %p59
    %p61 = scmp.ne.s32.totalorder %s49, %s50
    %p62 = scmp.eq.s32.totalorder %s19, 1
    %p63 = por %p61, %p62
    %p65 = scmp.ne.s32.totalorder %s50, %s64
    %p66 = scmp.eq.s32.totalorder %s19, 0
    %p67 = por %p65, %p66
    %s69 = sadd.s32 %s68, 1
    %p72 = scmp.eq.s32.totalorder %s13, 1
    %p73 = scmp.ne.s32.totalorder %s68, %s70
    %p74 = scmp.eq.s32.totalorder %s13, 0
    %p75 = por %p73, %p74
    %p76 = scmp.ne.s32.totalorder %s68, %s70
    %p77 = scmp.eq.s32.totalorder %s18, 1
    %p78 = por %p76, %p77
    %p79 = scmp.ne.s32.totalorder %s70, %s71
    %p80 = scmp.eq.s32.totalorder %s18, 0
    %p81 = por %p79, %p80
    %p82 = scmp.ne.s32.totalorder %s70, %s71
    %p83 = scmp.eq.s32.totalorder %s19, 1
    %p84 = por %p82, %p83
    %p86 = scmp.ne.s32.totalorder %s71, %s85
    %p87 = scmp.eq.s32.totalorder %s19, 0
    %p88 = por %p86, %p87
    %s90 = sadd.s32 %s89, 1
    %p93 = scmp.eq.s32.totalorder %s13, 1
    %p94 = scmp.ne.s32.totalorder %s89, %s91
    %p95 = scmp.eq.s32.totalorder %s13, 0
    %p96 = por %p94, %p95
    %p97 = scmp.ne.s32.totalorder %s89, %s91
    %p98 = scmp.eq.s32.totalorder %s18, 1
    %p99 = por %p97, %p98
    %p100 = scmp.ne.s32.totalorder %s91, %s92
    %p101 = scmp.eq.s32.totalorder %s18, 0
    %p102 = por %p100, %p101
    %p103 = scmp.ne.s32.totalorder %s91, %s92
    %p104 = scmp.eq.s32.totalorder %s19, 1
    %p105 = por %p103, %p104
    %p107 = scmp.ne.s32.totalorder %s92, %s106
    %p108 = scmp.eq.s32.totalorder %s19, 0
    %p109 = por %p107, %p108
    %s111 = sadd.s32 %s110, 1
    %p114 = scmp.eq.s32.totalorder %s13, 1
    %p115 = scmp.ne.s32.totalorder %s110, %s112
    %p116 = scmp.eq.s32.totalorder %s13, 0
    %p117 = por %p115, %p116
    %p118 = scmp.ne.s32.totalorder %s110, %s112
    %p119 = scmp.eq.s32.totalorder %s18, 1
    %p120 = por %p118, %p119
    %p121 = scmp.ne.s32.totalorder %s112, %s113
    %p122 = scmp.eq.s32.totalorder %s18, 0
    %p123 = por %p121, %p122
    %p124 = scmp.ne.s32.totalorder %s112, %s113
    %p125 = scmp.eq.s32.totalorder %s19, 1
    %p126 = por %p124, %p125
    %p128 = scmp.ne.s32.totalorder %s113, %s127
    %p129 = scmp.eq.s32.totalorder %s19, 0
    %p130 = por %p128, %p129
    %s132 = sadd.s32 %s131, 1
    %p135 = scmp.eq.s32.totalorder %s13, 1
    %p136 = scmp.ne.s32.totalorder %s131, %s133
    %p137 = scmp.eq.s32.totalorder %s13, 0
    %p138 = por %p136, %p137
    %p139 = scmp.ne.s32.totalorder %s131, %s133
    %p140 = scmp.eq.s32.totalorder %s18, 1
    %p141 = por %p139, %p140
    %p142 = scmp.ne.s32.totalorder %s133, %s134
    %p143 = scmp.eq.s32.totalorder %s18, 0
    %p144 = por %p142, %p143
    %p145 = scmp.ne.s32.totalorder %s133, %s134
    %p146 = scmp.eq.s32.totalorder %s19, 1
    %p147 = por %p145, %p146
    %p149 = scmp.ne.s32.totalorder %s134, %s148
    %p150 = scmp.eq.s32.totalorder %s19, 0
    %p151 = por %p149, %p150
    %s153 = sadd.s32 %s152, 1
    %p156 = scmp.eq.s32.totalorder %s13, 1
    %p157 = scmp.ne.s32.totalorder %s152, %s154
    %p158 = scmp.eq.s32.totalorder %s13, 0
    %p159 = por %p157, %p158
    %p160 = scmp.ne.s32.totalorder %s152, %s154
    %p161 = scmp.eq.s32.totalorder %s18, 1
    %p162 = por %p160, %p161
    %p163 = scmp.ne.s32.totalorder %s154, %s155
    %p164 = scmp.eq.s32.totalorder %s18, 0
    %p165 = por %p163, %p164
    %p166 = scmp.ne.s32.totalorder %s154, %s155
    %p167 = scmp.eq.s32.totalorder %s19, 1
    %p168 = por %p166, %p167
    %p170 = scmp.ne.s32.totalorder %s155, %s169
    %p171 = scmp.eq.s32.totalorder %s19, 0
    %p172 = por %p170, %p171
    %s173 = ssub.s32 %s13, %s20
    %p174 = scmp.eq.s32.totalorder %s173, 0
    %s176 = sadd.s32 %s175, 1
    %s177 = scalar_select %p174, %s175, %s176
    %p180 = pneg %p174
    %p181 = scmp.eq.s32.totalorder %s13, 1
    %p182 = por %p180, %p181
    %p183 = scmp.ne.s32.totalorder %s175, %s178
    %p184 = scmp.eq.s32.totalorder %s13, 0
    %p185 = por %p183, %p184
    %p186 = scmp.ne.s32.totalorder %s175, %s178
    %p187 = scmp.eq.s32.totalorder %s18, 1
    %p188 = por %p186, %p187
    %p189 = scmp.ne.s32.totalorder %s178, %s179
    %p190 = scmp.eq.s32.totalorder %s18, 0
    %p191 = por %p189, %p190
    %p192 = scmp.ne.s32.totalorder %s178, %s179
    %p193 = scmp.eq.s32.totalorder %s19, 1
    %p194 = por %p192, %p193
    %p196 = scmp.ne.s32.totalorder %s179, %s195
    %p197 = scmp.eq.s32.totalorder %s19, 0
    %p198 = por %p196, %p197
    %p199 = scmp.le.s32.totalorder 1, %s13
    %p200 = scmp.lt.s32.totalorder %s13, 3
    %p201 = pnand %p199, %p200
    %p202 = pneg %p201
    // Predicated region
    $region9: #{gaussian_network_forward.4} parent=5 // pred_check
      _
    $region10: #{gaussian_network_forward.4} parent=5 // pred_check_branch
      %204 = sbr.rel (%p201) target = $region12
    $region11: #{gaussian_network_forward.4} parent=5 // pred_region
      %s205 = ssub.s32 %s13, 1
      // Predicated region
      $region13: #{gaussian_network_forward.4} parent=11 // pred_check
        %p206 = pneg %p60
      $region14: #{gaussian_network_forward.4} parent=11 // pred_check_branch
        %208 = sbr.rel (%p206) target = $region16
      $region15: #{gaussian_network_forward.4} parent=11 // pred_region
        _
      $region16: #{gaussian_network_forward.4} parent=11 // pred_fallthru
        _
      // Predicated region
      $region17: #{gaussian_network_forward.4} parent=11 // pred_check
        %p209 = pneg %p81
      $region18: #{gaussian_network_forward.4} parent=11 // pred_check_branch
        %211 = sbr.rel (%p209) target = $region20
      $region19: #{gaussian_network_forward.4} parent=11 // pred_region
        _
      $region20: #{gaussian_network_forward.4} parent=11 // pred_fallthru
        _
      // Predicated region
      $region21: #{gaussian_network_forward.4} parent=11 // pred_check
        %p212 = pneg %p102
      $region22: #{gaussian_network_forward.4} parent=11 // pred_check_branch
        %214 = sbr.rel (%p212) target = $region24
      $region23: #{gaussian_network_forward.4} parent=11 // pred_region
        _
      $region24: #{gaussian_network_forward.4} parent=11 // pred_fallthru
        _
      // Predicated region
      $region25: #{gaussian_network_forward.4} parent=11 // pred_check
        %p215 = pneg %p123
      $region26: #{gaussian_network_forward.4} parent=11 // pred_check_branch
        %217 = sbr.rel (%p215) target = $region28
      $region27: #{gaussian_network_forward.4} parent=11 // pred_region
        _
      $region28: #{gaussian_network_forward.4} parent=11 // pred_fallthru
        _
      // Predicated region
      $region29: #{gaussian_network_forward.4} parent=11 // pred_check
        %p218 = pneg %p144
      $region30: #{gaussian_network_forward.4} parent=11 // pred_check_branch
        %220 = sbr.rel (%p218) target = $region32
      $region31: #{gaussian_network_forward.4} parent=11 // pred_region
        _
      $region32: #{gaussian_network_forward.4} parent=11 // pred_fallthru
        _
      // Predicated region
      $region33: #{gaussian_network_forward.4} parent=11 // pred_check
        %p221 = pneg %p165
      $region34: #{gaussian_network_forward.4} parent=11 // pred_check_branch
        %223 = sbr.rel (%p221) target = $region36
      $region35: #{gaussian_network_forward.4} parent=11 // pred_region
        _
      $region36: #{gaussian_network_forward.4} parent=11 // pred_fallthru
        _
    $region12: #{gaussian_network_forward.4} parent=5 // pred_fallthru
      _
    %p224 = scmp.lt.s32.totalorder %s13, 2
    // Predicated region
    $region37: #{gaussian_network_forward.4} parent=5 // pred_check
      %p225 = pneg %p224
    $region38: #{gaussian_network_forward.4} parent=5 // pred_check_branch
      %227 = sbr.rel (%p225) target = $region40
    $region39: #{gaussian_network_forward.4} parent=5 // pred_region
      // Predicated region
      $region41: #{gaussian_network_forward.4} parent=39 // pred_check
        %p228 = pneg %p33
      $region42: #{gaussian_network_forward.4} parent=39 // pred_check_branch
        %230 = sbr.rel (%p228) target = $region44
      $region43: #{gaussian_network_forward.4} parent=39 // pred_region
        %s231 = smul.u32 8, %s13
        %p232 = scmp.lt.s32.totalorder %s231, 15
        %s233 = scalar_select %p232, %s231, 15
        %s234 = smul.addr %s233, 3
        %s235 = smul.addr %s234, 4
        %s236 = scalar_lea.vmem %s0, %s235
        %s237 = smul.u32 8, %s13
      $region44: #{gaussian_network_forward.4} parent=39 // pred_fallthru
        _
    $region40: #{gaussian_network_forward.4} parent=5 // pred_fallthru
      _
    %p238 = scmp.le.s32.totalorder 1, %s13
    %p239 = scmp.lt.s32.totalorder %s13, 3
    %p240 = pnand %p238, %p239
    %p241 = pneg %p240
    // Predicated region
    $region45: #{gaussian_network_forward.4} parent=5 // pred_check
      _
    $region46: #{gaussian_network_forward.4} parent=5 // pred_check_branch
      %243 = sbr.rel (%p240) target = $region48
    $region47: #{gaussian_network_forward.4} parent=5 // pred_region
      %s244 = ssub.s32 %s13, 1
      %s245 = smul.u32 8, %s18
      %p246 = scmp.lt.s32.totalorder %s245, 15
      %s247 = scalar_select %p246, %s245, 15
      %s248 = smul.addr %s247, 3
      %s249 = smul.addr %s248, 4
      %s250 = scalar_lea.vmem %s0, %s249
      %p251 = pneg %p39
      %p252 = pneg %p36
      %p253 = pneg %p60
      %p254 = pneg %p57
      %p255 = pneg %p81
      %p256 = pneg %p78
      %p257 = pneg %p102
      %p258 = pneg %p99
      %p259 = pneg %p123
      %p260 = pneg %p120
      %p261 = pneg %p144
      %p262 = pneg %p141
      %p263 = pneg %p165
      %p264 = pneg %p162
      %p265 = pneg %p191
      %p266 = pneg %p188
      %s267 = smul.u32 8, %s18
      %p268 = scmp.lt.s32.totalorder %s267, 15
      %s269 = scalar_select %p268, %s267, 15
      %s270 = smul.addr %s269, 8
      %s271 = scalar_lea.vmem %s7, %s270
      %s272 = smul.u32 8, %s18
      %p273 = scmp.lt.s32.totalorder %s272, 15
      %s274 = scalar_select %p273, %s272, 15
      %s275 = smul.addr %s274, 3
      %s276 = smul.addr %s275, 4
      %s277 = scalar_lea.vmem %s0, %s276
      %s278 = smul.u32 8, %s18
      %s279 = smul.u32 8, %s18
      %p280 = scmp.lt.s32.totalorder %s279, 15
      %s281 = scalar_select %p280, %s279, 15
      %s282 = smul.addr %s281, 8
      %s283 = scalar_lea.vmem %s7, %s282
      %s284 = smul.u32 8, %s18
      %v286 = vld [vmem:[%s277] sm:$0xff]
      %v287 = vld [vmem:[%s277 + $0x8] sm:$0xf]
      %v288 = vld [vmem:[%s277 + $0xc] sm:$0xff]
      %v289 = vld [vmem:[%s277 + $0x14] sm:$0xf]
      %v290 = vld [vmem:[%s277 + $0x18] sm:$0xff]
      %v291 = vld [vmem:[%s277 + $0x20] sm:$0xf]
      %v292 = vld [vmem:[%s277 + $0x24] sm:$0xff]
      %v293 = vld [vmem:[%s277 + $0x2c] sm:$0xf]
      %v294 = vld [vmem:[%s277 + $0x30] sm:$0xff]
      %v295 = vld [vmem:[%s277 + $0x38] sm:$0xf]
      %v296 = vld [vmem:[%s277 + $0x3c] sm:$0xff]
      %v297 = vld [vmem:[%s277 + $0x44] sm:$0xf]
      %v298 = vld [vmem:[%s277 + $0x48] sm:$0xff]
      %v299 = vld [vmem:[%s277 + $0x50] sm:$0xf]
      %v300 = vld [vmem:[%s277 + $0x54] sm:$0xff]
      %v301 = vld [vmem:[%s277 + $0x5c] sm:$0xf]
      %v302 = vld [vmem:[%s1] sm:$0xf]
      %v303 = vld [vmem:[%s1 + $0x4] sm:$0xf]
      %v304 = vld [vmem:[%s1 + $0x8] sm:$0xf]
      %v305 = vld [vmem:[%s1 + $0xc] sm:$0xf]
      %v306 = vld [vmem:[%s1 + $0x10] sm:$0xf]
      %v307 = vld [vmem:[%s1 + $0x14] sm:$0xf]
      %v308 = vld [vmem:[%s1 + $0x18] sm:$0xf]
      %v309 = vld [vmem:[%s1 + $0x1c] sm:$0xf]
      %v310 = vld [vmem:[%s1 + $0x20] sm:$0xf]
      %v311 = vld [vmem:[%s1 + $0x24] sm:$0xf]
      %v312 = vld [vmem:[%s1 + $0x28] sm:$0xf]
      %v313 = vld [vmem:[%s1 + $0x2c] sm:$0xf]
      %v314 = vld [vmem:[%s1 + $0x30] sm:$0xf]
      %v315 = vld [vmem:[%s1 + $0x34] sm:$0xf]
      %v316 = vld [vmem:[%s1 + $0x38] sm:$0xf]
      %v317 = vld [vmem:[%s1 + $0x3c] sm:$0xf]
      %v318 = vld [vmem:[%s1 + $0x40] sm:$0xf]
      %v319 = vld [vmem:[%s1 + $0x44] sm:$0xf]
      %v320 = vld [vmem:[%s1 + $0x48] sm:$0xf]
      %v321 = vld [vmem:[%s1 + $0x4c] sm:$0xf]
      %v322 = vld [vmem:[%s1 + $0x50] sm:$0xf]
      %v323 = vld [vmem:[%s1 + $0x54] sm:$0xf]
      %v324 = vld [vmem:[%s1 + $0x58] sm:$0xf]
      %v325 = vld [vmem:[%s1 + $0x5c] sm:$0xf]
      %v326 = vld [vmem:[%s1 + $0x60] sm:$0xf]
      %v327 = vld [vmem:[%s1 + $0x64] sm:$0xf]
      %v328 = vld [vmem:[%s1 + $0x68] sm:$0xf]
      %v329 = vld [vmem:[%s1 + $0x6c] sm:$0xf]
      %v330 = vld [vmem:[%s1 + $0x70] sm:$0xf]
      %v331 = vld [vmem:[%s1 + $0x74] sm:$0xf]
      %v332 = vld [vmem:[%s1 + $0x78] sm:$0xf]
      %v333 = vld [vmem:[%s1 + $0x7c] sm:$0xf]
      %v334 = vld [vmem:[%s1 + $0x80] sm:$0xf]
      %v335 = vld [vmem:[%s2] sm:$0x1]
      %v337 = vlaneseq
      %v338 = vshrl.u32 %v337, 7
      %v339 = vsub.s32 0, %v338
      %v340 = vrot.slane %v335, %v339
      %v358 = vunpack.c.l.b16 %v286
      %v359 = vunpack.c.h.b16 %v286
      %v360 = vunpack.c.l.b16 %v287
      %v361 = vunpack.c.l.b16 %v288
      %v362 = vunpack.c.h.b16 %v288
      %v363 = vunpack.c.l.b16 %v289
      %v364 = vunpack.c.l.b16 %v290
      %v365 = vunpack.c.h.b16 %v290
      %v366 = vunpack.c.l.b16 %v291
      %v367 = vunpack.c.l.b16 %v292
      %v368 = vunpack.c.h.b16 %v292
      %v369 = vunpack.c.l.b16 %v293
      %v370 = vunpack.c.l.b16 %v294
      %v371 = vunpack.c.h.b16 %v294
      %v372 = vunpack.c.l.b16 %v295
      %v373 = vunpack.c.l.b16 %v296
      %v374 = vunpack.c.h.b16 %v296
      %v375 = vunpack.c.l.b16 %v297
      %v376 = vunpack.c.l.b16 %v298
      %v377 = vunpack.c.h.b16 %v298
      %v378 = vunpack.c.l.b16 %v299
      %v379 = vunpack.c.l.b16 %v300
      %v380 = vunpack.c.h.b16 %v300
      %v381 = vunpack.c.l.b16 %v301
      %v382 = vpack.c.b16 %v361, %v358
      %v383 = vpack.c.b16 %v362, %v359
      %v384 = vpack.c.b16 %v363, %v360
      %v385 = vpack.c.b16 %v367, %v364
      %v386 = vpack.c.b16 %v368, %v365
      %v387 = vpack.c.b16 %v369, %v366
      %v388 = vpack.c.b16 %v373, %v370
      %v389 = vpack.c.b16 %v374, %v371
      %v390 = vpack.c.b16 %v375, %v372
      %v391 = vpack.c.b16 %v379, %v376
      %v392 = vpack.c.b16 %v380, %v377
      %v393 = vpack.c.b16 %v381, %v378
      %v435 = vunpack.c.l.b16 %v302
      %v436 = vunpack.c.l.b16 %v303
      %v437 = vunpack.c.l.b16 %v304
      %v438 = vunpack.c.l.b16 %v305
      %v439 = vunpack.c.l.b16 %v306
      %v440 = vunpack.c.l.b16 %v307
      %v441 = vunpack.c.l.b16 %v308
      %v442 = vunpack.c.l.b16 %v309
      %v443 = vunpack.c.l.b16 %v310
      %v444 = vunpack.c.l.b16 %v311
      %v445 = vunpack.c.l.b16 %v312
      %v446 = vunpack.c.l.b16 %v313
      %v447 = vunpack.c.l.b16 %v314
      %v448 = vunpack.c.l.b16 %v315
      %v449 = vunpack.c.l.b16 %v316
      %v450 = vunpack.c.l.b16 %v317
      %v451 = vunpack.c.l.b16 %v318
      %v452 = vunpack.c.l.b16 %v319
      %v453 = vunpack.c.l.b16 %v320
      %v454 = vunpack.c.l.b16 %v321
      %v455 = vunpack.c.l.b16 %v322
      %v456 = vunpack.c.l.b16 %v323
      %v457 = vunpack.c.l.b16 %v324
      %v458 = vunpack.c.l.b16 %v325
      %v459 = vunpack.c.l.b16 %v326
      %v460 = vunpack.c.l.b16 %v327
      %v461 = vunpack.c.l.b16 %v328
      %v462 = vunpack.c.l.b16 %v329
      %v463 = vunpack.c.l.b16 %v330
      %v464 = vunpack.c.l.b16 %v331
      %v465 = vunpack.c.l.b16 %v332
      %v466 = vunpack.c.l.b16 %v333
      %v467 = vunpack.c.l.b16 %v334
      %v468 = vpack.c.b16 %v436, %v435
      %v469 = vpack.c.b16 %v438, %v437
      %v470 = vpack.c.b16 %v440, %v439
      %v471 = vpack.c.b16 %v442, %v441
      %v472 = vpack.c.b16 %v444, %v443
      %v473 = vpack.c.b16 %v446, %v445
      %v474 = vpack.c.b16 %v448, %v447
      %v475 = vpack.c.b16 %v450, %v449
      %v476 = vpack.c.b16 %v452, %v451
      %v477 = vpack.c.b16 %v454, %v453
      %v478 = vpack.c.b16 %v456, %v455
      %v479 = vpack.c.b16 %v458, %v457
      %v480 = vpack.c.b16 %v460, %v459
      %v481 = vpack.c.b16 %v462, %v461
      %v482 = vpack.c.b16 %v464, %v463
      %v483 = vpack.c.b16 %v466, %v465
      %v484 = vpack.c.b16 %v467, %v467
      %vm501 = vcmask 64512
      %v503 = vsel %vm501, %v384, 0
      %v506 = vsel %vm501, %v387, 0
      %v509 = vsel %vm501, %v390, 0
      %v512 = vsel %vm501, %v393, 0
      %vm514 = vcmask 1043456
      %v516 = vsel %vm514, %v484, 0
      %518 = vmatprep.subr.bf16.mxu0 0
      %519 = vmatpush1.bf16.msra.mxu0 %v468
      %520 = vmatprep.subr.bf16.mxu0 0
      %521 = vmatpush1.bf16.msra.mxu0 %v469
      %522 = vmatprep.subr.bf16.mxu0 0
      %523 = vmatpush1.bf16.msra.mxu0 %v470
      %524 = vmatprep.subr.bf16.mxu0 0
      %525 = vmatpush1.bf16.msra.mxu0 %v471
      %526 = vmatprep.subr.bf16.mxu0 0
      %527 = vmatpush1.bf16.msra.mxu0 %v472
      %528 = vmatprep.subr.bf16.mxu0 0
      %529 = vmatpush1.bf16.msra.mxu0 %v473
      %530 = vmatprep.subr.bf16.mxu0 0
      %531 = vmatpush1.bf16.msra.mxu0 %v474
      %532 = vmatprep.subr.bf16.mxu0 0
      %533 = vmatpush1.bf16.msra.mxu0 %v475
      %534 = vmatprep.subr.bf16.mxu0 0
      %535 = vmatpush1.bf16.msra.mxu0 %v476
      %536 = vmatprep.subr.bf16.mxu0 0
      %537 = vmatpush1.bf16.msra.mxu0 %v477
      %538 = vmatprep.subr.bf16.mxu0 0
      %539 = vmatpush1.bf16.msra.mxu0 %v478
      %540 = vmatprep.subr.bf16.mxu0 0
      %541 = vmatpush1.bf16.msra.mxu0 %v479
      %542 = vmatprep.subr.bf16.mxu0 0
      %543 = vmatpush1.bf16.msra.mxu0 %v480
      %544 = vmatprep.subr.bf16.mxu0 0
      %545 = vmatpush1.bf16.msra.mxu0 %v481
      %546 = vmatprep.subr.bf16.mxu0 0
      %547 = vmatpush1.bf16.msra.mxu0 %v482
      %548 = vmatprep.subr.bf16.mxu0 0
      %549 = vmatpush1.bf16.msra.mxu0 %v483
      %550 = vmatprep.mubr.bf16.mxu0 %v383
      %551 = vmatmul.mubr.bf16.gmra.mrb[0].mxu0 %v382
      %v552 = vpop.f32.mrb[0].mxu0
      %v553 = vadd.f32 %v340, %v552
      %v554 = vpop.f32.mrb[0].mxu0
      %v555 = vpop.f32.mrb[0].mxu0
      %v556 = vadd.f32 %v340, %v555
      %v557 = vpop.f32.mrb[0].mxu0
      %558 = vmatprep.mubr.bf16.mxu0 %v386
      %559 = vmatmul.mubr.bf16.gmra.mrb[0].mxu0 %v385
      %v560 = vpop.f32.mrb[0].mxu0
      %v561 = vadd.f32 %v340, %v560
      %v562 = vpop.f32.mrb[0].mxu0
      %v563 = vpop.f32.mrb[0].mxu0
      %v564 = vadd.f32 %v340, %v563
      %v565 = vpop.f32.mrb[0].mxu0
      %566 = vmatprep.mubr.bf16.mxu0 %v389
      %567 = vmatmul.mubr.bf16.gmra.mrb[0].mxu0 %v388
      %v568 = vpop.f32.mrb[0].mxu0
      %v569 = vadd.f32 %v340, %v568
      %v570 = vpop.f32.mrb[0].mxu0
      %v571 = vpop.f32.mrb[0].mxu0
      %v572 = vadd.f32 %v340, %v571
      %v573 = vpop.f32.mrb[0].mxu0
      %574 = vmatprep.mubr.bf16.mxu0 %v392
      %575 = vmatmul.mubr.bf16.gmra.mrb[0].mxu0 %v391
      %v576 = vpop.f32.mrb[0].mxu0
      %v577 = vadd.f32 %v340, %v576
      %v578 = vpop.f32.mrb[0].mxu0
      %v579 = vpop.f32.mrb[0].mxu0
      %v580 = vadd.f32 %v340, %v579
      %v581 = vpop.f32.mrb[0].mxu0
      %582 = vdwg.mxu0
      %583 = vmatprep.subr.bf16.mxu0 0
      %584 = vmatpush1.bf16.msra.mxu0 %v516
      %585 = vmatprep.subr.bf16.mxu0 0
      %586 = vmatpush1.bf16.msra.mxu0 0
      %587 = vmatprep.subr.bf16.mxu0 0
      %588 = vmatpush1.bf16.msra.mxu0 0
      %589 = vmatprep.subr.bf16.mxu0 0
      %590 = vmatpush1.bf16.msra.mxu0 0
      %591 = vmatprep.subr.bf16.mxu0 0
      %592 = vmatpush1.bf16.msra.mxu0 0
      %593 = vmatprep.subr.bf16.mxu0 0
      %594 = vmatpush1.bf16.msra.mxu0 0
      %595 = vmatprep.subr.bf16.mxu0 0
      %596 = vmatpush1.bf16.msra.mxu0 0
      %597 = vmatprep.subr.bf16.mxu0 0
      %598 = vmatpush1.bf16.msra.mxu0 0
      %599 = vmatprep.subr.bf16.mxu0 0
      %600 = vmatpush1.bf16.msra.mxu0 0
      %601 = vmatprep.subr.bf16.mxu0 0
      %602 = vmatpush1.bf16.msra.mxu0 0
      %603 = vmatprep.subr.bf16.mxu0 0
      %604 = vmatpush1.bf16.msra.mxu0 0
      %605 = vmatprep.subr.bf16.mxu0 0
      %606 = vmatpush1.bf16.msra.mxu0 0
      %607 = vmatprep.subr.bf16.mxu0 0
      %608 = vmatpush1.bf16.msra.mxu0 0
      %609 = vmatprep.subr.bf16.mxu0 0
      %610 = vmatpush1.bf16.msra.mxu0 0
      %611 = vmatprep.subr.bf16.mxu0 0
      %612 = vmatpush1.bf16.msra.mxu0 0
      %613 = vmatprep.subr.bf16.mxu0 0
      %614 = vmatpush1.bf16.msra.mxu0 0
      %615 = vmatprep.mubr.bf16.mxu0 0
      %616 = vmatmul.mubr.bf16.gmra.mrb[0].mxu0 %v503
      %v617 = vpop.f32.mrb[0].mxu0
      %v618 = vadd.f32 %v553, %v617
      %v619 = vpop.f32.mrb[0].mxu0
      %v620 = vpop.f32.mrb[0].mxu0
      %v621 = vadd.f32 %v556, %v620
      %v622 = vpop.f32.mrb[0].mxu0
      %623 = vmatprep.mubr.bf16.mxu0 0
      %624 = vmatmul.mubr.bf16.gmra.mrb[0].mxu0 %v506
      %v625 = vpop.f32.mrb[0].mxu0
      %v626 = vadd.f32 %v561, %v625
      %v627 = vpop.f32.mrb[0].mxu0
      %v628 = vpop.f32.mrb[0].mxu0
      %v629 = vadd.f32 %v564, %v628
      %v630 = vpop.f32.mrb[0].mxu0
      %631 = vmatprep.mubr.bf16.mxu0 0
      %632 = vmatmul.mubr.bf16.gmra.mrb[0].mxu0 %v509
      %v633 = vpop.f32.mrb[0].mxu0
      %v634 = vadd.f32 %v569, %v633
      %v635 = vpop.f32.mrb[0].mxu0
      %v636 = vpop.f32.mrb[0].mxu0
      %v637 = vadd.f32 %v572, %v636
      %v638 = vpop.f32.mrb[0].mxu0
      %639 = vmatprep.mubr.bf16.mxu0 0
      %640 = vmatmul.mubr.bf16.gmra.mrb[0].mxu0 %v512
      %v641 = vpop.f32.mrb[0].mxu0
      %v642 = vadd.f32 %v577, %v641
      %v643 = vpop.f32.mrb[0].mxu0
      %v644 = vpop.f32.mrb[0].mxu0
      %v645 = vadd.f32 %v580, %v644
      %v646 = vpop.f32.mrb[0].mxu0
      %647 = vdwg.mxu0
      %v648 = vmax.f32 %v618, 0.0
      %v649 = vmax.f32 %v621, 0.0
      %v650 = vmax.f32 %v626, 0.0
      %v651 = vmax.f32 %v629, 0.0
      %v652 = vmax.f32 %v634, 0.0
      %v653 = vmax.f32 %v637, 0.0
      %v654 = vmax.f32 %v642, 0.0
      %v655 = vmax.f32 %v645, 0.0
      %v656 = vpack.c.bf16 %v649, %v648
      %v657 = vpack.c.bf16 %v651, %v650
      %v658 = vpack.c.bf16 %v653, %v652
      %v659 = vpack.c.bf16 %v655, %v654
      %v660 = vld [vmem:[%s3] sm:$0xf]
      %v661 = vld [vmem:[%s3 + $0x4] sm:$0xf]
      %v662 = vld [vmem:[%s3 + $0x8] sm:$0xf]
      %v663 = vld [vmem:[%s3 + $0xc] sm:$0xf]
      %v664 = vld [vmem:[%s3 + $0x10] sm:$0xf]
      %v665 = vld [vmem:[%s3 + $0x14] sm:$0xf]
      %v666 = vld [vmem:[%s3 + $0x18] sm:$0xf]
      %v667 = vld [vmem:[%s3 + $0x1c] sm:$0xf]
      %v668 = vld [vmem:[%s4] sm:$0x1]
      %v670 = vlaneseq
      %v671 = vshrl.u32 %v670, 7
      %v672 = vsub.s32 0, %v671
      %v673 = vrot.slane %v668, %v672
      %v683 = vunpack.c.l.b16 %v660
      %v684 = vunpack.c.l.b16 %v661
      %v685 = vunpack.c.l.b16 %v662
      %v686 = vunpack.c.l.b16 %v663
      %v687 = vunpack.c.l.b16 %v664
      %v688 = vunpack.c.l.b16 %v665
      %v689 = vunpack.c.l.b16 %v666
      %v690 = vunpack.c.l.b16 %v667
      %v691 = vpack.c.b16 %v684, %v683
      %v692 = vpack.c.b16 %v686, %v685
      %v693 = vpack.c.b16 %v688, %v687
      %v694 = vpack.c.b16 %v690, %v689
      %vm699 = vcmask 523264
      %v701 = vsel %vm699, %v656, 0
      %v704 = vsel %vm699, %v657, 0
      %v707 = vsel %vm699, %v658, 0
      %v710 = vsel %vm699, %v659, 0
      %712 = vmatprep.subr.bf16.mxu0 0
      %713 = vmatpush1.bf16.msra.mxu0 %v691
      %714 = vmatprep.subr.bf16.mxu0 0
      %715 = vmatpush1.bf16.msra.mxu0 %v692
      %716 = vmatprep.subr.bf16.mxu0 0
      %717 = vmatpush1.bf16.msra.mxu0 %v693
      %718 = vmatprep.subr.bf16.mxu0 0
      %719 = vmatpush1.bf16.msra.mxu0 %v694
      %720 = vmatprep.subr.bf16.mxu0 0
      %721 = vmatpush1.bf16.msra.mxu0 0
      %722 = vmatprep.subr.bf16.mxu0 0
      %723 = vmatpush1.bf16.msra.mxu0 0
      %724 = vmatprep.subr.bf16.mxu0 0
      %725 = vmatpush1.bf16.msra.mxu0 0
      %726 = vmatprep.subr.bf16.mxu0 0
      %727 = vmatpush1.bf16.msra.mxu0 0
      %728 = vmatprep.subr.bf16.mxu0 0
      %729 = vmatpush1.bf16.msra.mxu0 0
      %730 = vmatprep.subr.bf16.mxu0 0
      %731 = vmatpush1.bf16.msra.mxu0 0
      %732 = vmatprep.subr.bf16.mxu0 0
      %733 = vmatpush1.bf16.msra.mxu0 0
      %734 = vmatprep.subr.bf16.mxu0 0
      %735 = vmatpush1.bf16.msra.mxu0 0
      %736 = vmatprep.subr.bf16.mxu0 0
      %737 = vmatpush1.bf16.msra.mxu0 0
      %738 = vmatprep.subr.bf16.mxu0 0
      %739 = vmatpush1.bf16.msra.mxu0 0
      %740 = vmatprep.subr.bf16.mxu0 0
      %741 = vmatpush1.bf16.msra.mxu0 0
      %742 = vmatprep.subr.bf16.mxu0 0
      %743 = vmatpush1.bf16.msra.mxu0 0
      %744 = vmatprep.mubr.bf16.mxu0 0
      %745 = vmatmul.mubr.bf16.gmra.mrb[0].mxu0 %v701
      %v746 = vpop.f32.mrb[0].mxu0
      %v747 = vadd.f32 %v673, %v746
      %v748 = vpop.f32.mrb[0].mxu0
      %v749 = vpop.f32.mrb[0].mxu0
      %v750 = vadd.f32 %v673, %v749
      %v751 = vpop.f32.mrb[0].mxu0
      %752 = vmatprep.mubr.bf16.mxu0 0
      %753 = vmatmul.mubr.bf16.gmra.mrb[0].mxu0 %v704
      %v754 = vpop.f32.mrb[0].mxu0
      %v755 = vadd.f32 %v673, %v754
      %v756 = vpop.f32.mrb[0].mxu0
      %v757 = vpop.f32.mrb[0].mxu0
      %v758 = vadd.f32 %v673, %v757
      %v759 = vpop.f32.mrb[0].mxu0
      %760 = vmatprep.mubr.bf16.mxu0 0
      %761 = vmatmul.mubr.bf16.gmra.mrb[0].mxu0 %v707
      %v762 = vpop.f32.mrb[0].mxu0
      %v763 = vadd.f32 %v673, %v762
      %v764 = vpop.f32.mrb[0].mxu0
      %v765 = vpop.f32.mrb[0].mxu0
      %v766 = vadd.f32 %v673, %v765
      %v767 = vpop.f32.mrb[0].mxu0
      %768 = vmatprep.mubr.bf16.mxu0 0
      %769 = vmatmul.mubr.bf16.gmra.mrb[0].mxu0 %v710
      %v770 = vpop.f32.mrb[0].mxu0
      %v771 = vadd.f32 %v673, %v770
      %v772 = vpop.f32.mrb[0].mxu0
      %v773 = vpop.f32.mrb[0].mxu0
      %v774 = vadd.f32 %v673, %v773
      %v775 = vpop.f32.mrb[0].mxu0
      %776 = vdwg.mxu0
      %v777 = vmax.f32 %v747, 0.0
      %v778 = vmax.f32 %v750, 0.0
      %v779 = vmax.f32 %v755, 0.0
      %v780 = vmax.f32 %v758, 0.0
      %v781 = vmax.f32 %v763, 0.0
      %v782 = vmax.f32 %v766, 0.0
      %v783 = vmax.f32 %v771, 0.0
      %v784 = vmax.f32 %v774, 0.0
      %v785 = vpack.c.bf16 %v778, %v777
      %v786 = vpack.c.bf16 %v780, %v779
      %v787 = vpack.c.bf16 %v782, %v781
      %v788 = vpack.c.bf16 %v784, %v783
      %v789 = vld [vmem:[%s5] sm:$0xf]
      %v790 = vld [vmem:[%s5 + $0x4] sm:$0xf]
      %v791 = vld [vmem:[%s5 + $0x8] sm:$0xf]
      %v792 = vld [vmem:[%s5 + $0xc] sm:$0xf]
      %v793 = vld [vmem:[%s5 + $0x10] sm:$0xf]
      %v794 = vld [vmem:[%s5 + $0x14] sm:$0xf]
      %v795 = vld [vmem:[%s5 + $0x18] sm:$0xf]
      %v796 = vld [vmem:[%s5 + $0x1c] sm:$0xf]
      %v797 = vld [vmem:[%s6] sm:$0x1]
      %v799 = vlaneseq
      %v800 = vshrl.u32 %v799, 7
      %v801 = vsub.s32 0, %v800
      %v802 = vrot.slane %v797, %v801
      %v812 = vunpack.c.l.b16 %v789
      %v813 = vunpack.c.l.b16 %v790
      %v814 = vunpack.c.l.b16 %v791
      %v815 = vunpack.c.l.b16 %v792
      %v816 = vunpack.c.l.b16 %v793
      %v817 = vunpack.c.l.b16 %v794
      %v818 = vunpack.c.l.b16 %v795
      %v819 = vunpack.c.l.b16 %v796
      %v820 = vpack.c.b16 %v813, %v812
      %v821 = vpack.c.b16 %v815, %v814
      %v822 = vpack.c.b16 %v817, %v816
      %v823 = vpack.c.b16 %v819, %v818
      %v829 = vsel %vm699, %v785, 0
      %v832 = vsel %vm699, %v786, 0
      %v835 = vsel %vm699, %v787, 0
      %v838 = vsel %vm699, %v788, 0
      %840 = vmatprep.subr.bf16.mxu0 0
      %841 = vmatpush1.bf16.msra.mxu0 %v820
      %842 = vmatprep.subr.bf16.mxu0 0
      %843 = vmatpush1.bf16.msra.mxu0 %v821
      %844 = vmatprep.subr.bf16.mxu0 0
      %845 = vmatpush1.bf16.msra.mxu0 %v822
      %846 = vmatprep.subr.bf16.mxu0 0
      %847 = vmatpush1.bf16.msra.mxu0 %v823
      %848 = vmatprep.subr.bf16.mxu0 0
      %849 = vmatpush1.bf16.msra.mxu0 0
      %850 = vmatprep.subr.bf16.mxu0 0
      %851 = vmatpush1.bf16.msra.mxu0 0
      %852 = vmatprep.subr.bf16.mxu0 0
      %853 = vmatpush1.bf16.msra.mxu0 0
      %854 = vmatprep.subr.bf16.mxu0 0
      %855 = vmatpush1.bf16.msra.mxu0 0
      %856 = vmatprep.subr.bf16.mxu0 0
      %857 = vmatpush1.bf16.msra.mxu0 0
      %858 = vmatprep.subr.bf16.mxu0 0
      %859 = vmatpush1.bf16.msra.mxu0 0
      %860 = vmatprep.subr.bf16.mxu0 0
      %861 = vmatpush1.bf16.msra.mxu0 0
      %862 = vmatprep.subr.bf16.mxu0 0
      %863 = vmatpush1.bf16.msra.mxu0 0
      %864 = vmatprep.subr.bf16.mxu0 0
      %865 = vmatpush1.bf16.msra.mxu0 0
      %866 = vmatprep.subr.bf16.mxu0 0
      %867 = vmatpush1.bf16.msra.mxu0 0
      %868 = vmatprep.subr.bf16.mxu0 0
      %869 = vmatpush1.bf16.msra.mxu0 0
      %870 = vmatprep.subr.bf16.mxu0 0
      %871 = vmatpush1.bf16.msra.mxu0 0
      %872 = vmatprep.mubr.bf16.mxu0 0
      %873 = vmatmul.mubr.bf16.gmra.mrb[0].mxu0 %v829
      %v874 = vpop.f32.mrb[0].mxu0
      %v875 = vadd.f32 %v802, %v874
      %v876 = vpop.f32.mrb[0].mxu0
      %v877 = vpop.f32.mrb[0].mxu0
      %v878 = vadd.f32 %v802, %v877
      %v879 = vpop.f32.mrb[0].mxu0
      %880 = vmatprep.mubr.bf16.mxu0 0
      %881 = vmatmul.mubr.bf16.gmra.mrb[0].mxu0 %v832
      %v882 = vpop.f32.mrb[0].mxu0
      %v883 = vadd.f32 %v802, %v882
      %v884 = vpop.f32.mrb[0].mxu0
      %v885 = vpop.f32.mrb[0].mxu0
      %v886 = vadd.f32 %v802, %v885
      %v887 = vpop.f32.mrb[0].mxu0
      %888 = vmatprep.mubr.bf16.mxu0 0
      %889 = vmatmul.mubr.bf16.gmra.mrb[0].mxu0 %v835
      %v890 = vpop.f32.mrb[0].mxu0
      %v891 = vadd.f32 %v802, %v890
      %v892 = vpop.f32.mrb[0].mxu0
      %v893 = vpop.f32.mrb[0].mxu0
      %v894 = vadd.f32 %v802, %v893
      %v895 = vpop.f32.mrb[0].mxu0
      %896 = vmatprep.mubr.bf16.mxu0 0
      %897 = vmatmul.mubr.bf16.gmra.mrb[0].mxu0 %v838
      %v898 = vpop.f32.mrb[0].mxu0
      %v899 = vadd.f32 %v802, %v898
      %v900 = vpop.f32.mrb[0].mxu0
      %v901 = vpop.f32.mrb[0].mxu0
      %v902 = vadd.f32 %v802, %v901
      %v903 = vpop.f32.mrb[0].mxu0
      %904 = vdwg.mxu0
      %v905 = vlaneseq
      %v906 = vand.u32 %v905, 127
      %vm907 = vcmp.lt.s32.totalorder %v906, 8
      %v908 = vxor.u32 %v875, 2147483648
      %v909 = vxor.u32 %v878, 2147483648
      %v910 = vxor.u32 %v883, 2147483648
      %v911 = vxor.u32 %v886, 2147483648
      %v912 = vxor.u32 %v891, 2147483648
      %v913 = vxor.u32 %v894, 2147483648
      %v914 = vxor.u32 %v899, 2147483648
      %v915 = vxor.u32 %v902, 2147483648
      %v916 = vmul.f32 %v908, 1.442695
      %v917 = vpow.pop %v916
      %v918 = vmul.f32 %v909, 1.442695
      %v919 = vpow.pop %v918
      %v920 = vmul.f32 %v910, 1.442695
      %v921 = vpow.pop %v920
      %v922 = vmul.f32 %v911, 1.442695
      %v923 = vpow.pop %v922
      %v924 = vmul.f32 %v912, 1.442695
      %v925 = vpow.pop %v924
      %v926 = vmul.f32 %v913, 1.442695
      %v927 = vpow.pop %v926
      %v928 = vmul.f32 %v914, 1.442695
      %v929 = vpow.pop %v928
      %v930 = vmul.f32 %v915, 1.442695
      %v931 = vpow.pop %v930
      %v932 = vadd.f32 %v917, 1.0
      %v933 = vadd.f32 %v919, 1.0
      %v934 = vadd.f32 %v921, 1.0
      %v935 = vadd.f32 %v923, 1.0
      %v936 = vadd.f32 %v925, 1.0
      %v937 = vadd.f32 %v927, 1.0
      %v938 = vadd.f32 %v929, 1.0
      %v939 = vadd.f32 %v931, 1.0
      %v940 = vrcp.pop %v932
      %v941 = vmul.f32 1.0, %v940
      %v942 = vrcp.pop %v933
      %v943 = vmul.f32 1.0, %v942
      %v944 = vrcp.pop %v934
      %v945 = vmul.f32 1.0, %v944
      %v946 = vrcp.pop %v935
      %v947 = vmul.f32 1.0, %v946
      %v948 = vrcp.pop %v936
      %v949 = vmul.f32 1.0, %v948
      %v950 = vrcp.pop %v937
      %v951 = vmul.f32 1.0, %v950
      %v952 = vrcp.pop %v938
      %v953 = vmul.f32 1.0, %v952
      %v954 = vrcp.pop %v939
      %v955 = vmul.f32 1.0, %v954
      %v956 = vmax.f32 %v875, 0.0
      %v957 = vmax.f32 %v878, 0.0
      %v958 = vmax.f32 %v883, 0.0
      %v959 = vmax.f32 %v886, 0.0
      %v960 = vmax.f32 %v891, 0.0
      %v961 = vmax.f32 %v894, 0.0
      %v962 = vmax.f32 %v899, 0.0
      %v963 = vmax.f32 %v902, 0.0
      %v964 = vsel %vm907, %v941, %v956
      %v965 = vsel %vm907, %v943, %v957
      %v966 = vsel %vm907, %v945, %v958
      %v967 = vsel %vm907, %v947, %v959
      %v968 = vsel %vm907, %v949, %v960
      %v969 = vsel %vm907, %v951, %v961
      %v970 = vsel %vm907, %v953, %v962
      %v971 = vsel %vm907, %v955, %v963
      %vm972 = vcmp.ge.s32.totalorder %v906, 4
      %vm973 = vcmp.lt.s32.totalorder %v906, 7
      %vm974 = vmand %vm972, %vm973
      %vm975 = vcmp.eq.s32.totalorder %v906, 7
      %v976 = vsel %vm975, 6.2831855, 1.0
      %v977 = vsel %vm974, 0.02, %v976
      %v978 = vmul.f32 %v964, %v977
      %v979 = vmul.f32 %v965, %v977
      %v980 = vmul.f32 %v966, %v977
      %v981 = vmul.f32 %v967, %v977
      %v982 = vmul.f32 %v968, %v977
      %v983 = vmul.f32 %v969, %v977
      %v984 = vmul.f32 %v970, %v977
      %v985 = vmul.f32 %v971, %v977
      %vm986 = vcmask 195584
      %987 = vst.msk [vmem:[%s283] sm:$0xff] %vm986, %v978
      %988 = vst.msk [vmem:[%s283 + $0x8] sm:$0xff] %vm986, %v979
      %989 = vst.msk [vmem:[%s283 + $0x10] sm:$0xff] %vm986, %v980
      %990 = vst.msk [vmem:[%s283 + $0x18] sm:$0xff] %vm986, %v981
      %991 = vst.msk [vmem:[%s283 + $0x20] sm:$0xff] %vm986, %v982
      %992 = vst.msk [vmem:[%s283 + $0x28] sm:$0xff] %vm986, %v983
      %993 = vst.msk [vmem:[%s283 + $0x30] sm:$0xff] %vm986, %v984
      %994 = vst.msk [vmem:[%s283 + $0x38] sm:$0xff] %vm986, %v985
      %s995 = smul.u32 8, %s18
      %p996 = scmp.lt.s32.totalorder %s995, 15
      %s997 = scalar_select %p996, %s995, 15
      %s998 = smul.addr %s997, 8
      %s999 = scalar_lea.vmem %s7, %s998
      // Predicated region
      $region49: #{gaussian_network_forward.4} parent=47 // pred_check
        %p1000 = pneg %p188
      $region50: #{gaussian_network_forward.4} parent=47 // pred_check_branch
        %1002 = sbr.rel (%p1000) target = $region52
      $region51: #{gaussian_network_forward.4} parent=47 // pred_region
        %s1003 = smul.u32 8, %s18
      $region52: #{gaussian_network_forward.4} parent=47 // pred_fallthru
        _
    $region48: #{gaussian_network_forward.4} parent=5 // pred_fallthru
      _
    %p1004 = scmp.le.s32.totalorder 2, %s13
    // Predicated region
    $region53: #{gaussian_network_forward.4} parent=5 // pred_check
      %p1005 = pneg %p1004
    $region54: #{gaussian_network_forward.4} parent=5 // pred_check_branch
      %1007 = sbr.rel (%p1005) target = $region56
    $region55: #{gaussian_network_forward.4} parent=5 // pred_region
      %s1008 = ssub.s32 %s13, 2
      // Predicated region
      $region57: #{gaussian_network_forward.4} parent=55 // pred_check
        %p1009 = pneg %p194
      $region58: #{gaussian_network_forward.4} parent=55 // pred_check_branch
        %1011 = sbr.rel (%p1009) target = $region60
      $region59: #{gaussian_network_forward.4} parent=55 // pred_region
        %s1012 = smul.u32 8, %s19
        %p1013 = scmp.lt.s32.totalorder %s1012, 15
        %s1014 = scalar_select %p1013, %s1012, 15
        %s1015 = smul.addr %s1014, 8
        %s1016 = scalar_lea.vmem %s7, %s1015
      $region60: #{gaussian_network_forward.4} parent=55 // pred_fallthru
        _
    $region56: #{gaussian_network_forward.4} parent=5 // pred_fallthru
      _
  $region6: #{gaussian_network_forward.4} parent=0 // loop_footer
    %s17 = sadd.s32 1, %s13
  $region7: #{gaussian_network_forward.4} parent=0 // loop_footer_branch
    %12 = sbr.rel target = $region3
  $region8: #{gaussian_network_forward.4} parent=0 // loop_exit
    _

// kernel: split.0
$region0: #{split.0}
  #allocation0 [shape = 'u32[2048]{0}', space=vmem, size = 0x2000, scoped, tag = 'scoped memory for split.0']
  #allocation1 [shape = 'u32[2048]{0}', space=vmem, size = 0x2000, scoped, tag = 'scoped memory for split.0']
  #allocation2 [shape = 'u32[2048]{0}', space=vmem, size = 0x2000, scoped, tag = 'scoped memory for split.0']
  #allocation3 [shape = 'u32[2048]{0}', space=vmem, size = 0x2000, scoped, tag = 'scoped memory for split.0']
  #allocation4 [shape = 'u32[2048]{0}', space=vmem, size = 0x2000, scoped, tag = 'scoped memory for split.0']
  #allocation7 [shape = 's32[1]{0}', space=sflag, size = 0x4, scoped, tag = 'scoped memory for split.0']
  %s0 = inlined_call_operand.vmem [shape: f32[576,128], index: 0, kind: input, shape index: {}]
  %s1 = inlined_call_operand.hbm [shape: f32[576,32], index: 1, kind: output, shape index: {}]
  $region1: #{split.0} parent=0
    #allocation5 [shape = 'u8[294912]{0}', space=vmem, size = 0x48000, scoped, tag = 'operand span for operand 1']
    #allocation6 [shape = 's32[1]{0}', space=sflag, size = 0x4, scoped, tag = 'scoped memory for split.0']
    %2 = vsyncpa [#allocation6], 0
    %v3 = vld [vmem:[%s0] sm:$0xff]
    %v4 = vlaneseq
    %v5 = vand.u32 %v4, 127
    %vm6 = vcmp.lt.s32.totalorder %v5, 55
    %v7 = vsel %vm6, 0, %v3
    %8 = vrot.lane.b32.xlu0 %v7, 73
    %v9 = vpop.permute.xlu0 %8
    %10 = vst [vmem:[#allocation5] sm:$0xff] %v9
    %s11 = scalar_lea.vmem %s0, 8
    %v12 = vld [vmem:[%s11] sm:$0xff]
    %v13 = vlaneseq
    %v14 = vand.u32 %v13, 127
    %vm15 = vcmp.lt.s32.totalorder %v14, 55
    %v16 = vsel %vm15, 0, %v12
    %17 = vrot.lane.b32.xlu0 %v16, 73
    %v18 = vpop.permute.xlu0 %17
    %s19 = scalar_lea.vmem [#allocation5], 8
    %20 = vst [vmem:[%s19] sm:$0xff] %v18
    %s21 = scalar_lea.vmem %s0, 16
    %v22 = vld [vmem:[%s21] sm:$0xff]
    %v23 = vlaneseq
    %v24 = vand.u32 %v23, 127
    %vm25 = vcmp.lt.s32.totalorder %v24, 55
    %v26 = vsel %vm25, 0, %v22
    %27 = vrot.lane.b32.xlu0 %v26, 73
    %v28 = vpop.permute.xlu0 %27
    %s29 = scalar_lea.vmem [#allocation5], 16
    %30 = vst [vmem:[%s29] sm:$0xff] %v28
    %s31 = scalar_lea.vmem %s0, 24
    %v32 = vld [vmem:[%s31] sm:$0xff]
    %v33 = vlaneseq
    %v34 = vand.u32 %v33, 127
    %vm35 = vcmp.lt.s32.totalorder %v34, 55
    %v36 = vsel %vm35, 0, %v32
    %37 = vrot.lane.b32.xlu0 %v36, 73
    %v38 = vpop.permute.xlu0 %37
    %s39 = scalar_lea.vmem [#allocation5], 24
    %40 = vst [vmem:[%s39] sm:$0xff] %v38
    %s41 = scalar_lea.vmem %s0, 32
    %v42 = vld [vmem:[%s41] sm:$0xff]
    %v43 = vlaneseq
    %v44 = vand.u32 %v43, 127
    %vm45 = vcmp.lt.s32.totalorder %v44, 55
    %v46 = vsel %vm45, 0, %v42
    %47 = vrot.lane.b32.xlu0 %v46, 73
    %v48 = vpop.permute.xlu0 %47
    %s49 = scalar_lea.vmem [#allocation5], 32
    %50 = vst [vmem:[%s49] sm:$0xff] %v48
    %s51 = scalar_lea.vmem %s0, 40
    %v52 = vld [vmem:[%s51] sm:$0xff]
    %v53 = vlaneseq
    %v54 = vand.u32 %v53, 127
    %vm55 = vcmp.lt.s32.totalorder %v54, 55
    %v56 = vsel %vm55, 0, %v52
    %57 = vrot.lane.b32.xlu0 %v56, 73
    %v58 = vpop.permute.xlu0 %57
    %s59 = scalar_lea.vmem [#allocation5], 40
    %60 = vst [vmem:[%s59] sm:$0xff] %v58
    %s61 = scalar_lea.vmem %s0, 48
    %v62 = vld [vmem:[%s61] sm:$0xff]
    %v63 = vlaneseq
    %v64 = vand.u32 %v63, 127
    %vm65 = vcmp.lt.s32.totalorder %v64, 55
    %v66 = vsel %vm65, 0, %v62
    %67 = vrot.lane.b32.xlu0 %v66, 73
    %v68 = vpop.permute.xlu0 %67
    %s69 = scalar_lea.vmem [#allocation5], 48
    %70 = vst [vmem:[%s69] sm:$0xff] %v68
    %s71 = scalar_lea.vmem %s0, 56
    %v72 = vld [vmem:[%s71] sm:$0xff]
    %v73 = vlaneseq
    %v74 = vand.u32 %v73, 127
    %vm75 = vcmp.lt.s32.totalorder %v74, 55
    %v76 = vsel %vm75, 0, %v72
    %77 = vrot.lane.b32.xlu0 %v76, 73
    %v78 = vpop.permute.xlu0 %77
    %s79 = scalar_lea.vmem [#allocation5], 56
    %80 = vst [vmem:[%s79] sm:$0xff] %v78
    %s81 = scalar_lea.vmem %s0, 64
    %v82 = vld [vmem:[%s81] sm:$0xff]
    %v83 = vlaneseq
    %v84 = vand.u32 %v83, 127
    %vm85 = vcmp.lt.s32.totalorder %v84, 55
    %v86 = vsel %vm85, 0, %v82
    %87 = vrot.lane.b32.xlu0 %v86, 73
    %v88 = vpop.permute.xlu0 %87
    %s89 = scalar_lea.vmem [#allocation5], 64
    %90 = vst [vmem:[%s89] sm:$0xff] %v88
    %s91 = scalar_lea.vmem %s0, 72
    %v92 = vld [vmem:[%s91] sm:$0xff]
    %v93 = vlaneseq
    %v94 = vand.u32 %v93, 127
    %vm95 = vcmp.lt.s32.totalorder %v94, 55
    %v96 = vsel %vm95, 0, %v92
    %97 = vrot.lane.b32.xlu0 %v96, 73
    %v98 = vpop.permute.xlu0 %97
    %s99 = scalar_lea.vmem [#allocation5], 72
    %100 = vst [vmem:[%s99] sm:$0xff] %v98
    %s101 = scalar_lea.vmem %s0, 80
    %v102 = vld [vmem:[%s101] sm:$0xff]
    %v103 = vlaneseq
    %v104 = vand.u32 %v103, 127
    %vm105 = vcmp.lt.s32.totalorder %v104, 55
    %v106 = vsel %vm105, 0, %v102
    %107 = vrot.lane.b32.xlu0 %v106, 73
    %v108 = vpop.permute.xlu0 %107
    %s109 = scalar_lea.vmem [#allocation5], 80
    %110 = vst [vmem:[%s109] sm:$0xff] %v108
    %s111 = scalar_lea.vmem %s0, 88
    %v112 = vld [vmem:[%s111] sm:$0xff]
    %v113 = vlaneseq
    %v114 = vand.u32 %v113, 127
    %vm115 = vcmp.lt.s32.totalorder %v114, 55
    %v116 = vsel %vm115, 0, %v112
    %117 = vrot.lane.b32.xlu0 %v116, 73
    %v118 = vpop.permute.xlu0 %117
    %s119 = scalar_lea.vmem [#allocation5], 88
    %120 = vst [vmem:[%s119] sm:$0xff] %v118
    %s121 = scalar_lea.vmem %s0, 96
    %v122 = vld [vmem:[%s121] sm:$0xff]
    %v123 = vlaneseq
    %v124 = vand.u32 %v123, 127
    %vm125 = vcmp.lt.s32.totalorder %v124, 55
    %v126 = vsel %vm125, 0, %v122
    %127 = vrot.lane.b32.xlu0 %v126, 73
    %v128 = vpop.permute.xlu0 %127
    %s129 = scalar_lea.vmem [#allocation5], 96
    %130 = vst [vmem:[%s129] sm:$0xff] %v128
    %s131 = scalar_lea.vmem %s0, 104
    %v132 = vld [vmem:[%s131] sm:$0xff]
    %v133 = vlaneseq
    %v134 = vand.u32 %v133, 127
    %vm135 = vcmp.lt.s32.totalorder %v134, 55
    %v136 = vsel %vm135, 0, %v132
    %137 = vrot.lane.b32.xlu0 %v136, 73
    %v138 = vpop.permute.xlu0 %137
    %s139 = scalar_lea.vmem [#allocation5], 104
    %140 = vst [vmem:[%s139] sm:$0xff] %v138
    %s141 = scalar_lea.vmem %s0, 112
    %v142 = vld [vmem:[%s141] sm:$0xff]
    %v143 = vlaneseq
    %v144 = vand.u32 %v143, 127
    %vm145 = vcmp.lt.s32.totalorder %v144, 55
    %v146 = vsel %vm145, 0, %v142
    %147 = vrot.lane.b32.xlu0 %v146, 73
    %v148 = vpop.permute.xlu0 %147
    %s149 = scalar_lea.vmem [#allocation5], 112
    %150 = vst [vmem:[%s149] sm:$0xff] %v148
    %s151 = scalar_lea.vmem %s0, 120
    %v152 = vld [vmem:[%s151] sm:$0xff]
    %v153 = vlaneseq
    %v154 = vand.u32 %v153, 127
    %vm155 = vcmp.lt.s32.totalorder %v154, 55
    %v156 = vsel %vm155, 0, %v152
    %157 = vrot.lane.b32.xlu0 %v156, 73
    %v158 = vpop.permute.xlu0 %157
    %s159 = scalar_lea.vmem [#allocation5], 120
    %160 = vst [vmem:[%s159] sm:$0xff] %v158
    %s161 = scalar_lea.vmem %s0, 128
    %v162 = vld [vmem:[%s161] sm:$0xff]
    %v163 = vlaneseq
    %v164 = vand.u32 %v163, 127
    %vm165 = vcmp.lt.s32.totalorder %v164, 55
    %v166 = vsel %vm165, 0, %v162
    %167 = vrot.lane.b32.xlu0 %v166, 73
    %v168 = vpop.permute.xlu0 %167
    %s169 = scalar_lea.vmem [#allocation5], 128
    %170 = vst [vmem:[%s169] sm:$0xff] %v168
    %s171 = scalar_lea.vmem %s0, 136
    %v172 = vld [vmem:[%s171] sm:$0xff]
    %v173 = vlaneseq
    %v174 = vand.u32 %v173, 127
    %vm175 = vcmp.lt.s32.totalorder %v174, 55
    %v176 = vsel %vm175, 0, %v172
    %177 = vrot.lane.b32.xlu0 %v176, 73
    %v178 = vpop.permute.xlu0 %177
    %s179 = scalar_lea.vmem [#allocation5], 136
    %180 = vst [vmem:[%s179] sm:$0xff] %v178
    %s181 = scalar_lea.vmem %s0, 144
    %v182 = vld [vmem:[%s181] sm:$0xff]
    %v183 = vlaneseq
    %v184 = vand.u32 %v183, 127
    %vm185 = vcmp.lt.s32.totalorder %v184, 55
    %v186 = vsel %vm185, 0, %v182
    %187 = vrot.lane.b32.xlu0 %v186, 73
    %v188 = vpop.permute.xlu0 %187
    %s189 = scalar_lea.vmem [#allocation5], 144
    %190 = vst [vmem:[%s189] sm:$0xff] %v188
    %s191 = scalar_lea.vmem %s0, 152
    %v192 = vld [vmem:[%s191] sm:$0xff]
    %v193 = vlaneseq
    %v194 = vand.u32 %v193, 127
    %vm195 = vcmp.lt.s32.totalorder %v194, 55
    %v196 = vsel %vm195, 0, %v192
    %197 = vrot.lane.b32.xlu0 %v196, 73
    %v198 = vpop.permute.xlu0 %197
    %s199 = scalar_lea.vmem [#allocation5], 152
    %200 = vst [vmem:[%s199] sm:$0xff] %v198
    %s201 = scalar_lea.vmem %s0, 160
    %v202 = vld [vmem:[%s201] sm:$0xff]
    %v203 = vlaneseq
    %v204 = vand.u32 %v203, 127
    %vm205 = vcmp.lt.s32.totalorder %v204, 55
    %v206 = vsel %vm205, 0, %v202
    %207 = vrot.lane.b32.xlu0 %v206, 73
    %v208 = vpop.permute.xlu0 %207
    %s209 = scalar_lea.vmem [#allocation5], 160
    %210 = vst [vmem:[%s209] sm:$0xff] %v208
    %s211 = scalar_lea.vmem %s0, 168
    %v212 = vld [vmem:[%s211] sm:$0xff]
    %v213 = vlaneseq
    %v214 = vand.u32 %v213, 127
    %vm215 = vcmp.lt.s32.totalorder %v214, 55
    %v216 = vsel %vm215, 0, %v212
    %217 = vrot.lane.b32.xlu0 %v216, 73
    %v218 = vpop.permute.xlu0 %217
    %s219 = scalar_lea.vmem [#allocation5], 168
    %220 = vst [vmem:[%s219] sm:$0xff] %v218
    %s221 = scalar_lea.vmem %s0, 176
    %v222 = vld [vmem:[%s221] sm:$0xff]
    %v223 = vlaneseq
    %v224 = vand.u32 %v223, 127
    %vm225 = vcmp.lt.s32.totalorder %v224, 55
    %v226 = vsel %vm225, 0, %v222
    %227 = vrot.lane.b32.xlu0 %v226, 73
    %v228 = vpop.permute.xlu0 %227
    %s229 = scalar_lea.vmem [#allocation5], 176
    %230 = vst [vmem:[%s229] sm:$0xff] %v228
    %s231 = scalar_lea.vmem %s0, 184
    %v232 = vld [vmem:[%s231] sm:$0xff]
    %v233 = vlaneseq
    %v234 = vand.u32 %v233, 127
    %vm235 = vcmp.lt.s32.totalorder %v234, 55
    %v236 = vsel %vm235, 0, %v232
    %237 = vrot.lane.b32.xlu0 %v236, 73
    %v238 = vpop.permute.xlu0 %237
    %s239 = scalar_lea.vmem [#allocation5], 184
    %240 = vst [vmem:[%s239] sm:$0xff] %v238
    %s241 = scalar_lea.vmem %s0, 192
    %v242 = vld [vmem:[%s241] sm:$0xff]
    %v243 = vlaneseq
    %v244 = vand.u32 %v243, 127
    %vm245 = vcmp.lt.s32.totalorder %v244, 55
    %v246 = vsel %vm245, 0, %v242
    %247 = vrot.lane.b32.xlu0 %v246, 73
    %v248 = vpop.permute.xlu0 %247
    %s249 = scalar_lea.vmem [#allocation5], 192
    %250 = vst [vmem:[%s249] sm:$0xff] %v248
    %s251 = scalar_lea.vmem %s0, 200
    %v252 = vld [vmem:[%s251] sm:$0xff]
    %v253 = vlaneseq
    %v254 = vand.u32 %v253, 127
    %vm255 = vcmp.lt.s32.totalorder %v254, 55
    %v256 = vsel %vm255, 0, %v252
    %257 = vrot.lane.b32.xlu0 %v256, 73
    %v258 = vpop.permute.xlu0 %257
    %s259 = scalar_lea.vmem [#allocation5], 200
    %260 = vst [vmem:[%s259] sm:$0xff] %v258
    %s261 = scalar_lea.vmem %s0, 208
    %v262 = vld [vmem:[%s261] sm:$0xff]
    %v263 = vlaneseq
    %v264 = vand.u32 %v263, 127
    %vm265 = vcmp.lt.s32.totalorder %v264, 55
    %v266 = vsel %vm265, 0, %v262
    %267 = vrot.lane.b32.xlu0 %v266, 73
    %v268 = vpop.permute.xlu0 %267
    %s269 = scalar_lea.vmem [#allocation5], 208
    %270 = vst [vmem:[%s269] sm:$0xff] %v268
    %s271 = scalar_lea.vmem %s0, 216
    %v272 = vld [vmem:[%s271] sm:$0xff]
    %v273 = vlaneseq
    %v274 = vand.u32 %v273, 127
    %vm275 = vcmp.lt.s32.totalorder %v274, 55
    %v276 = vsel %vm275, 0, %v272
    %277 = vrot.lane.b32.xlu0 %v276, 73
    %v278 = vpop.permute.xlu0 %277
    %s279 = scalar_lea.vmem [#allocation5], 216
    %280 = vst [vmem:[%s279] sm:$0xff] %v278
    %s281 = scalar_lea.vmem %s0, 224
    %v282 = vld [vmem:[%s281] sm:$0xff]
    %v283 = vlaneseq
    %v284 = vand.u32 %v283, 127
    %vm285 = vcmp.lt.s32.totalorder %v284, 55
    %v286 = vsel %vm285, 0, %v282
    %287 = vrot.lane.b32.xlu0 %v286, 73
    %v288 = vpop.permute.xlu0 %287
    %s289 = scalar_lea.vmem [#allocation5], 224
    %290 = vst [vmem:[%s289] sm:$0xff] %v288
    %s291 = scalar_lea.vmem %s0, 232
    %v292 = vld [vmem:[%s291] sm:$0xff]
    %v293 = vlaneseq
    %v294 = vand.u32 %v293, 127
    %vm295 = vcmp.lt.s32.totalorder %v294, 55
    %v296 = vsel %vm295, 0, %v292
    %297 = vrot.lane.b32.xlu0 %v296, 73
    %v298 = vpop.permute.xlu0 %297
    %s299 = scalar_lea.vmem [#allocation5], 232
    %300 = vst [vmem:[%s299] sm:$0xff] %v298
    %s301 = scalar_lea.vmem %s0, 240
    %v302 = vld [vmem:[%s301] sm:$0xff]
    %v303 = vlaneseq
    %v304 = vand.u32 %v303, 127
    %vm305 = vcmp.lt.s32.totalorder %v304, 55
    %v306 = vsel %vm305, 0, %v302
    %307 = vrot.lane.b32.xlu0 %v306, 73
    %v308 = vpop.permute.xlu0 %307
    %s309 = scalar_lea.vmem [#allocation5], 240
    %310 = vst [vmem:[%s309] sm:$0xff] %v308
    %s311 = scalar_lea.vmem %s0, 248
    %v312 = vld [vmem:[%s311] sm:$0xff]
    %v313 = vlaneseq
    %v314 = vand.u32 %v313, 127
    %vm315 = vcmp.lt.s32.totalorder %v314, 55
    %v316 = vsel %vm315, 0, %v312
    %317 = vrot.lane.b32.xlu0 %v316, 73
    %v318 = vpop.permute.xlu0 %317
    %s319 = scalar_lea.vmem [#allocation5], 248
    %320 = vst [vmem:[%s319] sm:$0xff] %v318
    %s321 = scalar_lea.vmem %s0, 256
    %v322 = vld [vmem:[%s321] sm:$0xff]
    %v323 = vlaneseq
    %v324 = vand.u32 %v323, 127
    %vm325 = vcmp.lt.s32.totalorder %v324, 55
    %v326 = vsel %vm325, 0, %v322
    %327 = vrot.lane.b32.xlu0 %v326, 73
    %v328 = vpop.permute.xlu0 %327
    %s329 = scalar_lea.vmem [#allocation5], 256
    %330 = vst [vmem:[%s329] sm:$0xff] %v328
    %s331 = scalar_lea.vmem %s0, 264
    %v332 = vld [vmem:[%s331] sm:$0xff]
    %v333 = vlaneseq
    %v334 = vand.u32 %v333, 127
    %vm335 = vcmp.lt.s32.totalorder %v334, 55
    %v336 = vsel %vm335, 0, %v332
    %337 = vrot.lane.b32.xlu0 %v336, 73
    %v338 = vpop.permute.xlu0 %337
    %s339 = scalar_lea.vmem [#allocation5], 264
    %340 = vst [vmem:[%s339] sm:$0xff] %v338
    %s341 = scalar_lea.vmem %s0, 272
    %v342 = vld [vmem:[%s341] sm:$0xff]
    %v343 = vlaneseq
    %v344 = vand.u32 %v343, 127
    %vm345 = vcmp.lt.s32.totalorder %v344, 55
    %v346 = vsel %vm345, 0, %v342
    %347 = vrot.lane.b32.xlu0 %v346, 73
    %v348 = vpop.permute.xlu0 %347
    %s349 = scalar_lea.vmem [#allocation5], 272
    %350 = vst [vmem:[%s349] sm:$0xff] %v348
    %s351 = scalar_lea.vmem %s0, 280
    %v352 = vld [vmem:[%s351] sm:$0xff]
    %v353 = vlaneseq
    %v354 = vand.u32 %v353, 127
    %vm355 = vcmp.lt.s32.totalorder %v354, 55
    %v356 = vsel %vm355, 0, %v352
    %357 = vrot.lane.b32.xlu0 %v356, 73
    %v358 = vpop.permute.xlu0 %357
    %s359 = scalar_lea.vmem [#allocation5], 280
    %360 = vst [vmem:[%s359] sm:$0xff] %v358
    %s361 = scalar_lea.vmem %s0, 288
    %v362 = vld [vmem:[%s361] sm:$0xff]
    %v363 = vlaneseq
    %v364 = vand.u32 %v363, 127
    %vm365 = vcmp.lt.s32.totalorder %v364, 55
    %v366 = vsel %vm365, 0, %v362
    %367 = vrot.lane.b32.xlu0 %v366, 73
    %v368 = vpop.permute.xlu0 %367
    %s369 = scalar_lea.vmem [#allocation5], 288
    %370 = vst [vmem:[%s369] sm:$0xff] %v368
    %s371 = scalar_lea.vmem %s0, 296
    %v372 = vld [vmem:[%s371] sm:$0xff]
    %v373 = vlaneseq
    %v374 = vand.u32 %v373, 127
    %vm375 = vcmp.lt.s32.totalorder %v374, 55
    %v376 = vsel %vm375, 0, %v372
    %377 = vrot.lane.b32.xlu0 %v376, 73
    %v378 = vpop.permute.xlu0 %377
    %s379 = scalar_lea.vmem [#allocation5], 296
    %380 = vst [vmem:[%s379] sm:$0xff] %v378
    %s381 = scalar_lea.vmem %s0, 304
    %v382 = vld [vmem:[%s381] sm:$0xff]
    %v383 = vlaneseq
    %v384 = vand.u32 %v383, 127
    %vm385 = vcmp.lt.s32.totalorder %v384, 55
    %v386 = vsel %vm385, 0, %v382
    %387 = vrot.lane.b32.xlu0 %v386, 73
    %v388 = vpop.permute.xlu0 %387
    %s389 = scalar_lea.vmem [#allocation5], 304
    %390 = vst [vmem:[%s389] sm:$0xff] %v388
    %s391 = scalar_lea.vmem %s0, 312
    %v392 = vld [vmem:[%s391] sm:$0xff]
    %v393 = vlaneseq
    %v394 = vand.u32 %v393, 127
    %vm395 = vcmp.lt.s32.totalorder %v394, 55
    %v396 = vsel %vm395, 0, %v392
    %397 = vrot.lane.b32.xlu0 %v396, 73
    %v398 = vpop.permute.xlu0 %397
    %s399 = scalar_lea.vmem [#allocation5], 312
    %400 = vst [vmem:[%s399] sm:$0xff] %v398
    %s401 = scalar_lea.vmem %s0, 320
    %v402 = vld [vmem:[%s401] sm:$0xff]
    %v403 = vlaneseq
    %v404 = vand.u32 %v403, 127
    %vm405 = vcmp.lt.s32.totalorder %v404, 55
    %v406 = vsel %vm405, 0, %v402
    %407 = vrot.lane.b32.xlu0 %v406, 73
    %v408 = vpop.permute.xlu0 %407
    %s409 = scalar_lea.vmem [#allocation5], 320
    %410 = vst [vmem:[%s409] sm:$0xff] %v408
    %s411 = scalar_lea.vmem %s0, 328
    %v412 = vld [vmem:[%s411] sm:$0xff]
    %v413 = vlaneseq
    %v414 = vand.u32 %v413, 127
    %vm415 = vcmp.lt.s32.totalorder %v414, 55
    %v416 = vsel %vm415, 0, %v412
    %417 = vrot.lane.b32.xlu0 %v416, 73
    %v418 = vpop.permute.xlu0 %417
    %s419 = scalar_lea.vmem [#allocation5], 328
    %420 = vst [vmem:[%s419] sm:$0xff] %v418
    %s421 = scalar_lea.vmem %s0, 336
    %v422 = vld [vmem:[%s421] sm:$0xff]
    %v423 = vlaneseq
    %v424 = vand.u32 %v423, 127
    %vm425 = vcmp.lt.s32.totalorder %v424, 55
    %v426 = vsel %vm425, 0, %v422
    %427 = vrot.lane.b32.xlu0 %v426, 73
    %v428 = vpop.permute.xlu0 %427
    %s429 = scalar_lea.vmem [#allocation5], 336
    %430 = vst [vmem:[%s429] sm:$0xff] %v428
    %s431 = scalar_lea.vmem %s0, 344
    %v432 = vld [vmem:[%s431] sm:$0xff]
    %v433 = vlaneseq
    %v434 = vand.u32 %v433, 127
    %vm435 = vcmp.lt.s32.totalorder %v434, 55
    %v436 = vsel %vm435, 0, %v432
    %437 = vrot.lane.b32.xlu0 %v436, 73
    %v438 = vpop.permute.xlu0 %437
    %s439 = scalar_lea.vmem [#allocation5], 344
    %440 = vst [vmem:[%s439] sm:$0xff] %v438
    %s441 = scalar_lea.vmem %s0, 352
    %v442 = vld [vmem:[%s441] sm:$0xff]
    %v443 = vlaneseq
    %v444 = vand.u32 %v443, 127
    %vm445 = vcmp.lt.s32.totalorder %v444, 55
    %v446 = vsel %vm445, 0, %v442
    %447 = vrot.lane.b32.xlu0 %v446, 73
    %v448 = vpop.permute.xlu0 %447
    %s449 = scalar_lea.vmem [#allocation5], 352
    %450 = vst [vmem:[%s449] sm:$0xff] %v448
    %s451 = scalar_lea.vmem %s0, 360
    %v452 = vld [vmem:[%s451] sm:$0xff]
    %v453 = vlaneseq
    %v454 = vand.u32 %v453, 127
    %vm455 = vcmp.lt.s32.totalorder %v454, 55
    %v456 = vsel %vm455, 0, %v452
    %457 = vrot.lane.b32.xlu0 %v456, 73
    %v458 = vpop.permute.xlu0 %457
    %s459 = scalar_lea.vmem [#allocation5], 360
    %460 = vst [vmem:[%s459] sm:$0xff] %v458
    %s461 = scalar_lea.vmem %s0, 368
    %v462 = vld [vmem:[%s461] sm:$0xff]
    %v463 = vlaneseq
    %v464 = vand.u32 %v463, 127
    %vm465 = vcmp.lt.s32.totalorder %v464, 55
    %v466 = vsel %vm465, 0, %v462
    %467 = vrot.lane.b32.xlu0 %v466, 73
    %v468 = vpop.permute.xlu0 %467
    %s469 = scalar_lea.vmem [#allocation5], 368
    %470 = vst [vmem:[%s469] sm:$0xff] %v468
    %s471 = scalar_lea.vmem %s0, 376
    %v472 = vld [vmem:[%s471] sm:$0xff]
    %v473 = vlaneseq
    %v474 = vand.u32 %v473, 127
    %vm475 = vcmp.lt.s32.totalorder %v474, 55
    %v476 = vsel %vm475, 0, %v472
    %477 = vrot.lane.b32.xlu0 %v476, 73
    %v478 = vpop.permute.xlu0 %477
    %s479 = scalar_lea.vmem [#allocation5], 376
    %480 = vst [vmem:[%s479] sm:$0xff] %v478
    %s481 = scalar_lea.vmem %s0, 384
    %v482 = vld [vmem:[%s481] sm:$0xff]
    %v483 = vlaneseq
    %v484 = vand.u32 %v483, 127
    %vm485 = vcmp.lt.s32.totalorder %v484, 55
    %v486 = vsel %vm485, 0, %v482
    %487 = vrot.lane.b32.xlu0 %v486, 73
    %v488 = vpop.permute.xlu0 %487
    %s489 = scalar_lea.vmem [#allocation5], 384
    %490 = vst [vmem:[%s489] sm:$0xff] %v488
    %s491 = scalar_lea.vmem %s0, 392
    %v492 = vld [vmem:[%s491] sm:$0xff]
    %v493 = vlaneseq
    %v494 = vand.u32 %v493, 127
    %vm495 = vcmp.lt.s32.totalorder %v494, 55
    %v496 = vsel %vm495, 0, %v492
    %497 = vrot.lane.b32.xlu0 %v496, 73
    %v498 = vpop.permute.xlu0 %497
    %s499 = scalar_lea.vmem [#allocation5], 392
    %500 = vst [vmem:[%s499] sm:$0xff] %v498
    %s501 = scalar_lea.vmem %s0, 400
    %v502 = vld [vmem:[%s501] sm:$0xff]
    %v503 = vlaneseq
    %v504 = vand.u32 %v503, 127
    %vm505 = vcmp.lt.s32.totalorder %v504, 55
    %v506 = vsel %vm505, 0, %v502
    %507 = vrot.lane.b32.xlu0 %v506, 73
    %v508 = vpop.permute.xlu0 %507
    %s509 = scalar_lea.vmem [#allocation5], 400
    %510 = vst [vmem:[%s509] sm:$0xff] %v508
    %s511 = scalar_lea.vmem %s0, 408
    %v512 = vld [vmem:[%s511] sm:$0xff]
    %v513 = vlaneseq
    %v514 = vand.u32 %v513, 127
    %vm515 = vcmp.lt.s32.totalorder %v514, 55
    %v516 = vsel %vm515, 0, %v512
    %517 = vrot.lane.b32.xlu0 %v516, 73
    %v518 = vpop.permute.xlu0 %517
    %s519 = scalar_lea.vmem [#allocation5], 408
    %520 = vst [vmem:[%s519] sm:$0xff] %v518
    %s521 = scalar_lea.vmem %s0, 416
    %v522 = vld [vmem:[%s521] sm:$0xff]
    %v523 = vlaneseq
    %v524 = vand.u32 %v523, 127
    %vm525 = vcmp.lt.s32.totalorder %v524, 55
    %v526 = vsel %vm525, 0, %v522
    %527 = vrot.lane.b32.xlu0 %v526, 73
    %v528 = vpop.permute.xlu0 %527
    %s529 = scalar_lea.vmem [#allocation5], 416
    %530 = vst [vmem:[%s529] sm:$0xff] %v528
    %s531 = scalar_lea.vmem %s0, 424
    %v532 = vld [vmem:[%s531] sm:$0xff]
    %v533 = vlaneseq
    %v534 = vand.u32 %v533, 127
    %vm535 = vcmp.lt.s32.totalorder %v534, 55
    %v536 = vsel %vm535, 0, %v532
    %537 = vrot.lane.b32.xlu0 %v536, 73
    %v538 = vpop.permute.xlu0 %537
    %s539 = scalar_lea.vmem [#allocation5], 424
    %540 = vst [vmem:[%s539] sm:$0xff] %v538
    %s541 = scalar_lea.vmem %s0, 432
    %v542 = vld [vmem:[%s541] sm:$0xff]
    %v543 = vlaneseq
    %v544 = vand.u32 %v543, 127
    %vm545 = vcmp.lt.s32.totalorder %v544, 55
    %v546 = vsel %vm545, 0, %v542
    %547 = vrot.lane.b32.xlu0 %v546, 73
    %v548 = vpop.permute.xlu0 %547
    %s549 = scalar_lea.vmem [#allocation5], 432
    %550 = vst [vmem:[%s549] sm:$0xff] %v548
    %s551 = scalar_lea.vmem %s0, 440
    %v552 = vld [vmem:[%s551] sm:$0xff]
    %v553 = vlaneseq
    %v554 = vand.u32 %v553, 127
    %vm555 = vcmp.lt.s32.totalorder %v554, 55
    %v556 = vsel %vm555, 0, %v552
    %557 = vrot.lane.b32.xlu0 %v556, 73
    %v558 = vpop.permute.xlu0 %557
    %s559 = scalar_lea.vmem [#allocation5], 440
    %560 = vst [vmem:[%s559] sm:$0xff] %v558
    %s561 = scalar_lea.vmem %s0, 448
    %v562 = vld [vmem:[%s561] sm:$0xff]
    %v563 = vlaneseq
    %v564 = vand.u32 %v563, 127
    %vm565 = vcmp.lt.s32.totalorder %v564, 55
    %v566 = vsel %vm565, 0, %v562
    %567 = vrot.lane.b32.xlu0 %v566, 73
    %v568 = vpop.permute.xlu0 %567
    %s569 = scalar_lea.vmem [#allocation5], 448
    %570 = vst [vmem:[%s569] sm:$0xff] %v568
    %s571 = scalar_lea.vmem %s0, 456
    %v572 = vld [vmem:[%s571] sm:$0xff]
    %v573 = vlaneseq
    %v574 = vand.u32 %v573, 127
    %vm575 = vcmp.lt.s32.totalorder %v574, 55
    %v576 = vsel %vm575, 0, %v572
    %577 = vrot.lane.b32.xlu0 %v576, 73
    %v578 = vpop.permute.xlu0 %577
    %s579 = scalar_lea.vmem [#allocation5], 456
    %580 = vst [vmem:[%s579] sm:$0xff] %v578
    %s581 = scalar_lea.vmem %s0, 464
    %v582 = vld [vmem:[%s581] sm:$0xff]
    %v583 = vlaneseq
    %v584 = vand.u32 %v583, 127
    %vm585 = vcmp.lt.s32.totalorder %v584, 55
    %v586 = vsel %vm585, 0, %v582
    %587 = vrot.lane.b32.xlu0 %v586, 73
    %v588 = vpop.permute.xlu0 %587
    %s589 = scalar_lea.vmem [#allocation5], 464
    %590 = vst [vmem:[%s589] sm:$0xff] %v588
    %s591 = scalar_lea.vmem %s0, 472
    %v592 = vld [vmem:[%s591] sm:$0xff]
    %v593 = vlaneseq
    %v594 = vand.u32 %v593, 127
    %vm595 = vcmp.lt.s32.totalorder %v594, 55
    %v596 = vsel %vm595, 0, %v592
    %597 = vrot.lane.b32.xlu0 %v596, 73
    %v598 = vpop.permute.xlu0 %597
    %s599 = scalar_lea.vmem [#allocation5], 472
    %600 = vst [vmem:[%s599] sm:$0xff] %v598
    %s601 = scalar_lea.vmem %s0, 480
    %v602 = vld [vmem:[%s601] sm:$0xff]
    %v603 = vlaneseq
    %v604 = vand.u32 %v603, 127
    %vm605 = vcmp.lt.s32.totalorder %v604, 55
    %v606 = vsel %vm605, 0, %v602
    %607 = vrot.lane.b32.xlu0 %v606, 73
    %v608 = vpop.permute.xlu0 %607
    %s609 = scalar_lea.vmem [#allocation5], 480
    %610 = vst [vmem:[%s609] sm:$0xff] %v608
    %s611 = scalar_lea.vmem %s0, 488
    %v612 = vld [vmem:[%s611] sm:$0xff]
    %v613 = vlaneseq
    %v614 = vand.u32 %v613, 127
    %vm615 = vcmp.lt.s32.totalorder %v614, 55
    %v616 = vsel %vm615, 0, %v612
    %617 = vrot.lane.b32.xlu0 %v616, 73
    %v618 = vpop.permute.xlu0 %617
    %s619 = scalar_lea.vmem [#allocation5], 488
    %620 = vst [vmem:[%s619] sm:$0xff] %v618
    %s621 = scalar_lea.vmem %s0, 496
    %v622 = vld [vmem:[%s621] sm:$0xff]
    %v623 = vlaneseq
    %v624 = vand.u32 %v623, 127
    %vm625 = vcmp.lt.s32.totalorder %v624, 55
    %v626 = vsel %vm625, 0, %v622
    %627 = vrot.lane.b32.xlu0 %v626, 73
    %v628 = vpop.permute.xlu0 %627
    %s629 = scalar_lea.vmem [#allocation5], 496
    %630 = vst [vmem:[%s629] sm:$0xff] %v628
    %s631 = scalar_lea.vmem %s0, 504
    %v632 = vld [vmem:[%s631] sm:$0xff]
    %v633 = vlaneseq
    %v634 = vand.u32 %v633, 127
    %vm635 = vcmp.lt.s32.totalorder %v634, 55
    %v636 = vsel %vm635, 0, %v632
    %637 = vrot.lane.b32.xlu0 %v636, 73
    %v638 = vpop.permute.xlu0 %637
    %s639 = scalar_lea.vmem [#allocation5], 504
    %640 = vst [vmem:[%s639] sm:$0xff] %v638
    %s641 = scalar_lea.vmem %s0, 512
    %v642 = vld [vmem:[%s641] sm:$0xff]
    %v643 = vlaneseq
    %v644 = vand.u32 %v643, 127
    %vm645 = vcmp.lt.s32.totalorder %v644, 55
    %v646 = vsel %vm645, 0, %v642
    %647 = vrot.lane.b32.xlu0 %v646, 73
    %v648 = vpop.permute.xlu0 %647
    %s649 = scalar_lea.vmem [#allocation5], 512
    %650 = vst [vmem:[%s649] sm:$0xff] %v648
    %s651 = scalar_lea.vmem %s0, 520
    %v652 = vld [vmem:[%s651] sm:$0xff]
    %v653 = vlaneseq
    %v654 = vand.u32 %v653, 127
    %vm655 = vcmp.lt.s32.totalorder %v654, 55
    %v656 = vsel %vm655, 0, %v652
    %657 = vrot.lane.b32.xlu0 %v656, 73
    %v658 = vpop.permute.xlu0 %657
    %s659 = scalar_lea.vmem [#allocation5], 520
    %660 = vst [vmem:[%s659] sm:$0xff] %v658
    %s661 = scalar_lea.vmem %s0, 528
    %v662 = vld [vmem:[%s661] sm:$0xff]
    %v663 = vlaneseq
    %v664 = vand.u32 %v663, 127
    %vm665 = vcmp.lt.s32.totalorder %v664, 55
    %v666 = vsel %vm665, 0, %v662
    %667 = vrot.lane.b32.xlu0 %v666, 73
    %v668 = vpop.permute.xlu0 %667
    %s669 = scalar_lea.vmem [#allocation5], 528
    %670 = vst [vmem:[%s669] sm:$0xff] %v668
    %s671 = scalar_lea.vmem %s0, 536
    %v672 = vld [vmem:[%s671] sm:$0xff]
    %v673 = vlaneseq
    %v674 = vand.u32 %v673, 127
    %vm675 = vcmp.lt.s32.totalorder %v674, 55
    %v676 = vsel %vm675, 0, %v672
    %677 = vrot.lane.b32.xlu0 %v676, 73
    %v678 = vpop.permute.xlu0 %677
    %s679 = scalar_lea.vmem [#allocation5], 536
    %680 = vst [vmem:[%s679] sm:$0xff] %v678
    %s681 = scalar_lea.vmem %s0, 544
    %v682 = vld [vmem:[%s681] sm:$0xff]
    %v683 = vlaneseq
    %v684 = vand.u32 %v683, 127
    %vm685 = vcmp.lt.s32.totalorder %v684, 55
    %v686 = vsel %vm685, 0, %v682
    %687 = vrot.lane.b32.xlu0 %v686, 73
    %v688 = vpop.permute.xlu0 %687
    %s689 = scalar_lea.vmem [#allocation5], 544
    %690 = vst [vmem:[%s689] sm:$0xff] %v688
    %s691 = scalar_lea.vmem %s0, 552
    %v692 = vld [vmem:[%s691] sm:$0xff]
    %v693 = vlaneseq
    %v694 = vand.u32 %v693, 127
    %vm695 = vcmp.lt.s32.totalorder %v694, 55
    %v696 = vsel %vm695, 0, %v692
    %697 = vrot.lane.b32.xlu0 %v696, 73
    %v698 = vpop.permute.xlu0 %697
    %s699 = scalar_lea.vmem [#allocation5], 552
    %700 = vst [vmem:[%s699] sm:$0xff] %v698
    %s701 = scalar_lea.vmem %s0, 560
    %v702 = vld [vmem:[%s701] sm:$0xff]
    %v703 = vlaneseq
    %v704 = vand.u32 %v703, 127
    %vm705 = vcmp.lt.s32.totalorder %v704, 55
    %v706 = vsel %vm705, 0, %v702
    %707 = vrot.lane.b32.xlu0 %v706, 73
    %v708 = vpop.permute.xlu0 %707
    %s709 = scalar_lea.vmem [#allocation5], 560
    %710 = vst [vmem:[%s709] sm:$0xff] %v708
    %s711 = scalar_lea.vmem %s0, 568
    %v712 = vld [vmem:[%s711] sm:$0xff]
    %v713 = vlaneseq
    %v714 = vand.u32 %v713, 127
    %vm715 = vcmp.lt.s32.totalorder %v714, 55
    %v716 = vsel %vm715, 0, %v712
    %717 = vrot.lane.b32.xlu0 %v716, 73
    %v718 = vpop.permute.xlu0 %717
    %s719 = scalar_lea.vmem [#allocation5], 568
    %720 = vst [vmem:[%s719] sm:$0xff] %v718
    %s722 = ssub.s32 9216, 9216
    %723 = vsyncadd [#allocation6], %s722
    %s724 = sshll.u32 [#allocation5], 4
    %s725 = int_to_ptr.vmem [resolvable:$true] %s724
    %730 = dma.vmem_to_hbm [thread:$0]  %s725, 9216, %s1, [#allocation6], 128, 128, 8
    %731 = dma.done [#allocation6], 9216
    %732 = vsyncpa [#allocation6], 1

// kernel: gaussian_network_forward.5
$region0: #{gaussian_network_forward.5}
  #allocation0 [shape = 'u32[]', space=smem, size = 0x4, offset = 0x4, fixed_abs, tag = 'smem constant byte address 0x4 - core index']
  #allocation1 [shape = 'u32[144,128]{1,0:T(1,128)}', space=vmem, size = 0x12000, scoped, tag = 'internal scratch']
  %s0 = inlined_call_operand.vmem [shape: bf16[128,128], index: 0, kind: input, shape index: {}]
  %s1 = inlined_call_operand.vmem [shape: bf16[128,64], index: 1, kind: input, shape index: {}]
  %s2 = inlined_call_operand.vmem [shape: f32[1,64], index: 2, kind: input, shape index: {}]
  %s3 = inlined_call_operand.vmem [shape: bf16[64,64], index: 3, kind: input, shape index: {}]
  %s4 = inlined_call_operand.vmem [shape: f32[1,64], index: 4, kind: input, shape index: {}]
  %s5 = inlined_call_operand.vmem [shape: bf16[64,8], index: 5, kind: input, shape index: {}]
  %s6 = inlined_call_operand.vmem [shape: f32[1,8], index: 6, kind: input, shape index: {}]
  %s7 = inlined_call_operand.vmem [shape: f32[128,8], index: 7, kind: output, shape index: {}]
  %s8 = sld [smem:[#allocation0]]
  $region61: #{gaussian_network_forward.5} parent=0
    _
  %s10 = ssub.s32 1, %s8
  %s11 = scalar_select 0, %s10, %s8
  loop: start=0, step=1, limit=4
  $region2: #{gaussian_network_forward.5} parent=0 // loop_pre_header
    _
  $region3: #{gaussian_network_forward.5} parent=0 // loop_header
    %s13 = sphi 0, %s17
    %p14 = scmp.ge.s32.totalorder %s13, 4
    %s23 = sphi 0, %s25
    %s26 = sphi 0, %s23
    %s27 = sphi 0, %s26
    %s43 = sphi 0, %s27
    %s47 = sphi 0, %s47
    %s49 = sphi 0, %s47
    %s50 = sphi 0, %s49
    %s64 = sphi 0, %s50
    %s68 = sphi 0, %s68
    %s70 = sphi 0, %s68
    %s71 = sphi 0, %s70
    %s85 = sphi 0, %s71
    %s89 = sphi 0, %s89
    %s91 = sphi 0, %s89
    %s92 = sphi 0, %s91
    %s106 = sphi 0, %s92
    %s110 = sphi 0, %s110
    %s112 = sphi 0, %s110
    %s113 = sphi 0, %s112
    %s127 = sphi 0, %s113
    %s131 = sphi 0, %s131
    %s133 = sphi 0, %s131
    %s134 = sphi 0, %s133
    %s148 = sphi 0, %s134
    %s152 = sphi 0, %s152
    %s154 = sphi 0, %s152
    %s155 = sphi 0, %s154
    %s169 = sphi 0, %s155
    %s175 = sphi 0, %s177
    %s178 = sphi 0, %s175
    %s179 = sphi 0, %s178
    %s195 = sphi 0, %s179
  $region4: #{gaussian_network_forward.5} parent=0 // loop_header_branch
    %16 = sbr.rel (%p14) target = $region8
  $region5: #{gaussian_network_forward.5} parent=0 // loop_body
    %s18 = ssub.s32 %s13, 1
    %s19 = ssub.s32 %s13, 2
    %s20 = sadd.s32 %s13, 1
    %s21 = ssub.s32 %s13, %s20
    %p22 = scmp.eq.s32.totalorder %s21, 0
    %s24 = sadd.s32 %s23, 1
    %s25 = scalar_select %p22, %s23, %s24
    %p28 = pneg %p22
    %p29 = scmp.eq.s32.totalorder %s13, 1
    %p30 = por %p28, %p29
    %p31 = scmp.ne.s32.totalorder %s23, %s26
    %p32 = scmp.eq.s32.totalorder %s13, 0
    %p33 = por %p31, %p32
    %p34 = scmp.ne.s32.totalorder %s23, %s26
    %p35 = scmp.eq.s32.totalorder %s18, 1
    %p36 = por %p34, %p35
    %p37 = scmp.ne.s32.totalorder %s26, %s27
    %p38 = scmp.eq.s32.totalorder %s18, 0
    %p39 = por %p37, %p38
    %p40 = scmp.ne.s32.totalorder %s26, %s27
    %p41 = scmp.eq.s32.totalorder %s19, 1
    %p42 = por %p40, %p41
    %p44 = scmp.ne.s32.totalorder %s27, %s43
    %p45 = scmp.eq.s32.totalorder %s19, 0
    %p46 = por %p44, %p45
    %s48 = sadd.s32 %s47, 1
    %p51 = scmp.eq.s32.totalorder %s13, 1
    %p52 = scmp.ne.s32.totalorder %s47, %s49
    %p53 = scmp.eq.s32.totalorder %s13, 0
    %p54 = por %p52, %p53
    %p55 = scmp.ne.s32.totalorder %s47, %s49
    %p56 = scmp.eq.s32.totalorder %s18, 1
    %p57 = por %p55, %p56
    %p58 = scmp.ne.s32.totalorder %s49, %s50
    %p59 = scmp.eq.s32.totalorder %s18, 0
    %p60 = por %p58, %p59
    %p61 = scmp.ne.s32.totalorder %s49, %s50
    %p62 = scmp.eq.s32.totalorder %s19, 1
    %p63 = por %p61, %p62
    %p65 = scmp.ne.s32.totalorder %s50, %s64
    %p66 = scmp.eq.s32.totalorder %s19, 0
    %p67 = por %p65, %p66
    %s69 = sadd.s32 %s68, 1
    %p72 = scmp.eq.s32.totalorder %s13, 1
    %p73 = scmp.ne.s32.totalorder %s68, %s70
    %p74 = scmp.eq.s32.totalorder %s13, 0
    %p75 = por %p73, %p74
    %p76 = scmp.ne.s32.totalorder %s68, %s70
    %p77 = scmp.eq.s32.totalorder %s18, 1
    %p78 = por %p76, %p77
    %p79 = scmp.ne.s32.totalorder %s70, %s71
    %p80 = scmp.eq.s32.totalorder %s18, 0
    %p81 = por %p79, %p80
    %p82 = scmp.ne.s32.totalorder %s70, %s71
    %p83 = scmp.eq.s32.totalorder %s19, 1
    %p84 = por %p82, %p83
    %p86 = scmp.ne.s32.totalorder %s71, %s85
    %p87 = scmp.eq.s32.totalorder %s19, 0
    %p88 = por %p86, %p87
    %s90 = sadd.s32 %s89, 1
    %p93 = scmp.eq.s32.totalorder %s13, 1
    %p94 = scmp.ne.s32.totalorder %s89, %s91
    %p95 = scmp.eq.s32.totalorder %s13, 0
    %p96 = por %p94, %p95
    %p97 = scmp.ne.s32.totalorder %s89, %s91
    %p98 = scmp.eq.s32.totalorder %s18, 1
    %p99 = por %p97, %p98
    %p100 = scmp.ne.s32.totalorder %s91, %s92
    %p101 = scmp.eq.s32.totalorder %s18, 0
    %p102 = por %p100, %p101
    %p103 = scmp.ne.s32.totalorder %s91, %s92
    %p104 = scmp.eq.s32.totalorder %s19, 1
    %p105 = por %p103, %p104
    %p107 = scmp.ne.s32.totalorder %s92, %s106
    %p108 = scmp.eq.s32.totalorder %s19, 0
    %p109 = por %p107, %p108
    %s111 = sadd.s32 %s110, 1
    %p114 = scmp.eq.s32.totalorder %s13, 1
    %p115 = scmp.ne.s32.totalorder %s110, %s112
    %p116 = scmp.eq.s32.totalorder %s13, 0
    %p117 = por %p115, %p116
    %p118 = scmp.ne.s32.totalorder %s110, %s112
    %p119 = scmp.eq.s32.totalorder %s18, 1
    %p120 = por %p118, %p119
    %p121 = scmp.ne.s32.totalorder %s112, %s113
    %p122 = scmp.eq.s32.totalorder %s18, 0
    %p123 = por %p121, %p122
    %p124 = scmp.ne.s32.totalorder %s112, %s113
    %p125 = scmp.eq.s32.totalorder %s19, 1
    %p126 = por %p124, %p125
    %p128 = scmp.ne.s32.totalorder %s113, %s127
    %p129 = scmp.eq.s32.totalorder %s19, 0
    %p130 = por %p128, %p129
    %s132 = sadd.s32 %s131, 1
    %p135 = scmp.eq.s32.totalorder %s13, 1
    %p136 = scmp.ne.s32.totalorder %s131, %s133
    %p137 = scmp.eq.s32.totalorder %s13, 0
    %p138 = por %p136, %p137
    %p139 = scmp.ne.s32.totalorder %s131, %s133
    %p140 = scmp.eq.s32.totalorder %s18, 1
    %p141 = por %p139, %p140
    %p142 = scmp.ne.s32.totalorder %s133, %s134
    %p143 = scmp.eq.s32.totalorder %s18, 0
    %p144 = por %p142, %p143
    %p145 = scmp.ne.s32.totalorder %s133, %s134
    %p146 = scmp.eq.s32.totalorder %s19, 1
    %p147 = por %p145, %p146
    %p149 = scmp.ne.s32.totalorder %s134, %s148
    %p150 = scmp.eq.s32.totalorder %s19, 0
    %p151 = por %p149, %p150
    %s153 = sadd.s32 %s152, 1
    %p156 = scmp.eq.s32.totalorder %s13, 1
    %p157 = scmp.ne.s32.totalorder %s152, %s154
    %p158 = scmp.eq.s32.totalorder %s13, 0
    %p159 = por %p157, %p158
    %p160 = scmp.ne.s32.totalorder %s152, %s154
    %p161 = scmp.eq.s32.totalorder %s18, 1
    %p162 = por %p160, %p161
    %p163 = scmp.ne.s32.totalorder %s154, %s155
    %p164 = scmp.eq.s32.totalorder %s18, 0
    %p165 = por %p163, %p164
    %p166 = scmp.ne.s32.totalorder %s154, %s155
    %p167 = scmp.eq.s32.totalorder %s19, 1
    %p168 = por %p166, %p167
    %p170 = scmp.ne.s32.totalorder %s155, %s169
    %p171 = scmp.eq.s32.totalorder %s19, 0
    %p172 = por %p170, %p171
    %s173 = ssub.s32 %s13, %s20
    %p174 = scmp.eq.s32.totalorder %s173, 0
    %s176 = sadd.s32 %s175, 1
    %s177 = scalar_select %p174, %s175, %s176
    %p180 = pneg %p174
    %p181 = scmp.eq.s32.totalorder %s13, 1
    %p182 = por %p180, %p181
    %p183 = scmp.ne.s32.totalorder %s175, %s178
    %p184 = scmp.eq.s32.totalorder %s13, 0
    %p185 = por %p183, %p184
    %p186 = scmp.ne.s32.totalorder %s175, %s178
    %p187 = scmp.eq.s32.totalorder %s18, 1
    %p188 = por %p186, %p187
    %p189 = scmp.ne.s32.totalorder %s178, %s179
    %p190 = scmp.eq.s32.totalorder %s18, 0
    %p191 = por %p189, %p190
    %p192 = scmp.ne.s32.totalorder %s178, %s179
    %p193 = scmp.eq.s32.totalorder %s19, 1
    %p194 = por %p192, %p193
    %p196 = scmp.ne.s32.totalorder %s179, %s195
    %p197 = scmp.eq.s32.totalorder %s19, 0
    %p198 = por %p196, %p197
    %p199 = scmp.le.s32.totalorder 1, %s13
    %p200 = scmp.lt.s32.totalorder %s13, 3
    %p201 = pnand %p199, %p200
    %p202 = pneg %p201
    // Predicated region
    $region9: #{gaussian_network_forward.5} parent=5 // pred_check
      _
    $region10: #{gaussian_network_forward.5} parent=5 // pred_check_branch
      %204 = sbr.rel (%p201) target = $region12
    $region11: #{gaussian_network_forward.5} parent=5 // pred_region
      %s205 = ssub.s32 %s13, 1
      // Predicated region
      $region13: #{gaussian_network_forward.5} parent=11 // pred_check
        %p206 = pneg %p60
      $region14: #{gaussian_network_forward.5} parent=11 // pred_check_branch
        %208 = sbr.rel (%p206) target = $region16
      $region15: #{gaussian_network_forward.5} parent=11 // pred_region
        _
      $region16: #{gaussian_network_forward.5} parent=11 // pred_fallthru
        _
      // Predicated region
      $region17: #{gaussian_network_forward.5} parent=11 // pred_check
        %p209 = pneg %p81
      $region18: #{gaussian_network_forward.5} parent=11 // pred_check_branch
        %211 = sbr.rel (%p209) target = $region20
      $region19: #{gaussian_network_forward.5} parent=11 // pred_region
        _
      $region20: #{gaussian_network_forward.5} parent=11 // pred_fallthru
        _
      // Predicated region
      $region21: #{gaussian_network_forward.5} parent=11 // pred_check
        %p212 = pneg %p102
      $region22: #{gaussian_network_forward.5} parent=11 // pred_check_branch
        %214 = sbr.rel (%p212) target = $region24
      $region23: #{gaussian_network_forward.5} parent=11 // pred_region
        _
      $region24: #{gaussian_network_forward.5} parent=11 // pred_fallthru
        _
      // Predicated region
      $region25: #{gaussian_network_forward.5} parent=11 // pred_check
        %p215 = pneg %p123
      $region26: #{gaussian_network_forward.5} parent=11 // pred_check_branch
        %217 = sbr.rel (%p215) target = $region28
      $region27: #{gaussian_network_forward.5} parent=11 // pred_region
        _
      $region28: #{gaussian_network_forward.5} parent=11 // pred_fallthru
        _
      // Predicated region
      $region29: #{gaussian_network_forward.5} parent=11 // pred_check
        %p218 = pneg %p144
      $region30: #{gaussian_network_forward.5} parent=11 // pred_check_branch
        %220 = sbr.rel (%p218) target = $region32
      $region31: #{gaussian_network_forward.5} parent=11 // pred_region
        _
      $region32: #{gaussian_network_forward.5} parent=11 // pred_fallthru
        _
      // Predicated region
      $region33: #{gaussian_network_forward.5} parent=11 // pred_check
        %p221 = pneg %p165
      $region34: #{gaussian_network_forward.5} parent=11 // pred_check_branch
        %223 = sbr.rel (%p221) target = $region36
      $region35: #{gaussian_network_forward.5} parent=11 // pred_region
        _
      $region36: #{gaussian_network_forward.5} parent=11 // pred_fallthru
        _
    $region12: #{gaussian_network_forward.5} parent=5 // pred_fallthru
      _
    %p224 = scmp.lt.s32.totalorder %s13, 2
    // Predicated region
    $region37: #{gaussian_network_forward.5} parent=5 // pred_check
      %p225 = pneg %p224
    $region38: #{gaussian_network_forward.5} parent=5 // pred_check_branch
      %227 = sbr.rel (%p225) target = $region40
    $region39: #{gaussian_network_forward.5} parent=5 // pred_region
      // Predicated region
      $region41: #{gaussian_network_forward.5} parent=39 // pred_check
        %p228 = pneg %p33
      $region42: #{gaussian_network_forward.5} parent=39 // pred_check_branch
        %230 = sbr.rel (%p228) target = $region44
      $region43: #{gaussian_network_forward.5} parent=39 // pred_region
        %s231 = smul.u32 8, %s13
        %p232 = scmp.lt.s32.totalorder %s231, 15
        %s233 = scalar_select %p232, %s231, 15
        %s234 = smul.addr %s233, 4
        %s235 = scalar_lea.vmem %s0, %s234
        %s236 = smul.u32 8, %s13
      $region44: #{gaussian_network_forward.5} parent=39 // pred_fallthru
        _
    $region40: #{gaussian_network_forward.5} parent=5 // pred_fallthru
      _
    %p237 = scmp.le.s32.totalorder 1, %s13
    %p238 = scmp.lt.s32.totalorder %s13, 3
    %p239 = pnand %p237, %p238
    %p240 = pneg %p239
    // Predicated region
    $region45: #{gaussian_network_forward.5} parent=5 // pred_check
      _
    $region46: #{gaussian_network_forward.5} parent=5 // pred_check_branch
      %242 = sbr.rel (%p239) target = $region48
    $region47: #{gaussian_network_forward.5} parent=5 // pred_region
      %s243 = ssub.s32 %s13, 1
      %s244 = smul.u32 8, %s18
      %p245 = scmp.lt.s32.totalorder %s244, 15
      %s246 = scalar_select %p245, %s244, 15
      %s247 = smul.addr %s246, 4
      %s248 = scalar_lea.vmem %s0, %s247
      %p249 = pneg %p39
      %p250 = pneg %p36
      %p251 = pneg %p60
      %p252 = pneg %p57
      %p253 = pneg %p81
      %p254 = pneg %p78
      %p255 = pneg %p102
      %p256 = pneg %p99
      %p257 = pneg %p123
      %p258 = pneg %p120
      %p259 = pneg %p144
      %p260 = pneg %p141
      %p261 = pneg %p165
      %p262 = pneg %p162
      %p263 = pneg %p191
      %p264 = pneg %p188
      %s265 = smul.u32 8, %s18
      %p266 = scmp.lt.s32.totalorder %s265, 15
      %s267 = scalar_select %p266, %s265, 15
      %s268 = smul.addr %s267, 8
      %s269 = scalar_lea.vmem %s7, %s268
      %s270 = smul.u32 8, %s18
      %p271 = scmp.lt.s32.totalorder %s270, 15
      %s272 = scalar_select %p271, %s270, 15
      %s273 = smul.addr %s272, 4
      %s274 = scalar_lea.vmem %s0, %s273
      %s275 = smul.u32 8, %s18
      %s276 = smul.u32 8, %s18
      %p277 = scmp.lt.s32.totalorder %s276, 15
      %s278 = scalar_select %p277, %s276, 15
      %s279 = smul.addr %s278, 8
      %s280 = scalar_lea.vmem %s7, %s279
      %s281 = smul.u32 8, %s18
      %v283 = vld [vmem:[%s274] sm:$0xf]
      %v284 = vld [vmem:[%s274 + $0x4] sm:$0xf]
      %v285 = vld [vmem:[%s274 + $0x8] sm:$0xf]
      %v286 = vld [vmem:[%s274 + $0xc] sm:$0xf]
      %v287 = vld [vmem:[%s274 + $0x10] sm:$0xf]
      %v288 = vld [vmem:[%s274 + $0x14] sm:$0xf]
      %v289 = vld [vmem:[%s274 + $0x18] sm:$0xf]
      %v290 = vld [vmem:[%s274 + $0x1c] sm:$0xf]
      %v291 = vld [vmem:[%s1] sm:$0xf]
      %v292 = vld [vmem:[%s1 + $0x4] sm:$0xf]
      %v293 = vld [vmem:[%s1 + $0x8] sm:$0xf]
      %v294 = vld [vmem:[%s1 + $0xc] sm:$0xf]
      %v295 = vld [vmem:[%s1 + $0x10] sm:$0xf]
      %v296 = vld [vmem:[%s1 + $0x14] sm:$0xf]
      %v297 = vld [vmem:[%s1 + $0x18] sm:$0xf]
      %v298 = vld [vmem:[%s1 + $0x1c] sm:$0xf]
      %v299 = vld [vmem:[%s1 + $0x20] sm:$0xf]
      %v300 = vld [vmem:[%s1 + $0x24] sm:$0xf]
      %v301 = vld [vmem:[%s1 + $0x28] sm:$0xf]
      %v302 = vld [vmem:[%s1 + $0x2c] sm:$0xf]
      %v303 = vld [vmem:[%s1 + $0x30] sm:$0xf]
      %v304 = vld [vmem:[%s1 + $0x34] sm:$0xf]
      %v305 = vld [vmem:[%s1 + $0x38] sm:$0xf]
      %v306 = vld [vmem:[%s1 + $0x3c] sm:$0xf]
      %v307 = vld [vmem:[%s2] sm:$0x1]
      %v309 = vlaneseq
      %v310 = vshrl.u32 %v309, 7
      %v311 = vsub.s32 0, %v310
      %v312 = vrot.slane %v307, %v311
      %v322 = vunpack.c.l.b16 %v283
      %v323 = vunpack.c.l.b16 %v284
      %v324 = vunpack.c.l.b16 %v285
      %v325 = vunpack.c.l.b16 %v286
      %v326 = vunpack.c.l.b16 %v287
      %v327 = vunpack.c.l.b16 %v288
      %v328 = vunpack.c.l.b16 %v289
      %v329 = vunpack.c.l.b16 %v290
      %v330 = vpack.c.b16 %v323, %v322
      %v331 = vpack.c.b16 %v325, %v324
      %v332 = vpack.c.b16 %v327, %v326
      %v333 = vpack.c.b16 %v329, %v328
      %v354 = vunpack.c.l.b16 %v291
      %v355 = vunpack.c.l.b16 %v292
      %v356 = vunpack.c.l.b16 %v293
      %v357 = vunpack.c.l.b16 %v294
      %v358 = vunpack.c.l.b16 %v295
      %v359 = vunpack.c.l.b16 %v296
      %v360 = vunpack.c.l.b16 %v297
      %v361 = vunpack.c.l.b16 %v298
      %v362 = vunpack.c.l.b16 %v299
      %v363 = vunpack.c.l.b16 %v300
      %v364 = vunpack.c.l.b16 %v301
      %v365 = vunpack.c.l.b16 %v302
      %v366 = vunpack.c.l.b16 %v303
      %v367 = vunpack.c.l.b16 %v304
      %v368 = vunpack.c.l.b16 %v305
      %v369 = vunpack.c.l.b16 %v306
      %v370 = vpack.c.b16 %v355, %v354
      %v371 = vpack.c.b16 %v357, %v356
      %v372 = vpack.c.b16 %v359, %v358
      %v373 = vpack.c.b16 %v361, %v360
      %v374 = vpack.c.b16 %v363, %v362
      %v375 = vpack.c.b16 %v365, %v364
      %v376 = vpack.c.b16 %v367, %v366
      %v377 = vpack.c.b16 %v369, %v368
      %386 = vmatprep.subr.bf16.mxu0 0
      %387 = vmatpush1.bf16.msra.mxu0 %v370
      %388 = vmatprep.subr.bf16.mxu0 0
      %389 = vmatpush1.bf16.msra.mxu0 %v371
      %390 = vmatprep.subr.bf16.mxu0 0
      %391 = vmatpush1.bf16.msra.mxu0 %v372
      %392 = vmatprep.subr.bf16.mxu0 0
      %393 = vmatpush1.bf16.msra.mxu0 %v373
      %394 = vmatprep.subr.bf16.mxu0 0
      %395 = vmatpush1.bf16.msra.mxu0 %v374
      %396 = vmatprep.subr.bf16.mxu0 0
      %397 = vmatpush1.bf16.msra.mxu0 %v375
      %398 = vmatprep.subr.bf16.mxu0 0
      %399 = vmatpush1.bf16.msra.mxu0 %v376
      %400 = vmatprep.subr.bf16.mxu0 0
      %401 = vmatpush1.bf16.msra.mxu0 %v377
      %402 = vmatprep.subr.bf16.mxu0 0
      %403 = vmatpush1.bf16.msra.mxu0 0
      %404 = vmatprep.subr.bf16.mxu0 0
      %405 = vmatpush1.bf16.msra.mxu0 0
      %406 = vmatprep.subr.bf16.mxu0 0
      %407 = vmatpush1.bf16.msra.mxu0 0
      %408 = vmatprep.subr.bf16.mxu0 0
      %409 = vmatpush1.bf16.msra.mxu0 0
      %410 = vmatprep.subr.bf16.mxu0 0
      %411 = vmatpush1.bf16.msra.mxu0 0
      %412 = vmatprep.subr.bf16.mxu0 0
      %413 = vmatpush1.bf16.msra.mxu0 0
      %414 = vmatprep.subr.bf16.mxu0 0
      %415 = vmatpush1.bf16.msra.mxu0 0
      %416 = vmatprep.subr.bf16.mxu0 0
      %417 = vmatpush1.bf16.msra.mxu0 0
      %418 = vmatprep.mubr.bf16.mxu0 0
      %419 = vmatmul.mubr.bf16.gmra.mrb[0].mxu0 %v330
      %v420 = vpop.f32.mrb[0].mxu0
      %v421 = vadd.f32 %v312, %v420
      %v422 = vpop.f32.mrb[0].mxu0
      %v423 = vpop.f32.mrb[0].mxu0
      %v424 = vadd.f32 %v312, %v423
      %v425 = vpop.f32.mrb[0].mxu0
      %426 = vmatprep.mubr.bf16.mxu0 0
      %427 = vmatmul.mubr.bf16.gmra.mrb[0].mxu0 %v331
      %v428 = vpop.f32.mrb[0].mxu0
      %v429 = vadd.f32 %v312, %v428
      %v430 = vpop.f32.mrb[0].mxu0
      %v431 = vpop.f32.mrb[0].mxu0
      %v432 = vadd.f32 %v312, %v431
      %v433 = vpop.f32.mrb[0].mxu0
      %434 = vmatprep.mubr.bf16.mxu0 0
      %435 = vmatmul.mubr.bf16.gmra.mrb[0].mxu0 %v332
      %v436 = vpop.f32.mrb[0].mxu0
      %v437 = vadd.f32 %v312, %v436
      %v438 = vpop.f32.mrb[0].mxu0
      %v439 = vpop.f32.mrb[0].mxu0
      %v440 = vadd.f32 %v312, %v439
      %v441 = vpop.f32.mrb[0].mxu0
      %442 = vmatprep.mubr.bf16.mxu0 0
      %443 = vmatmul.mubr.bf16.gmra.mrb[0].mxu0 %v333
      %v444 = vpop.f32.mrb[0].mxu0
      %v445 = vadd.f32 %v312, %v444
      %v446 = vpop.f32.mrb[0].mxu0
      %v447 = vpop.f32.mrb[0].mxu0
      %v448 = vadd.f32 %v312, %v447
      %v449 = vpop.f32.mrb[0].mxu0
      %450 = vdwg.mxu0
      %v451 = vmax.f32 %v421, 0.0
      %v452 = vmax.f32 %v424, 0.0
      %v453 = vmax.f32 %v429, 0.0
      %v454 = vmax.f32 %v432, 0.0
      %v455 = vmax.f32 %v437, 0.0
      %v456 = vmax.f32 %v440, 0.0
      %v457 = vmax.f32 %v445, 0.0
      %v458 = vmax.f32 %v448, 0.0
      %v459 = vpack.c.bf16 %v452, %v451
      %v460 = vpack.c.bf16 %v454, %v453
      %v461 = vpack.c.bf16 %v456, %v455
      %v462 = vpack.c.bf16 %v458, %v457
      %v463 = vld [vmem:[%s3] sm:$0xf]
      %v464 = vld [vmem:[%s3 + $0x4] sm:$0xf]
      %v465 = vld [vmem:[%s3 + $0x8] sm:$0xf]
      %v466 = vld [vmem:[%s3 + $0xc] sm:$0xf]
      %v467 = vld [vmem:[%s3 + $0x10] sm:$0xf]
      %v468 = vld [vmem:[%s3 + $0x14] sm:$0xf]
      %v469 = vld [vmem:[%s3 + $0x18] sm:$0xf]
      %v470 = vld [vmem:[%s3 + $0x1c] sm:$0xf]
      %v471 = vld [vmem:[%s4] sm:$0x1]
      %v473 = vlaneseq
      %v474 = vshrl.u32 %v473, 7
      %v475 = vsub.s32 0, %v474
      %v476 = vrot.slane %v471, %v475
      %v486 = vunpack.c.l.b16 %v463
      %v487 = vunpack.c.l.b16 %v464
      %v488 = vunpack.c.l.b16 %v465
      %v489 = vunpack.c.l.b16 %v466
      %v490 = vunpack.c.l.b16 %v467
      %v491 = vunpack.c.l.b16 %v468
      %v492 = vunpack.c.l.b16 %v469
      %v493 = vunpack.c.l.b16 %v470
      %v494 = vpack.c.b16 %v487, %v486
      %v495 = vpack.c.b16 %v489, %v488
      %v496 = vpack.c.b16 %v491, %v490
      %v497 = vpack.c.b16 %v493, %v492
      %vm502 = vcmask 523264
      %v504 = vsel %vm502, %v459, 0
      %v507 = vsel %vm502, %v460, 0
      %v510 = vsel %vm502, %v461, 0
      %v513 = vsel %vm502, %v462, 0
      %515 = vmatprep.subr.bf16.mxu0 0
      %516 = vmatpush1.bf16.msra.mxu0 %v494
      %517 = vmatprep.subr.bf16.mxu0 0
      %518 = vmatpush1.bf16.msra.mxu0 %v495
      %519 = vmatprep.subr.bf16.mxu0 0
      %520 = vmatpush1.bf16.msra.mxu0 %v496
      %521 = vmatprep.subr.bf16.mxu0 0
      %522 = vmatpush1.bf16.msra.mxu0 %v497
      %523 = vmatprep.subr.bf16.mxu0 0
      %524 = vmatpush1.bf16.msra.mxu0 0
      %525 = vmatprep.subr.bf16.mxu0 0
      %526 = vmatpush1.bf16.msra.mxu0 0
      %527 = vmatprep.subr.bf16.mxu0 0
      %528 = vmatpush1.bf16.msra.mxu0 0
      %529 = vmatprep.subr.bf16.mxu0 0
      %530 = vmatpush1.bf16.msra.mxu0 0
      %531 = vmatprep.subr.bf16.mxu0 0
      %532 = vmatpush1.bf16.msra.mxu0 0
      %533 = vmatprep.subr.bf16.mxu0 0
      %534 = vmatpush1.bf16.msra.mxu0 0
      %535 = vmatprep.subr.bf16.mxu0 0
      %536 = vmatpush1.bf16.msra.mxu0 0
      %537 = vmatprep.subr.bf16.mxu0 0
      %538 = vmatpush1.bf16.msra.mxu0 0
      %539 = vmatprep.subr.bf16.mxu0 0
      %540 = vmatpush1.bf16.msra.mxu0 0
      %541 = vmatprep.subr.bf16.mxu0 0
      %542 = vmatpush1.bf16.msra.mxu0 0
      %543 = vmatprep.subr.bf16.mxu0 0
      %544 = vmatpush1.bf16.msra.mxu0 0
      %545 = vmatprep.subr.bf16.mxu0 0
      %546 = vmatpush1.bf16.msra.mxu0 0
      %547 = vmatprep.mubr.bf16.mxu0 0
      %548 = vmatmul.mubr.bf16.gmra.mrb[0].mxu0 %v504
      %v549 = vpop.f32.mrb[0].mxu0
      %v550 = vadd.f32 %v476, %v549
      %v551 = vpop.f32.mrb[0].mxu0
      %v552 = vpop.f32.mrb[0].mxu0
      %v553 = vadd.f32 %v476, %v552
      %v554 = vpop.f32.mrb[0].mxu0
      %555 = vmatprep.mubr.bf16.mxu0 0
      %556 = vmatmul.mubr.bf16.gmra.mrb[0].mxu0 %v507
      %v557 = vpop.f32.mrb[0].mxu0
      %v558 = vadd.f32 %v476, %v557
      %v559 = vpop.f32.mrb[0].mxu0
      %v560 = vpop.f32.mrb[0].mxu0
      %v561 = vadd.f32 %v476, %v560
      %v562 = vpop.f32.mrb[0].mxu0
      %563 = vmatprep.mubr.bf16.mxu0 0
      %564 = vmatmul.mubr.bf16.gmra.mrb[0].mxu0 %v510
      %v565 = vpop.f32.mrb[0].mxu0
      %v566 = vadd.f32 %v476, %v565
      %v567 = vpop.f32.mrb[0].mxu0
      %v568 = vpop.f32.mrb[0].mxu0
      %v569 = vadd.f32 %v476, %v568
      %v570 = vpop.f32.mrb[0].mxu0
      %571 = vmatprep.mubr.bf16.mxu0 0
      %572 = vmatmul.mubr.bf16.gmra.mrb[0].mxu0 %v513
      %v573 = vpop.f32.mrb[0].mxu0
      %v574 = vadd.f32 %v476, %v573
      %v575 = vpop.f32.mrb[0].mxu0
      %v576 = vpop.f32.mrb[0].mxu0
      %v577 = vadd.f32 %v476, %v576
      %v578 = vpop.f32.mrb[0].mxu0
      %579 = vdwg.mxu0
      %v580 = vmax.f32 %v550, 0.0
      %v581 = vmax.f32 %v553, 0.0
      %v582 = vmax.f32 %v558, 0.0
      %v583 = vmax.f32 %v561, 0.0
      %v584 = vmax.f32 %v566, 0.0
      %v585 = vmax.f32 %v569, 0.0
      %v586 = vmax.f32 %v574, 0.0
      %v587 = vmax.f32 %v577, 0.0
      %v588 = vpack.c.bf16 %v581, %v580
      %v589 = vpack.c.bf16 %v583, %v582
      %v590 = vpack.c.bf16 %v585, %v584
      %v591 = vpack.c.bf16 %v587, %v586
      %v592 = vld [vmem:[%s5] sm:$0xf]
      %v593 = vld [vmem:[%s5 + $0x4] sm:$0xf]
      %v594 = vld [vmem:[%s5 + $0x8] sm:$0xf]
      %v595 = vld [vmem:[%s5 + $0xc] sm:$0xf]
      %v596 = vld [vmem:[%s5 + $0x10] sm:$0xf]
      %v597 = vld [vmem:[%s5 + $0x14] sm:$0xf]
      %v598 = vld [vmem:[%s5 + $0x18] sm:$0xf]
      %v599 = vld [vmem:[%s5 + $0x1c] sm:$0xf]
      %v600 = vld [vmem:[%s6] sm:$0x1]
      %v602 = vlaneseq
      %v603 = vshrl.u32 %v602, 7
      %v604 = vsub.s32 0, %v603
      %v605 = vrot.slane %v600, %v604
      %v615 = vunpack.c.l.b16 %v592
      %v616 = vunpack.c.l.b16 %v593
      %v617 = vunpack.c.l.b16 %v594
      %v618 = vunpack.c.l.b16 %v595
      %v619 = vunpack.c.l.b16 %v596
      %v620 = vunpack.c.l.b16 %v597
      %v621 = vunpack.c.l.b16 %v598
      %v622 = vunpack.c.l.b16 %v599
      %v623 = vpack.c.b16 %v616, %v615
      %v624 = vpack.c.b16 %v618, %v617
      %v625 = vpack.c.b16 %v620, %v619
      %v626 = vpack.c.b16 %v622, %v621
      %v632 = vsel %vm502, %v588, 0
      %v635 = vsel %vm502, %v589, 0
      %v638 = vsel %vm502, %v590, 0
      %v641 = vsel %vm502, %v591, 0
      %643 = vmatprep.subr.bf16.mxu0 0
      %644 = vmatpush1.bf16.msra.mxu0 %v623
      %645 = vmatprep.subr.bf16.mxu0 0
      %646 = vmatpush1.bf16.msra.mxu0 %v624
      %647 = vmatprep.subr.bf16.mxu0 0
      %648 = vmatpush1.bf16.msra.mxu0 %v625
      %649 = vmatprep.subr.bf16.mxu0 0
      %650 = vmatpush1.bf16.msra.mxu0 %v626
      %651 = vmatprep.subr.bf16.mxu0 0
      %652 = vmatpush1.bf16.msra.mxu0 0
      %653 = vmatprep.subr.bf16.mxu0 0
      %654 = vmatpush1.bf16.msra.mxu0 0
      %655 = vmatprep.subr.bf16.mxu0 0
      %656 = vmatpush1.bf16.msra.mxu0 0
      %657 = vmatprep.subr.bf16.mxu0 0
      %658 = vmatpush1.bf16.msra.mxu0 0
      %659 = vmatprep.subr.bf16.mxu0 0
      %660 = vmatpush1.bf16.msra.mxu0 0
      %661 = vmatprep.subr.bf16.mxu0 0
      %662 = vmatpush1.bf16.msra.mxu0 0
      %663 = vmatprep.subr.bf16.mxu0 0
      %664 = vmatpush1.bf16.msra.mxu0 0
      %665 = vmatprep.subr.bf16.mxu0 0
      %666 = vmatpush1.bf16.msra.mxu0 0
      %667 = vmatprep.subr.bf16.mxu0 0
      %668 = vmatpush1.bf16.msra.mxu0 0
      %669 = vmatprep.subr.bf16.mxu0 0
      %670 = vmatpush1.bf16.msra.mxu0 0
      %671 = vmatprep.subr.bf16.mxu0 0
      %672 = vmatpush1.bf16.msra.mxu0 0
      %673 = vmatprep.subr.bf16.mxu0 0
      %674 = vmatpush1.bf16.msra.mxu0 0
      %675 = vmatprep.mubr.bf16.mxu0 0
      %676 = vmatmul.mubr.bf16.gmra.mrb[0].mxu0 %v632
      %v677 = vpop.f32.mrb[0].mxu0
      %v678 = vadd.f32 %v605, %v677
      %v679 = vpop.f32.mrb[0].mxu0
      %v680 = vpop.f32.mrb[0].mxu0
      %v681 = vadd.f32 %v605, %v680
      %v682 = vpop.f32.mrb[0].mxu0
      %683 = vmatprep.mubr.bf16.mxu0 0
      %684 = vmatmul.mubr.bf16.gmra.mrb[0].mxu0 %v635
      %v685 = vpop.f32.mrb[0].mxu0
      %v686 = vadd.f32 %v605, %v685
      %v687 = vpop.f32.mrb[0].mxu0
      %v688 = vpop.f32.mrb[0].mxu0
      %v689 = vadd.f32 %v605, %v688
      %v690 = vpop.f32.mrb[0].mxu0
      %691 = vmatprep.mubr.bf16.mxu0 0
      %692 = vmatmul.mubr.bf16.gmra.mrb[0].mxu0 %v638
      %v693 = vpop.f32.mrb[0].mxu0
      %v694 = vadd.f32 %v605, %v693
      %v695 = vpop.f32.mrb[0].mxu0
      %v696 = vpop.f32.mrb[0].mxu0
      %v697 = vadd.f32 %v605, %v696
      %v698 = vpop.f32.mrb[0].mxu0
      %699 = vmatprep.mubr.bf16.mxu0 0
      %700 = vmatmul.mubr.bf16.gmra.mrb[0].mxu0 %v641
      %v701 = vpop.f32.mrb[0].mxu0
      %v702 = vadd.f32 %v605, %v701
      %v703 = vpop.f32.mrb[0].mxu0
      %v704 = vpop.f32.mrb[0].mxu0
      %v705 = vadd.f32 %v605, %v704
      %v706 = vpop.f32.mrb[0].mxu0
      %707 = vdwg.mxu0
      %v708 = vxor.u32 %v678, 2147483648
      %v709 = vxor.u32 %v681, 2147483648
      %v710 = vxor.u32 %v686, 2147483648
      %v711 = vxor.u32 %v689, 2147483648
      %v712 = vxor.u32 %v694, 2147483648
      %v713 = vxor.u32 %v697, 2147483648
      %v714 = vxor.u32 %v702, 2147483648
      %v715 = vxor.u32 %v705, 2147483648
      %v716 = vmul.f32 %v708, 1.442695
      %v717 = vpow.pop %v716
      %v718 = vmul.f32 %v709, 1.442695
      %v719 = vpow.pop %v718
      %v720 = vmul.f32 %v710, 1.442695
      %v721 = vpow.pop %v720
      %v722 = vmul.f32 %v711, 1.442695
      %v723 = vpow.pop %v722
      %v724 = vmul.f32 %v712, 1.442695
      %v725 = vpow.pop %v724
      %v726 = vmul.f32 %v713, 1.442695
      %v727 = vpow.pop %v726
      %v728 = vmul.f32 %v714, 1.442695
      %v729 = vpow.pop %v728
      %v730 = vmul.f32 %v715, 1.442695
      %v731 = vpow.pop %v730
      %v732 = vadd.f32 %v717, 1.0
      %v733 = vadd.f32 %v719, 1.0
      %v734 = vadd.f32 %v721, 1.0
      %v735 = vadd.f32 %v723, 1.0
      %v736 = vadd.f32 %v725, 1.0
      %v737 = vadd.f32 %v727, 1.0
      %v738 = vadd.f32 %v729, 1.0
      %v739 = vadd.f32 %v731, 1.0
      %v740 = vrcp.pop %v732
      %v741 = vmul.f32 1.0, %v740
      %v742 = vrcp.pop %v733
      %v743 = vmul.f32 1.0, %v742
      %v744 = vrcp.pop %v734
      %v745 = vmul.f32 1.0, %v744
      %v746 = vrcp.pop %v735
      %v747 = vmul.f32 1.0, %v746
      %v748 = vrcp.pop %v736
      %v749 = vmul.f32 1.0, %v748
      %v750 = vrcp.pop %v737
      %v751 = vmul.f32 1.0, %v750
      %v752 = vrcp.pop %v738
      %v753 = vmul.f32 1.0, %v752
      %v754 = vrcp.pop %v739
      %v755 = vmul.f32 1.0, %v754
      %vm756 = vcmask 64512
      %757 = vst.msk [vmem:[%s280] sm:$0xff] %vm756, %v741
      %758 = vst.msk [vmem:[%s280 + $0x8] sm:$0xff] %vm756, %v743
      %759 = vst.msk [vmem:[%s280 + $0x10] sm:$0xff] %vm756, %v745
      %760 = vst.msk [vmem:[%s280 + $0x18] sm:$0xff] %vm756, %v747
      %761 = vst.msk [vmem:[%s280 + $0x20] sm:$0xff] %vm756, %v749
      %762 = vst.msk [vmem:[%s280 + $0x28] sm:$0xff] %vm756, %v751
      %763 = vst.msk [vmem:[%s280 + $0x30] sm:$0xff] %vm756, %v753
      %764 = vst.msk [vmem:[%s280 + $0x38] sm:$0xff] %vm756, %v755
      %s765 = smul.u32 8, %s18
      %p766 = scmp.lt.s32.totalorder %s765, 15
      %s767 = scalar_select %p766, %s765, 15
      %s768 = smul.addr %s767, 8
      %s769 = scalar_lea.vmem %s7, %s768
      // Predicated region
      $region49: #{gaussian_network_forward.5} parent=47 // pred_check
        %p770 = pneg %p188
      $region50: #{gaussian_network_forward.5} parent=47 // pred_check_branch
        %772 = sbr.rel (%p770) target = $region52
      $region51: #{gaussian_network_forward.5} parent=47 // pred_region
        %s773 = smul.u32 8, %s18
      $region52: #{gaussian_network_forward.5} parent=47 // pred_fallthru
        _
    $region48: #{gaussian_network_forward.5} parent=5 // pred_fallthru
      _
    %p774 = scmp.le.s32.totalorder 2, %s13
    // Predicated region
    $region53: #{gaussian_network_forward.5} parent=5 // pred_check
      %p775 = pneg %p774
    $region54: #{gaussian_network_forward.5} parent=5 // pred_check_branch
      %777 = sbr.rel (%p775) target = $region56
    $region55: #{gaussian_network_forward.5} parent=5 // pred_region
      %s778 = ssub.s32 %s13, 2
      // Predicated region
      $region57: #{gaussian_network_forward.5} parent=55 // pred_check
        %p779 = pneg %p194
      $region58: #{gaussian_network_forward.5} parent=55 // pred_check_branch
        %781 = sbr.rel (%p779) target = $region60
      $region59: #{gaussian_network_forward.5} parent=55 // pred_region
        %s782 = smul.u32 8, %s19
        %p783 = scmp.lt.s32.totalorder %s782, 15
        %s784 = scalar_select %p783, %s782, 15
        %s785 = smul.addr %s784, 8
        %s786 = scalar_lea.vmem %s7, %s785
      $region60: #{gaussian_network_forward.5} parent=55 // pred_fallthru
        _
    $region56: #{gaussian_network_forward.5} parent=5 // pred_fallthru
      _
  $region6: #{gaussian_network_forward.5} parent=0 // loop_footer
    %s17 = sadd.s32 1, %s13
  $region7: #{gaussian_network_forward.5} parent=0 // loop_footer_branch
    %12 = sbr.rel target = $region3
  $region8: #{gaussian_network_forward.5} parent=0 // loop_exit
    _

</llo_original>
